<compile_context>
chip_gen: v7x
topology: tpu7x:2x2x1
jax: 0.10.0
libtpu: 0.0.40
codegen_flags: <defaults>
</compile_context>

<pallas_src>
import functools

import jax
import jax.numpy as jnp
from jax import lax
from jax.experimental import pallas as pl
from jax.experimental.pallas import tpu as pltpu

EPS = 1e-5
LANES = 128


def _round_up(v, m):
    return (v + m - 1) // m * m


def _pick_row_tile(ho, wo, target_rows):
    """Largest divisor of `ho` such that tile_rows * wo <= target_rows (>= 1)."""
    best = 1
    for d in range(1, ho + 1):
        if ho % d == 0 and d * wo <= target_rows:
            best = d
    return best


def _chip_config():
    """Per-generation VMEM budget / row-tile target / separable strategy."""
    try:
        kind = jax.devices()[0].device_kind.lower()
    except Exception:  # pragma: no cover - defensive
        kind = ""
    if "v7" in kind:   # 64 MiB physical VMEM / TC, 2x256^2 MXU
        return {"vmem_limit": 48 << 20, "block_rows": 512, "merge_separable": True}
    if "v6" in kind:   # 128 MiB VMEM, 2x256^2 MXU
        return {"vmem_limit": 96 << 20, "block_rows": 1024, "merge_separable": True}
    if "v5" in kind:   # 128 MiB VMEM, 4x128^2 MXU, no bf16 VPU -> keep VPU depthwise
        return {"vmem_limit": 96 << 20, "block_rows": 1024, "merge_separable": False}
    return {"vmem_limit": 32 << 20, "block_rows": 512, "merge_separable": False}


def _const_block_spec(shape):
    """Grid-invariant operand block: a 2nd pipeline buffer would be pure VMEM waste."""
    idx = lambda nn, rr: (0,) * len(shape)
    try:
        return pl.BlockSpec(shape, idx, pipeline_mode=pl.Buffered(1))
    except (AttributeError, TypeError):      # graceful fallback: default buffering
        return pl.BlockSpec(shape, idx)


# ----------------------------------------------------------------------------
# Pass 1 kernels: conv (taps built in VMEM) + per-tile BN partial statistics
# ----------------------------------------------------------------------------
def _make_tap_fn(x_ref, scratch, *, pad, stride, tro, wo):
    """Return tap(i, j) -> (tro, wo, C) window of the (logically padded) sample.

    When pad > 0 the resident sample is zero-padded once per sample into a VMEM
    scratch (guarded by pl.when(row_tile == 0)), which removes the HBM pad
    round-trip between stages.  stride > 1 uses strided pl.ds loads.
    """
    h0 = pl.multiple_of(pl.program_id(1) * (tro * stride), tro * stride)

    if pad > 0:
        (pad_ref,) = scratch
        h, w = x_ref.shape[1], x_ref.shape[2]

        @pl.when(pl.program_id(1) == 0)
        def _():
            # TODO(synk): chunk this copy for very large samples (vreg pressure).
            pad_ref[...] = jnp.zeros_like(pad_ref)
            pad_ref[pl.ds(pad, h), pl.ds(pad, w), :] = x_ref[0]

        def tap(i, j):
            if stride == 1:
                return pad_ref[pl.ds(h0 + i, tro), pl.ds(j, wo), :]
            return pad_ref[pl.ds(h0 + i, tro, stride), pl.ds(j, wo, stride), :]
    else:
        def tap(i, j):
            if stride == 1:
                return x_ref[0, pl.ds(h0 + i, tro), pl.ds(j, wo), :]
            return x_ref[0, pl.ds(h0 + i, tro, stride), pl.ds(j, wo, stride), :]

    return tap


def _conv_stats_kernel(x_ref, w_ref, y_ref, stats_ref, *scratch,
                       kh, kw, stride, pad, tro, wo):
    # x_ref : (1, H, W, Ci)     bf16 resident sample (spatially unpadded)
    # w_ref : (kh*kw*Ci, Co)    bf16 im2col weight (tap-major, channel-minor)
    # y_ref : (1, tro, wo, Co)  bf16 raw conv output tile
    # stats : (1, 1, 2, Co)     f32 per-tile [sum, sum_sq] from the f32 accumulator
    ci = x_ref.shape[3]
    co = w_ref.shape[1]
    tap = _make_tap_fn(x_ref, scratch, pad=pad, stride=stride, tro=tro, wo=wo)

    # One MXU matmul with K = kh*kw*Ci (lane-dim concat of 128-multiples is a
    # layout no-op) instead of kh*kw chained K=Ci dots; f32 accumulation.
    lhs = jnp.concatenate(
        [tap(i, j).reshape(tro * wo, ci) for i in range(kh) for j in range(kw)],
        axis=1)
    acc = jnp.dot(lhs, w_ref[...], preferred_element_type=jnp.float32)

    y_ref[...] = acc.reshape(1, tro, wo, co).astype(y_ref.dtype)
    s1 = jnp.sum(acc, axis=0, keepdims=True)
    s2 = jnp.sum(acc * acc, axis=0, keepdims=True)
    stats_ref[...] = jnp.concatenate([s1, s2], axis=0).reshape(1, 1, 2, co)


def _sepconv_stats_kernel(x_ref, dw_ref, pw_ref, y_ref, stats_ref, *scratch,
                          kh, kw, stride, pad, tro, wo):
    # v5 fallback: depthwise taps accumulated on the VPU in f32, then a single
    # pointwise MXU matmul.  (v6e/v7x use folded weights + _conv_stats_kernel.)
    co = pw_ref.shape[1]
    tap = _make_tap_fn(x_ref, scratch, pad=pad, stride=stride, tro=tro, wo=wo)

    dwv = dw_ref[...].astype(jnp.float32)                # (kh*kw, Co)
    dacc = jnp.zeros((tro, wo, co), jnp.float32)
    for i in range(kh):                                  # static tap loop
        for j in range(kw):
            dacc = dacc + tap(i, j).astype(jnp.float32) * dwv[i * kw + j].reshape(1, 1, co)

    y = jnp.dot(dacc.reshape(tro * wo, co).astype(jnp.bfloat16), pw_ref[...],
                preferred_element_type=jnp.float32)
    y_ref[...] = y.reshape(1, tro, wo, co).astype(y_ref.dtype)
    s1 = jnp.sum(y, axis=0, keepdims=True)
    s2 = jnp.sum(y * y, axis=0, keepdims=True)
    stats_ref[...] = jnp.concatenate([s1, s2], axis=0).reshape(1, 1, 2, co)


# ----------------------------------------------------------------------------
# Pass 2 kernel: y -> relu((y - mean) * inv_std)
# ----------------------------------------------------------------------------
def _bn_relu_kernel(y_ref, stats_ref, o_ref):
    st = stats_ref[...]                                  # (2, Co): [mean; inv_std]
    mean = st[0:1, :]
    istd = st[1:2, :]
    y = y_ref[...].astype(jnp.float32)                   # bf16 -> f32 in-register
    o_ref[...] = jnp.maximum((y - mean) * istd, 0.0).astype(o_ref.dtype)


# ----------------------------------------------------------------------------
# pallas_call wrappers
# ----------------------------------------------------------------------------
def _conv_pass1(x, weights, kh, kw, stride, pad, ho, wo, tro, vpu_separable,
                vmem_limit):
    n, h, w, ci = x.shape
    r = ho // tro
    scratch = []
    if pad > 0:
        scratch = [pltpu.VMEM((h + 2 * pad, w + 2 * pad, ci), x.dtype)]

    if vpu_separable:
        dw, pw = weights
        co = pw.shape[1]
        kern = functools.partial(_sepconv_stats_kernel, kh=kh, kw=kw, stride=stride,
                                 pad=pad, tro=tro, wo=wo)
        w_specs = [_const_block_spec(dw.shape), _const_block_spec(pw.shape)]
        args = (x, dw, pw)
    else:
        (wmat,) = weights
        co = wmat.shape[1]
        kern = functools.partial(_conv_stats_kernel, kh=kh, kw=kw, stride=stride,
                                 pad=pad, tro=tro, wo=wo)
        w_specs = [_const_block_spec(wmat.shape)]
        args = (x, wmat)

    y, part = pl.pallas_call(
        kern,
        out_shape=(jax.ShapeDtypeStruct((n, ho, wo, co), jnp.bfloat16),
                   jax.ShapeDtypeStruct((n, r, 2, co), jnp.float32)),
        grid=(n, r),
        in_specs=[pl.BlockSpec((1, h, w, ci), lambda nn, rr: (nn, 0, 0, 0))] + w_specs,
        out_specs=(pl.BlockSpec((1, tro, wo, co), lambda nn, rr: (nn, rr, 0, 0)),
                   pl.BlockSpec((1, 1, 2, co), lambda nn, rr: (nn, rr, 0, 0))),
        scratch_shapes=scratch,
        compiler_params=pltpu.CompilerParams(
            # rr carries the per-sample padded-scratch state when pad > 0.
            dimension_semantics=("parallel", "arbitrary" if pad > 0 else "parallel"),
            vmem_limit_bytes=vmem_limit),
    )(*args)
    return y, part


def _finalize_stats(part, count):
    """Reduce per-tile [sum, sum_sq] -> stacked (2, Cp) [mean, inv_std]."""
    s = jnp.sum(part, axis=(0, 1))                       # (2, Cp)
    mean = s[0] / count
    # TODO(synk): E[y^2]-E[y]^2 is cancellation-prone for very large N*H*W; switch
    # to centered / two-pass moments if that regime matters.
    var = jnp.maximum(s[1] / count - mean * mean, 0.0)   # biased batch variance
    return jnp.stack([mean, lax.rsqrt(var + EPS)], axis=0)


def _bn_relu_pass2(y, mstats, tro, out_dtype, vmem_limit):
    n, ho, wo, co = y.shape
    r = ho // tro
    return pl.pallas_call(
        _bn_relu_kernel,
        out_shape=jax.ShapeDtypeStruct((n, ho, wo, co), out_dtype),
        grid=(n, r),
        in_specs=[pl.BlockSpec((1, tro, wo, co), lambda nn, rr: (nn, rr, 0, 0)),
                  _const_block_spec((2, co))],
        out_specs=pl.BlockSpec((1, tro, wo, co), lambda nn, rr: (nn, rr, 0, 0)),
        compiler_params=pltpu.CompilerParams(
            dimension_semantics=("parallel", "parallel"),
            vmem_limit_bytes=vmem_limit),
    )(y, mstats)


# ----------------------------------------------------------------------------
# Full forward
# ----------------------------------------------------------------------------
def conv_branch_forward(x_nchw, params, kernel_size, stride, padding, separable,
                        block_rows=None, merged_separable=None):
    cfg = _chip_config()
    block_rows = cfg["block_rows"] if block_rows is None else block_rows
    vmem_limit = cfg["vmem_limit"]
    if merged_separable is None:
        merged_separable = cfg["merge_separable"]

    n, cin, h, w = x_nchw.shape
    cout = params["w_pre"].shape[0]
    cp = _round_up(cout, LANES)                          # lane-dense padded channels
    kk = kernel_size * kernel_size
    bf = jnp.bfloat16

    x = jnp.transpose(x_nchw, (0, 2, 3, 1)).astype(bf)   # NCHW -> NHWC, MXU dtype

    # ---- preproc: 1x1 conv (no bias) + BN + ReLU ---------------------------
    w_pre = jnp.pad(params["w_pre"].reshape(cout, cin).T,
                    ((0, 0), (0, cp - cout))).astype(bf)              # (Cin, Cp)
    tro1 = _pick_row_tile(h, w, block_rows)
    y1, p1 = _conv_pass1(x, (w_pre,), 1, 1, 1, 0, h, w, tro1, False, vmem_limit)
    pre = _bn_relu_pass2(y1, _finalize_stats(p1, n * h * w),
                         _pick_row_tile(h, w, 4 * block_rows), bf, vmem_limit)

    # ---- main conv + BN + ReLU ---------------------------------------------
    # NB: b_conv intentionally unused -- it cancels inside the following
    # non-affine, training-mode BatchNorm (only valid in that regime).
    ho = (h + 2 * padding - kernel_size) // stride + 1
    wo = (w + 2 * padding - kernel_size) // stride + 1
    tro2 = _pick_row_tile(ho, wo, block_rows)
    if separable and not merged_separable:
        # v5-style path: depthwise on the VPU (f32), pointwise on the MXU.
        dw = jnp.pad(jnp.transpose(params["w_dw"][:, 0], (1, 2, 0)).reshape(kk, cout),
                     ((0, 0), (0, cp - cout))).astype(bf)             # (kk, Cp)
        pw = jnp.pad(params["w_pw"].reshape(cout, cout).T,
                     ((0, cp - cout), (0, cp - cout))).astype(bf)     # (Cp, Cp)
        y2, p2 = _conv_pass1(pre, (dw, pw), kernel_size, kernel_size, stride,
                             padding, ho, wo, tro2, True, vmem_limit)
    else:
        if separable:
            # Fold depthwise into pointwise: W_tap[c, o] = dw_tap[c] * pw[c, o]
            # (exact identity), so the whole stage is MXU matmuls (v6e/v7x).
            dw_taps = jnp.transpose(params["w_dw"][:, 0], (1, 2, 0)).reshape(kk, cout)
            pw_mat = params["w_pw"].reshape(cout, cout).T
            wmat = dw_taps[:, :, None] * pw_mat[None, :, :]           # (kk, C, C)
        else:
            wmat = jnp.transpose(params["w_conv"], (2, 3, 1, 0)).reshape(kk, cout, cout)
        wmat = jnp.pad(wmat, ((0, 0), (0, cp - cout), (0, cp - cout)))
        wmat = wmat.reshape(kk * cp, cp).astype(bf)                   # (kk*Cp, Cp)
        y2, p2 = _conv_pass1(pre, (wmat,), kernel_size, kernel_size, stride,
                             padding, ho, wo, tro2, False, vmem_limit)
    out = _bn_relu_pass2(y2, _finalize_stats(p2, n * ho * wo),
                         _pick_row_tile(ho, wo, 4 * block_rows), jnp.float32,
                         vmem_limit)

    return jnp.transpose(out[..., :cout], (0, 3, 1, 2))  # NHWC -> NCHW


# ----------------------------------------------------------------------------
# Pure-JAX reference (same bf16-operand / f32-accumulate quantization points)
# ----------------------------------------------------------------------------
def conv_branch_ref(x, params, kernel_size, stride, padding, separable):
    bf = jnp.bfloat16
    cout = params["w_pre"].shape[0]

    def conv(xx, ww, st, pd, groups=1):
        return lax.conv_general_dilated(
            xx.astype(bf), ww.astype(bf), (st, st), [(pd, pd)] * 2,
            dimension_numbers=("NCHW", "OIHW", "NCHW"),
            feature_group_count=groups, preferred_element_type=jnp.float32)

    def bn_relu(y):
        mean = y.mean(axis=(0, 2, 3), keepdims=True)
        var = jnp.square(y - mean).mean(axis=(0, 2, 3), keepdims=True)
        return jnp.maximum((y - mean) * lax.rsqrt(var + EPS), 0.0)

    pre = bn_relu(conv(x, params["w_pre"], 1, 0))
    if separable:
        mid = conv(pre, params["w_dw"], stride, padding, groups=cout)
        y = conv(mid, params["w_pw"], 1, 0)
    else:
        y = conv(pre, params["w_conv"], stride, padding) \
            + params["b_conv"][None, :, None, None]
    return bn_relu(y)


# ----------------------------------------------------------------------------
if __name__ == "__main__":
    N, Cin, Cout, H, W = 2, 4, 8, 16, 16

    key = jax.random.PRNGKey(0)
    kx, k1, k2, k3, k4, k5 = jax.random.split(key, 6)
    x = jax.random.normal(kx, (N, Cin, H, W), jnp.float32)
    params = {
        "w_pre":  0.1 * jax.random.normal(k1, (Cout, Cin, 1, 1), jnp.float32),
        "w_conv": 0.1 * jax.random.normal(k2, (Cout, Cout, 3, 3), jnp.float32),
        "b_conv": 0.1 * jax.random.normal(k3, (Cout,), jnp.float32),
        "w_dw":   0.1 * jax.random.normal(k4, (Cout, 1, 3, 3), jnp.float32),
        "w_pw":   0.1 * jax.random.normal(k5, (Cout, Cout, 1, 1), jnp.float32),
    }

    # block_rows=128 keeps multi-tile grids (and the cross-tile BN reduction)
    # exercised at this small spatial size.
    cases = [
        # (stride, padding, separable, merged_separable)
        (1, 1, False, None),   # standard conv (MXU im2col matmul)
        (1, 1, True,  True),   # separable folded into MXU matmuls (v6e/v7x path)
        (1, 1, True,  False),  # separable with depthwise on the VPU (v5 fallback)
        (2, 1, False, None),   # strided conv -> strided pl.ds tap loads
    ]
    for stride, padding, separable, merged in cases:
        fwd = jax.jit(
            functools.partial(conv_branch_forward, kernel_size=3, stride=stride,
                              padding=padding, block_rows=128),
            static_argnames=("separable", "merged_separable"))
        out = jax.block_until_ready(
            fwd(x, params, separable=separable, merged_separable=merged))
        ref = conv_branch_ref(x, params, 3, stride, padding, separable)
        assert out.shape == ref.shape, (out.shape, ref.shape)
        err = float(jnp.max(jnp.abs(out - ref)))
        # bf16 conv operands + bf16 pre-BN intermediate => tolerance a few e-2.
        assert err < 3e-2, (
            f"mismatch (stride={stride}, separable={separable}, merged={merged}): "
            f"max abs err {err}")
    print("KERNEL_OK")
</pallas_src>

<mosaic_0001>
module attributes {stable_mosaic.version = 11 : i64} {
  func.func @_conv_stats_kernel(%arg0: i32, %arg1: i32, %arg2: memref<1x16x16x4xbf16, #tpu.memory_space<vmem>>, %arg3: memref<4x128xbf16, #tpu.memory_space<vmem>>, %arg4: memref<1x8x16x128xbf16, #tpu.memory_space<vmem>>, %arg5: memref<1x1x2x128xf32, #tpu.memory_space<vmem>>) attributes {dimension_semantics = [#tpu.dimension_semantics<parallel>, #tpu.dimension_semantics<parallel>], iteration_bounds = array<i64: 2, 2>, scalar_prefetch = 0 : i64, scratch_operands = 0 : i64, tpu.core_type = #tpu.core_type<tc>, window_params = [{transform_indices = @transform_0, window_bounds = array<i64: 1, 16, 16, 4>}, {pipeline_mode = #tpu.pipeline_mode<synchronous>, transform_indices = @transform_1, window_bounds = array<i64: 4, 128>}, {transform_indices = @transform_2, window_bounds = array<i64: 1, 8, 16, 128>}, {transform_indices = @transform_3, window_bounds = array<i64: 1, 1, 2, 128>}]} {
    %c8_i32 = arith.constant 8 : i32
    %0 = arith.muli %arg1, %c8_i32 : i32
    %1 = tpu.assume_multiple %0, 8 : i32
    %c0_i32 = arith.constant 0 : i32
    %2 = arith.addi %1, %c0_i32 : i32
    %c0 = arith.constant 0 : index
    %3 = arith.index_cast %2 : i32 to index
    %c0_0 = arith.constant 0 : index
    %c0_1 = arith.constant 0 : index
    %4 = vector.load %arg2[%c0, %3, %c0_0, %c0_1] : memref<1x16x16x4xbf16, #tpu.memory_space<vmem>>, vector<1x8x16x4xbf16>
    %5 = vector.shape_cast %4 : vector<1x8x16x4xbf16> to vector<8x16x4xbf16>
    %6 = vector.shape_cast %5 : vector<8x16x4xbf16> to vector<128x4xbf16>
    %c0_2 = arith.constant 0 : index
    %c0_3 = arith.constant 0 : index
    %7 = vector.load %arg3[%c0_2, %c0_3] : memref<4x128xbf16, #tpu.memory_space<vmem>>, vector<4x128xbf16>
    %cst = arith.constant dense<0.000000e+00> : vector<128x128xf32>
    %8 = tpu.matmul %6, %7, %cst {dimension_numbers = #tpu.dot_dimension_numbers<[1], [0], [0], [1], [0, 0, 1, 1], [], []>} : vector<128x4xbf16>, vector<4x128xbf16>, vector<128x128xf32> -> vector<128x128xf32>
    %9 = vector.shape_cast %8 : vector<128x128xf32> to vector<1x8x16x128xf32>
    %10 = arith.truncf %9 : vector<1x8x16x128xf32> to vector<1x8x16x128xbf16>
    %c0_4 = arith.constant 0 : index
    %c0_5 = arith.constant 0 : index
    %c0_6 = arith.constant 0 : index
    %c0_7 = arith.constant 0 : index
    %11 = vector.load %arg4[%c0_4, %c0_5, %c0_6, %c0_7] : memref<1x8x16x128xbf16, #tpu.memory_space<vmem>>, vector<1x8x16x128xbf16>
    tpu.vector_store %arg4[%c0_4, %c0_5, %c0_6, %c0_7], %10 {strides = array<i32>} : memref<1x8x16x128xbf16, #tpu.memory_space<vmem>>, vector<1x8x16x128xbf16>,
    %cst_8 = arith.constant dense<0.000000e+00> : vector<128xf32>
    %12 = vector.multi_reduction <add>, %8, %cst_8 [0] : vector<128x128xf32> to vector<128xf32>
    %13 = vector.shape_cast %12 : vector<128xf32> to vector<1x128xf32>
    %14 = arith.mulf %8, %8 : vector<128x128xf32>
    %cst_9 = arith.constant dense<0.000000e+00> : vector<128xf32>
    %15 = vector.multi_reduction <add>, %14, %cst_9 [0] : vector<128x128xf32> to vector<128xf32>
    %16 = vector.shape_cast %15 : vector<128xf32> to vector<1x128xf32>
    %17 = tpu.concatenate %13, %16 in 0 : vector<1x128xf32>, vector<1x128xf32> -> vector<2x128xf32>
    %18 = vector.shape_cast %17 : vector<2x128xf32> to vector<1x1x2x128xf32>
    %c0_10 = arith.constant 0 : index
    %c0_11 = arith.constant 0 : index
    %c0_12 = arith.constant 0 : index
    %c0_13 = arith.constant 0 : index
    %19 = vector.load %arg5[%c0_10, %c0_11, %c0_12, %c0_13] : memref<1x1x2x128xf32, #tpu.memory_space<vmem>>, vector<1x1x2x128xf32>
    tpu.vector_store %arg5[%c0_10, %c0_11, %c0_12, %c0_13], %18 {strides = array<i32>} : memref<1x1x2x128xf32, #tpu.memory_space<vmem>>, vector<1x1x2x128xf32>,
    return
  }
  func.func @transform_0(%arg0: i32, %arg1: i32) -> (i32, i32, i32, i32) {
    %c0_i32 = arith.constant 0 : i32
    %c0_i32_0 = arith.constant 0 : i32
    %c0_i32_1 = arith.constant 0 : i32
    %c0_i32_2 = arith.constant 0 : i32
    return %arg0, %c0_i32, %c0_i32_0, %c0_i32_1 : i32, i32, i32, i32
  }
  func.func @transform_1(%arg0: i32, %arg1: i32) -> (i32, i32) {
    %c0_i32 = arith.constant 0 : i32
    %c0_i32_0 = arith.constant 0 : i32
    %c0_i32_1 = arith.constant 0 : i32
    return %c0_i32, %c0_i32_0 : i32, i32
  }
  func.func @transform_2(%arg0: i32, %arg1: i32) -> (i32, i32, i32, i32) {
    %c0_i32 = arith.constant 0 : i32
    %c0_i32_0 = arith.constant 0 : i32
    %c0_i32_1 = arith.constant 0 : i32
    return %arg0, %arg1, %c0_i32, %c0_i32_0 : i32, i32, i32, i32
  }
  func.func @transform_3(%arg0: i32, %arg1: i32) -> (i32, i32, i32, i32) {
    %c0_i32 = arith.constant 0 : i32
    %c0_i32_0 = arith.constant 0 : i32
    %c0_i32_1 = arith.constant 0 : i32
    return %arg0, %arg1, %c0_i32, %c0_i32_0 : i32, i32, i32, i32
  }
}

module attributes {stable_mosaic.version = 11 : i64} {
  func.func @_bn_relu_kernel(%arg0: i32, %arg1: i32, %arg2: memref<1x16x16x128xbf16, #tpu.memory_space<vmem>>, %arg3: memref<2x128xf32, #tpu.memory_space<vmem>>, %arg4: memref<1x16x16x128xbf16, #tpu.memory_space<vmem>>) attributes {dimension_semantics = [#tpu.dimension_semantics<parallel>, #tpu.dimension_semantics<parallel>], iteration_bounds = array<i64: 2, 1>, scalar_prefetch = 0 : i64, scratch_operands = 0 : i64, tpu.core_type = #tpu.core_type<tc>, window_params = [{transform_indices = @transform_0, window_bounds = array<i64: 1, 16, 16, 128>}, {pipeline_mode = #tpu.pipeline_mode<synchronous>, transform_indices = @transform_1, window_bounds = array<i64: 2, 128>}, {transform_indices = @transform_2, window_bounds = array<i64: 1, 16, 16, 128>}]} {
    %c0 = arith.constant 0 : index
    %c0_0 = arith.constant 0 : index
    %0 = vector.load %arg3[%c0, %c0_0] : memref<2x128xf32, #tpu.memory_space<vmem>>, vector<2x128xf32>
    %1 = vector.extract_strided_slice %0 {offsets = [0, 0], sizes = [1, 128], strides = [1, 1]} : vector<2x128xf32> to vector<1x128xf32>
    %2 = vector.extract_strided_slice %0 {offsets = [1, 0], sizes = [1, 128], strides = [1, 1]} : vector<2x128xf32> to vector<1x128xf32>
    %c0_1 = arith.constant 0 : index
    %c0_2 = arith.constant 0 : index
    %c0_3 = arith.constant 0 : index
    %c0_4 = arith.constant 0 : index
    %3 = vector.load %arg2[%c0_1, %c0_2, %c0_3, %c0_4] : memref<1x16x16x128xbf16, #tpu.memory_space<vmem>>, vector<1x16x16x128xbf16>
    %4 = arith.extf %3 : vector<1x16x16x128xbf16> to vector<1x16x16x128xf32>
    %5 = vector.shape_cast %1 : vector<1x128xf32> to vector<1x1x1x128xf32>
    %6 = vector.broadcast %5 : vector<1x1x1x128xf32> to vector<1x16x16x128xf32>
    %7 = arith.subf %4, %6 : vector<1x16x16x128xf32>
    %8 = vector.shape_cast %2 : vector<1x128xf32> to vector<1x1x1x128xf32>
    %9 = vector.broadcast %8 : vector<1x1x1x128xf32> to vector<1x16x16x128xf32>
    %10 = arith.mulf %7, %9 : vector<1x16x16x128xf32>
    %cst = arith.constant 0.000000e+00 : f32
    %11 = vector.broadcast %cst : f32 to vector<1x16x16x128xf32>
    %12 = arith.maximumf %10, %11 : vector<1x16x16x128xf32>
    %13 = arith.truncf %12 : vector<1x16x16x128xf32> to vector<1x16x16x128xbf16>
    %c0_5 = arith.constant 0 : index
    %c0_6 = arith.constant 0 : index
    %c0_7 = arith.constant 0 : index
    %c0_8 = arith.constant 0 : index
    %14 = vector.load %arg4[%c0_5, %c0_6, %c0_7, %c0_8] : memref<1x16x16x128xbf16, #tpu.memory_space<vmem>>, vector<1x16x16x128xbf16>
    tpu.vector_store %arg4[%c0_5, %c0_6, %c0_7, %c0_8], %13 {strides = array<i32>} : memref<1x16x16x128xbf16, #tpu.memory_space<vmem>>, vector<1x16x16x128xbf16>,
    return
  }
  func.func @transform_0(%arg0: i32, %arg1: i32) -> (i32, i32, i32, i32) {
    %c0_i32 = arith.constant 0 : i32
    %c0_i32_0 = arith.constant 0 : i32
    %c0_i32_1 = arith.constant 0 : i32
    return %arg0, %arg1, %c0_i32, %c0_i32_0 : i32, i32, i32, i32
  }
  func.func @transform_1(%arg0: i32, %arg1: i32) -> (i32, i32) {
    %c0_i32 = arith.constant 0 : i32
    %c0_i32_0 = arith.constant 0 : i32
    %c0_i32_1 = arith.constant 0 : i32
    return %c0_i32, %c0_i32_0 : i32, i32
  }
  func.func @transform_2(%arg0: i32, %arg1: i32) -> (i32, i32, i32, i32) {
    %c0_i32 = arith.constant 0 : i32
    %c0_i32_0 = arith.constant 0 : i32
    %c0_i32_1 = arith.constant 0 : i32
    return %arg0, %arg1, %c0_i32, %c0_i32_0 : i32, i32, i32, i32
  }
}

module attributes {stable_mosaic.version = 11 : i64} {
  func.func @_conv_stats_kernel(%arg0: i32, %arg1: i32, %arg2: memref<1x16x16x128xbf16, #tpu.memory_space<vmem>>, %arg3: memref<1152x128xbf16, #tpu.memory_space<vmem>>, %arg4: memref<1x8x16x128xbf16, #tpu.memory_space<vmem>>, %arg5: memref<1x1x2x128xf32, #tpu.memory_space<vmem>>, %arg6: memref<18x18x128xbf16, #tpu.memory_space<vmem>>) attributes {dimension_semantics = [#tpu.dimension_semantics<parallel>, #tpu.dimension_semantics<arbitrary>], iteration_bounds = array<i64: 2, 2>, scalar_prefetch = 0 : i64, scratch_operands = 1 : i64, tpu.core_type = #tpu.core_type<tc>, window_params = [{transform_indices = @transform_0, window_bounds = array<i64: 1, 16, 16, 128>}, {pipeline_mode = #tpu.pipeline_mode<synchronous>, transform_indices = @transform_1, window_bounds = array<i64: 1152, 128>}, {transform_indices = @transform_2, window_bounds = array<i64: 1, 8, 16, 128>}, {transform_indices = @transform_3, window_bounds = array<i64: 1, 1, 2, 128>}]} {
    %c8_i32 = arith.constant 8 : i32
    %0 = arith.muli %arg1, %c8_i32 : i32
    %1 = tpu.assume_multiple %0, 8 : i32
    %c0_i32 = arith.constant 0 : i32
    %2 = arith.cmpi eq, %arg1, %c0_i32 : i32
    %3 = arith.extui %2 : i1 to i32
    %c0_i32_0 = arith.constant 0 : i32
    %4 = arith.cmpi ne, %3, %c0_i32_0 : i32
    scf.if %4 {
      %cst_35 = arith.constant 0.000000e+00 : bf16
      %55 = vector.broadcast %cst_35 : bf16 to vector<18x18x128xbf16>
      %c0_36 = arith.constant 0 : index
      %c0_37 = arith.constant 0 : index
      %c0_38 = arith.constant 0 : index
      %56 = vector.load %arg6[%c0_36, %c0_37, %c0_38] : memref<18x18x128xbf16, #tpu.memory_space<vmem>>, vector<18x18x128xbf16>
      tpu.vector_store %arg6[%c0_36, %c0_37, %c0_38], %55 {strides = array<i32>} : memref<18x18x128xbf16, #tpu.memory_space<vmem>>, vector<18x18x128xbf16>,
      %c0_39 = arith.constant 0 : index
      %c0_40 = arith.constant 0 : index
      %c0_41 = arith.constant 0 : index
      %c0_42 = arith.constant 0 : index
      %57 = vector.load %arg2[%c0_39, %c0_40, %c0_41, %c0_42] : memref<1x16x16x128xbf16, #tpu.memory_space<vmem>>, vector<1x16x16x128xbf16>
      %58 = vector.shape_cast %57 : vector<1x16x16x128xbf16> to vector<16x16x128xbf16>
      %c1_43 = arith.constant 1 : index
      %c1_44 = arith.constant 1 : index
      %c0_45 = arith.constant 0 : index
      %59 = vector.load %arg6[%c1_43, %c1_44, %c0_45] : memref<18x18x128xbf16, #tpu.memory_space<vmem>>, vector<16x16x128xbf16>
      tpu.vector_store %arg6[%c1_43, %c1_44, %c0_45], %58 {strides = array<i32>} : memref<18x18x128xbf16, #tpu.memory_space<vmem>>, vector<16x16x128xbf16>,
    } else {
    }
    %c0_i32_1 = arith.constant 0 : i32
    %5 = arith.addi %1, %c0_i32_1 : i32
    %6 = arith.index_cast %5 : i32 to index
    %c0 = arith.constant 0 : index
    %c0_2 = arith.constant 0 : index
    %7 = vector.load %arg6[%6, %c0, %c0_2] : memref<18x18x128xbf16, #tpu.memory_space<vmem>>, vector<8x16x128xbf16>
    %8 = vector.shape_cast %7 : vector<8x16x128xbf16> to vector<128x128xbf16>
    %c0_i32_3 = arith.constant 0 : i32
    %9 = arith.addi %1, %c0_i32_3 : i32
    %10 = arith.index_cast %9 : i32 to index
    %c1 = arith.constant 1 : index
    %c0_4 = arith.constant 0 : index
    %11 = vector.load %arg6[%10, %c1, %c0_4] : memref<18x18x128xbf16, #tpu.memory_space<vmem>>, vector<8x16x128xbf16>
    %12 = vector.shape_cast %11 : vector<8x16x128xbf16> to vector<128x128xbf16>
    %c0_i32_5 = arith.constant 0 : i32
    %13 = arith.addi %1, %c0_i32_5 : i32
    %14 = arith.index_cast %13 : i32 to index
    %c2 = arith.constant 2 : index
    %c0_6 = arith.constant 0 : index
    %15 = vector.load %arg6[%14, %c2, %c0_6] : memref<18x18x128xbf16, #tpu.memory_space<vmem>>, vector<8x16x128xbf16>
    %16 = vector.shape_cast %15 : vector<8x16x128xbf16> to vector<128x128xbf16>
    %c1_i32 = arith.constant 1 : i32
    %17 = arith.addi %1, %c1_i32 : i32
    %18 = arith.index_cast %17 : i32 to index
    %c0_7 = arith.constant 0 : index
    %c0_8 = arith.constant 0 : index
    %19 = vector.load %arg6[%18, %c0_7, %c0_8] : memref<18x18x128xbf16, #tpu.memory_space<vmem>>, vector<8x16x128xbf16>
    %20 = vector.shape_cast %19 : vector<8x16x128xbf16> to vector<128x128xbf16>
    %c1_i32_9 = arith.constant 1 : i32
    %21 = arith.addi %1, %c1_i32_9 : i32
    %22 = arith.index_cast %21 : i32 to index
    %c1_10 = arith.constant 1 : index
    %c0_11 = arith.constant 0 : index
    %23 = vector.load %arg6[%22, %c1_10, %c0_11] : memref<18x18x128xbf16, #tpu.memory_space<vmem>>, vector<8x16x128xbf16>
    %24 = vector.shape_cast %23 : vector<8x16x128xbf16> to vector<128x128xbf16>
    %c1_i32_12 = arith.constant 1 : i32
    %25 = arith.addi %1, %c1_i32_12 : i32
    %26 = arith.index_cast %25 : i32 to index
    %c2_13 = arith.constant 2 : index
    %c0_14 = arith.constant 0 : index
    %27 = vector.load %arg6[%26, %c2_13, %c0_14] : memref<18x18x128xbf16, #tpu.memory_space<vmem>>, vector<8x16x128xbf16>
    %28 = vector.shape_cast %27 : vector<8x16x128xbf16> to vector<128x128xbf16>
    %c2_i32 = arith.constant 2 : i32
    %29 = arith.addi %1, %c2_i32 : i32
    %30 = arith.index_cast %29 : i32 to index
    %c0_15 = arith.constant 0 : index
    %c0_16 = arith.constant 0 : index
    %31 = vector.load %arg6[%30, %c0_15, %c0_16] : memref<18x18x128xbf16, #tpu.memory_space<vmem>>, vector<8x16x128xbf16>
    %32 = vector.shape_cast %31 : vector<8x16x128xbf16> to vector<128x128xbf16>
    %c2_i32_17 = arith.constant 2 : i32
    %33 = arith.addi %1, %c2_i32_17 : i32
    %34 = arith.index_cast %33 : i32 to index
    %c1_18 = arith.constant 1 : index
    %c0_19 = arith.constant 0 : index
    %35 = vector.load %arg6[%34, %c1_18, %c0_19] : memref<18x18x128xbf16, #tpu.memory_space<vmem>>, vector<8x16x128xbf16>
    %36 = vector.shape_cast %35 : vector<8x16x128xbf16> to vector<128x128xbf16>
    %c2_i32_20 = arith.constant 2 : i32
    %37 = arith.addi %1, %c2_i32_20 : i32
    %38 = arith.index_cast %37 : i32 to index
    %c2_21 = arith.constant 2 : index
    %c0_22 = arith.constant 0 : index
    %39 = vector.load %arg6[%38, %c2_21, %c0_22] : memref<18x18x128xbf16, #tpu.memory_space<vmem>>, vector<8x16x128xbf16>
    %40 = vector.shape_cast %39 : vector<8x16x128xbf16> to vector<128x128xbf16>
    %41 = tpu.concatenate %8, %12, %16, %20, %24, %28, %32, %36, %40 in 1 : vector<128x128xbf16>, vector<128x128xbf16>, vector<128x128xbf16>, vector<128x128xbf16>, vector<128x128xbf16>, vector<128x128xbf16>, vector<128x128xbf16>, vector<128x128xbf16>, vector<128x128xbf16> -> vector<128x1152xbf16>
    %c0_23 = arith.constant 0 : index
    %c0_24 = arith.constant 0 : index
    %42 = vector.load %arg3[%c0_23, %c0_24] : memref<1152x128xbf16, #tpu.memory_space<vmem>>, vector<1152x128xbf16>
    %cst = arith.constant dense<0.000000e+00> : vector<128x128xf32>
    %43 = tpu.matmul %41, %42, %cst {dimension_numbers = #tpu.dot_dimension_numbers<[1], [0], [0], [1], [0, 0, 1, 1], [], []>} : vector<128x1152xbf16>, vector<1152x128xbf16>, vector<128x128xf32> -> vector<128x128xf32>
    %44 = vector.shape_cast %43 : vector<128x128xf32> to vector<1x8x16x128xf32>
    %45 = arith.truncf %44 : vector<1x8x16x128xf32> to vector<1x8x16x128xbf16>
    %c0_25 = arith.constant 0 : index
    %c0_26 = arith.constant 0 : index
    %c0_27 = arith.constant 0 : index
    %c0_28 = arith.constant 0 : index
    %46 = vector.load %arg4[%c0_25, %c0_26, %c0_27, %c0_28] : memref<1x8x16x128xbf16, #tpu.memory_space<vmem>>, vector<1x8x16x128xbf16>
    tpu.vector_store %arg4[%c0_25, %c0_26, %c0_27, %c0_28], %45 {strides = array<i32>} : memref<1x8x16x128xbf16, #tpu.memory_space<vmem>>, vector<1x8x16x128xbf16>,
    %cst_29 = arith.constant dense<0.000000e+00> : vector<128xf32>
    %47 = vector.multi_reduction <add>, %43, %cst_29 [0] : vector<128x128xf32> to vector<128xf32>
    %48 = vector.shape_cast %47 : vector<128xf32> to vector<1x128xf32>
    %49 = arith.mulf %43, %43 : vector<128x128xf32>
    %cst_30 = arith.constant dense<0.000000e+00> : vector<128xf32>
    %50 = vector.multi_reduction <add>, %49, %cst_30 [0] : vector<128x128xf32> to vector<128xf32>
    %51 = vector.shape_cast %50 : vector<128xf32> to vector<1x128xf32>
    %52 = tpu.concatenate %48, %51 in 0 : vector<1x128xf32>, vector<1x128xf32> -> vector<2x128xf32>
    %53 = vector.shape_cast %52 : vector<2x128xf32> to vector<1x1x2x128xf32>
    %c0_31 = arith.constant 0 : index
    %c0_32 = arith.constant 0 : index
    %c0_33 = arith.constant 0 : index
    %c0_34 = arith.constant 0 : index
    %54 = vector.load %arg5[%c0_31, %c0_32, %c0_33, %c0_34] : memref<1x1x2x128xf32, #tpu.memory_space<vmem>>, vector<1x1x2x128xf32>
    tpu.vector_store %arg5[%c0_31, %c0_32, %c0_33, %c0_34], %53 {strides = array<i32>} : memref<1x1x2x128xf32, #tpu.memory_space<vmem>>, vector<1x1x2x128xf32>,
    return
  }
  func.func @transform_0(%arg0: i32, %arg1: i32) -> (i32, i32, i32, i32) {
    %c0_i32 = arith.constant 0 : i32
    %c0_i32_0 = arith.constant 0 : i32
    %c0_i32_1 = arith.constant 0 : i32
    %c0_i32_2 = arith.constant 0 : i32
    return %arg0, %c0_i32, %c0_i32_0, %c0_i32_1 : i32, i32, i32, i32
  }
  func.func @transform_1(%arg0: i32, %arg1: i32) -> (i32, i32) {
    %c0_i32 = arith.constant 0 : i32
    %c0_i32_0 = arith.constant 0 : i32
    %c0_i32_1 = arith.constant 0 : i32
    return %c0_i32, %c0_i32_0 : i32, i32
  }
  func.func @transform_2(%arg0: i32, %arg1: i32) -> (i32, i32, i32, i32) {
    %c0_i32 = arith.constant 0 : i32
    %c0_i32_0 = arith.constant 0 : i32
    %c0_i32_1 = arith.constant 0 : i32
    return %arg0, %arg1, %c0_i32, %c0_i32_0 : i32, i32, i32, i32
  }
  func.func @transform_3(%arg0: i32, %arg1: i32) -> (i32, i32, i32, i32) {
    %c0_i32 = arith.constant 0 : i32
    %c0_i32_0 = arith.constant 0 : i32
    %c0_i32_1 = arith.constant 0 : i32
    return %arg0, %arg1, %c0_i32, %c0_i32_0 : i32, i32, i32, i32
  }
}

module attributes {stable_mosaic.version = 11 : i64} {
  func.func @_bn_relu_kernel(%arg0: i32, %arg1: i32, %arg2: memref<1x16x16x128xbf16, #tpu.memory_space<vmem>>, %arg3: memref<2x128xf32, #tpu.memory_space<vmem>>, %arg4: memref<1x16x16x128xf32, #tpu.memory_space<vmem>>) attributes {dimension_semantics = [#tpu.dimension_semantics<parallel>, #tpu.dimension_semantics<parallel>], iteration_bounds = array<i64: 2, 1>, scalar_prefetch = 0 : i64, scratch_operands = 0 : i64, tpu.core_type = #tpu.core_type<tc>, window_params = [{transform_indices = @transform_0, window_bounds = array<i64: 1, 16, 16, 128>}, {pipeline_mode = #tpu.pipeline_mode<synchronous>, transform_indices = @transform_1, window_bounds = array<i64: 2, 128>}, {transform_indices = @transform_2, window_bounds = array<i64: 1, 16, 16, 128>}]} {
    %c0 = arith.constant 0 : index
    %c0_0 = arith.constant 0 : index
    %0 = vector.load %arg3[%c0, %c0_0] : memref<2x128xf32, #tpu.memory_space<vmem>>, vector<2x128xf32>
    %1 = vector.extract_strided_slice %0 {offsets = [0, 0], sizes = [1, 128], strides = [1, 1]} : vector<2x128xf32> to vector<1x128xf32>
    %2 = vector.extract_strided_slice %0 {offsets = [1, 0], sizes = [1, 128], strides = [1, 1]} : vector<2x128xf32> to vector<1x128xf32>
    %c0_1 = arith.constant 0 : index
    %c0_2 = arith.constant 0 : index
    %c0_3 = arith.constant 0 : index
    %c0_4 = arith.constant 0 : index
    %3 = vector.load %arg2[%c0_1, %c0_2, %c0_3, %c0_4] : memref<1x16x16x128xbf16, #tpu.memory_space<vmem>>, vector<1x16x16x128xbf16>
    %4 = arith.extf %3 : vector<1x16x16x128xbf16> to vector<1x16x16x128xf32>
    %5 = vector.shape_cast %1 : vector<1x128xf32> to vector<1x1x1x128xf32>
    %6 = vector.broadcast %5 : vector<1x1x1x128xf32> to vector<1x16x16x128xf32>
    %7 = arith.subf %4, %6 : vector<1x16x16x128xf32>
    %8 = vector.shape_cast %2 : vector<1x128xf32> to vector<1x1x1x128xf32>
    %9 = vector.broadcast %8 : vector<1x1x1x128xf32> to vector<1x16x16x128xf32>
    %10 = arith.mulf %7, %9 : vector<1x16x16x128xf32>
    %cst = arith.constant 0.000000e+00 : f32
    %11 = vector.broadcast %cst : f32 to vector<1x16x16x128xf32>
    %12 = arith.maximumf %10, %11 : vector<1x16x16x128xf32>
    %c0_5 = arith.constant 0 : index
    %c0_6 = arith.constant 0 : index
    %c0_7 = arith.constant 0 : index
    %c0_8 = arith.constant 0 : index
    %13 = vector.load %arg4[%c0_5, %c0_6, %c0_7, %c0_8] : memref<1x16x16x128xf32, #tpu.memory_space<vmem>>, vector<1x16x16x128xf32>
    tpu.vector_store %arg4[%c0_5, %c0_6, %c0_7, %c0_8], %12 {strides = array<i32>} : memref<1x16x16x128xf32, #tpu.memory_space<vmem>>, vector<1x16x16x128xf32>,
    return
  }
  func.func @transform_0(%arg0: i32, %arg1: i32) -> (i32, i32, i32, i32) {
    %c0_i32 = arith.constant 0 : i32
    %c0_i32_0 = arith.constant 0 : i32
    %c0_i32_1 = arith.constant 0 : i32
    return %arg0, %arg1, %c0_i32, %c0_i32_0 : i32, i32, i32, i32
  }
  func.func @transform_1(%arg0: i32, %arg1: i32) -> (i32, i32) {
    %c0_i32 = arith.constant 0 : i32
    %c0_i32_0 = arith.constant 0 : i32
    %c0_i32_1 = arith.constant 0 : i32
    return %c0_i32, %c0_i32_0 : i32, i32
  }
  func.func @transform_2(%arg0: i32, %arg1: i32) -> (i32, i32, i32, i32) {
    %c0_i32 = arith.constant 0 : i32
    %c0_i32_0 = arith.constant 0 : i32
    %c0_i32_1 = arith.constant 0 : i32
    return %arg0, %arg1, %c0_i32, %c0_i32_0 : i32, i32, i32, i32
  }
}

</mosaic_0001>

<llo_original>
// kernel: conv_branch_forward.4
$region0: #{conv_branch_forward.4}
  #allocation0 [shape = 'u32[]', space=smem, size = 0x4, offset = 0x4, fixed_abs, tag = 'smem constant byte address 0x4 - core index']
  #allocation1 [shape = 'u32[144,128]{1,0:T(1,128)}', space=vmem, size = 0x12000, scoped, tag = 'internal scratch']
  %s0 = inlined_call_operand.vmem [shape: bf16[2,16,16,4], index: 0, kind: input, shape index: {}]
  %s1 = inlined_call_operand.vmem [shape: bf16[4,128], index: 1, kind: input, shape index: {}]
  %s2 = inlined_call_operand.vmem [shape: bf16[2,16,16,128], index: 2, kind: output, shape index: {0}]
  %s3 = inlined_call_operand.vmem [shape: f32[2,2,2,128], index: 3, kind: output, shape index: {1}]
  %4 = xla_tuple %s2, %s3
  %s5 = sld [smem:[#allocation0]]
  $region49: #{conv_branch_forward.4} parent=0
    _
  %s7 = ssub.s32 1, %s5
  %s8 = scalar_select 0, %s7, %s5
  loop: start=0, step=1, limit=6
  $region2: #{conv_branch_forward.4} parent=0 // loop_pre_header
    _
  $region3: #{conv_branch_forward.4} parent=0 // loop_header
    %s10 = sphi 0, %s14
    %p11 = scmp.ge.s32.totalorder %s10, 6
    %s17 = sphi 0, %s29
    %s18 = sphi 0, %s25
    %s19 = sphi 0, %s17
    %s20 = sphi 0, %s18
    %s21 = sphi 0, %s19
    %s22 = sphi 0, %s20
    %s32 = sphi 0, %s34
    %s35 = sphi 0, %s32
    %s36 = sphi 0, %s35
    %s52 = sphi 0, %s36
    %s56 = sphi 0, %s56
    %s58 = sphi 0, %s56
    %s59 = sphi 0, %s58
    %s73 = sphi 0, %s59
    %s81 = sphi 0, %s83
    %s84 = sphi 0, %s81
    %s85 = sphi 0, %s84
    %s101 = sphi 0, %s85
    %s109 = sphi 0, %s111
    %s112 = sphi 0, %s109
    %s113 = sphi 0, %s112
    %s129 = sphi 0, %s113
  $region4: #{conv_branch_forward.4} parent=0 // loop_header_branch
    %13 = sbr.rel (%p11) target = $region8
  $region5: #{conv_branch_forward.4} parent=0 // loop_body
    %s15 = ssub.s32 %s10, 1
    %s16 = ssub.s32 %s10, 2
    %s23 = sadd.s32 1, %s18
    %p24 = scmp.ge.s32.totalorder %s23, 2
    %s25 = scalar_select %p24, 0, %s23
    %s26 = sadd.s32 1, %s17
    %s27 = scalar_select %p24, %s26, %s17
    %p28 = scmp.ge.s32.totalorder %s27, 2
    %s29 = scalar_select %p28, 0, %s27
    %s30 = ssub.s32 %s17, %s29
    %p31 = scmp.eq.s32.totalorder %s30, 0
    %s33 = sadd.s32 %s32, 1
    %s34 = scalar_select %p31, %s32, %s33
    %p37 = pneg %p31
    %p38 = scmp.eq.s32.totalorder %s10, 3
    %p39 = por %p37, %p38
    %p40 = scmp.ne.s32.totalorder %s32, %s35
    %p41 = scmp.eq.s32.totalorder %s10, 0
    %p42 = por %p40, %p41
    %p43 = scmp.ne.s32.totalorder %s32, %s35
    %p44 = scmp.eq.s32.totalorder %s15, 3
    %p45 = por %p43, %p44
    %p46 = scmp.ne.s32.totalorder %s35, %s36
    %p47 = scmp.eq.s32.totalorder %s15, 0
    %p48 = por %p46, %p47
    %p49 = scmp.ne.s32.totalorder %s35, %s36
    %p50 = scmp.eq.s32.totalorder %s16, 3
    %p51 = por %p49, %p50
    %p53 = scmp.ne.s32.totalorder %s36, %s52
    %p54 = scmp.eq.s32.totalorder %s16, 0
    %p55 = por %p53, %p54
    %s57 = sadd.s32 %s56, 1
    %p60 = scmp.eq.s32.totalorder %s10, 3
    %p61 = scmp.ne.s32.totalorder %s56, %s58
    %p62 = scmp.eq.s32.totalorder %s10, 0
    %p63 = por %p61, %p62
    %p64 = scmp.ne.s32.totalorder %s56, %s58
    %p65 = scmp.eq.s32.totalorder %s15, 3
    %p66 = por %p64, %p65
    %p67 = scmp.ne.s32.totalorder %s58, %s59
    %p68 = scmp.eq.s32.totalorder %s15, 0
    %p69 = por %p67, %p68
    %p70 = scmp.ne.s32.totalorder %s58, %s59
    %p71 = scmp.eq.s32.totalorder %s16, 3
    %p72 = por %p70, %p71
    %p74 = scmp.ne.s32.totalorder %s59, %s73
    %p75 = scmp.eq.s32.totalorder %s16, 0
    %p76 = por %p74, %p75
    %s77 = ssub.s32 %s17, %s29
    %s78 = ssub.s32 %s18, %s25
    %s79 = sor.u32 %s77, %s78
    %p80 = scmp.eq.s32.totalorder %s79, 0
    %s82 = sadd.s32 %s81, 1
    %s83 = scalar_select %p80, %s81, %s82
    %p86 = pneg %p80
    %p87 = scmp.eq.s32.totalorder %s10, 3
    %p88 = por %p86, %p87
    %p89 = scmp.ne.s32.totalorder %s81, %s84
    %p90 = scmp.eq.s32.totalorder %s10, 0
    %p91 = por %p89, %p90
    %p92 = scmp.ne.s32.totalorder %s81, %s84
    %p93 = scmp.eq.s32.totalorder %s15, 3
    %p94 = por %p92, %p93
    %p95 = scmp.ne.s32.totalorder %s84, %s85
    %p96 = scmp.eq.s32.totalorder %s15, 0
    %p97 = por %p95, %p96
    %p98 = scmp.ne.s32.totalorder %s84, %s85
    %p99 = scmp.eq.s32.totalorder %s16, 3
    %p100 = por %p98, %p99
    %p102 = scmp.ne.s32.totalorder %s85, %s101
    %p103 = scmp.eq.s32.totalorder %s16, 0
    %p104 = por %p102, %p103
    %s105 = ssub.s32 %s17, %s29
    %s106 = ssub.s32 %s18, %s25
    %s107 = sor.u32 %s105, %s106
    %p108 = scmp.eq.s32.totalorder %s107, 0
    %s110 = sadd.s32 %s109, 1
    %s111 = scalar_select %p108, %s109, %s110
    %p114 = pneg %p108
    %p115 = scmp.eq.s32.totalorder %s10, 3
    %p116 = por %p114, %p115
    %p117 = scmp.ne.s32.totalorder %s109, %s112
    %p118 = scmp.eq.s32.totalorder %s10, 0
    %p119 = por %p117, %p118
    %p120 = scmp.ne.s32.totalorder %s109, %s112
    %p121 = scmp.eq.s32.totalorder %s15, 3
    %p122 = por %p120, %p121
    %p123 = scmp.ne.s32.totalorder %s112, %s113
    %p124 = scmp.eq.s32.totalorder %s15, 0
    %p125 = por %p123, %p124
    %p126 = scmp.ne.s32.totalorder %s112, %s113
    %p127 = scmp.eq.s32.totalorder %s16, 3
    %p128 = por %p126, %p127
    %p130 = scmp.ne.s32.totalorder %s113, %s129
    %p131 = scmp.eq.s32.totalorder %s16, 0
    %p132 = por %p130, %p131
    %p133 = scmp.le.s32.totalorder 1, %s10
    %p134 = scmp.lt.s32.totalorder %s10, 5
    %p135 = pnand %p133, %p134
    %p136 = pneg %p135
    // Predicated region
    $region9: #{conv_branch_forward.4} parent=5 // pred_check
      _
    $region10: #{conv_branch_forward.4} parent=5 // pred_check_branch
      %138 = sbr.rel (%p135) target = $region12
    $region11: #{conv_branch_forward.4} parent=5 // pred_region
      %s139 = ssub.s32 %s10, 1
      // Predicated region
      $region13: #{conv_branch_forward.4} parent=11 // pred_check
        %p140 = pneg %p69
      $region14: #{conv_branch_forward.4} parent=11 // pred_check_branch
        %142 = sbr.rel (%p140) target = $region16
      $region15: #{conv_branch_forward.4} parent=11 // pred_region
        _
      $region16: #{conv_branch_forward.4} parent=11 // pred_fallthru
        _
    $region12: #{conv_branch_forward.4} parent=5 // pred_fallthru
      _
    %p143 = scmp.lt.s32.totalorder %s10, 4
    // Predicated region
    $region17: #{conv_branch_forward.4} parent=5 // pred_check
      %p144 = pneg %p143
    $region18: #{conv_branch_forward.4} parent=5 // pred_check_branch
      %146 = sbr.rel (%p144) target = $region20
    $region19: #{conv_branch_forward.4} parent=5 // pred_region
      // Predicated region
      $region21: #{conv_branch_forward.4} parent=19 // pred_check
        %p147 = pneg %p42
      $region22: #{conv_branch_forward.4} parent=19 // pred_check_branch
        %149 = sbr.rel (%p147) target = $region24
      $region23: #{conv_branch_forward.4} parent=19 // pred_region
        %p150 = scmp.lt.s32.totalorder %s17, 1
        %s151 = scalar_select %p150, %s17, 1
        %s152 = smul.addr %s151, 32
        %s153 = smul.addr %s152, 4
        %s154 = scalar_lea.vmem %s0, %s153
      $region24: #{conv_branch_forward.4} parent=19 // pred_fallthru
        _
    $region20: #{conv_branch_forward.4} parent=5 // pred_fallthru
      _
    %p155 = scmp.le.s32.totalorder 1, %s10
    %p156 = scmp.lt.s32.totalorder %s10, 5
    %p157 = pnand %p155, %p156
    %p158 = pneg %p157
    // Predicated region
    $region25: #{conv_branch_forward.4} parent=5 // pred_check
      _
    $region26: #{conv_branch_forward.4} parent=5 // pred_check_branch
      %160 = sbr.rel (%p157) target = $region28
    $region27: #{conv_branch_forward.4} parent=5 // pred_region
      %s161 = ssub.s32 %s10, 1
      %p162 = scmp.lt.s32.totalorder %s19, 1
      %s163 = scalar_select %p162, %s19, 1
      %s164 = smul.addr %s163, 32
      %s165 = smul.addr %s164, 4
      %s166 = scalar_lea.vmem %s0, %s165
      %p167 = pneg %p48
      %p168 = pneg %p45
      %p169 = pneg %p69
      %p170 = pneg %p66
      %p171 = pneg %p97
      %p172 = pneg %p94
      %s173 = smul.u32 8, %s20
      %p174 = scmp.lt.s32.totalorder %s19, 1
      %s175 = scalar_select %p174, %s19, 1
      %p176 = scmp.lt.s32.totalorder %s173, 15
      %s177 = scalar_select %p176, %s173, 15
      %s178 = smul.addr %s177, 2
      %s179 = smul.addr %s175, 32
      %s180 = sadd.s32 %s178, %s179
      %s181 = smul.addr %s180, 4
      %s182 = scalar_lea.vmem %s2, %s181
      %p183 = pneg %p125
      %p184 = pneg %p122
      %p185 = scmp.lt.s32.totalorder %s19, 1
      %s186 = scalar_select %p185, %s19, 1
      %p187 = scmp.lt.s32.totalorder %s20, 1
      %s188 = scalar_select %p187, %s20, 1
      %s189 = smul.addr %s186, 2
      %s190 = sadd.s32 %s188, %s189
      %s191 = smul.addr %s190, 2
      %s192 = scalar_lea.vmem %s3, %s191
      %p193 = scmp.lt.s32.totalorder %s19, 1
      %s194 = scalar_select %p193, %s19, 1
      %s195 = smul.addr %s194, 32
      %s196 = smul.addr %s195, 4
      %s197 = scalar_lea.vmem %s0, %s196
      %s198 = smul.u32 8, %s20
      %p199 = scmp.lt.s32.totalorder %s19, 1
      %s200 = scalar_select %p199, %s19, 1
      %p201 = scmp.lt.s32.totalorder %s198, 15
      %s202 = scalar_select %p201, %s198, 15
      %s203 = smul.addr %s202, 2
      %s204 = smul.addr %s200, 32
      %s205 = sadd.s32 %s203, %s204
      %s206 = smul.addr %s205, 4
      %s207 = scalar_lea.vmem %s2, %s206
      %s208 = smul.u32 8, %s20
      %p209 = scmp.lt.s32.totalorder %s19, 1
      %s210 = scalar_select %p209, %s19, 1
      %p211 = scmp.lt.s32.totalorder %s20, 1
      %s212 = scalar_select %p211, %s20, 1
      %s213 = smul.addr %s210, 2
      %s214 = sadd.s32 %s212, %s213
      %s215 = smul.addr %s214, 2
      %s216 = scalar_lea.vmem %s3, %s215
      %s218 = smul.u32 %s20, 8
      %s219 = smul.u32 %s218, 2
      %s220 = smul.addr %s219, 4
      %s221 = scalar_lea.vmem %s197, %s220
      %v222 = vld [vmem:[%s221] sm:$0xf]
      %v223 = vld [vmem:[%s221 + $0x4] sm:$0xf]
      %v224 = vld [vmem:[%s221 + $0x8] sm:$0xf]
      %v225 = vld [vmem:[%s221 + $0xc] sm:$0xf]
      %v226 = vld [vmem:[%s221 + $0x10] sm:$0xf]
      %v227 = vld [vmem:[%s221 + $0x14] sm:$0xf]
      %v228 = vld [vmem:[%s221 + $0x18] sm:$0xf]
      %v229 = vld [vmem:[%s221 + $0x1c] sm:$0xf]
      %v230 = vld [vmem:[%s221 + $0x20] sm:$0xf]
      %v231 = vld [vmem:[%s221 + $0x24] sm:$0xf]
      %v232 = vld [vmem:[%s221 + $0x28] sm:$0xf]
      %v233 = vld [vmem:[%s221 + $0x2c] sm:$0xf]
      %v234 = vld [vmem:[%s221 + $0x30] sm:$0xf]
      %v235 = vld [vmem:[%s221 + $0x34] sm:$0xf]
      %v236 = vld [vmem:[%s221 + $0x38] sm:$0xf]
      %v237 = vld [vmem:[%s221 + $0x3c] sm:$0xf]
      %v238 = vld [vmem:[%s1] sm:$0x3]
      %v255 = vunpack.c.l.b16 %v222
      %v256 = vunpack.c.l.b16 %v223
      %v257 = vunpack.c.l.b16 %v224
      %v258 = vunpack.c.l.b16 %v225
      %v259 = vunpack.c.l.b16 %v226
      %v260 = vunpack.c.l.b16 %v227
      %v261 = vunpack.c.l.b16 %v228
      %v262 = vunpack.c.l.b16 %v229
      %v263 = vunpack.c.l.b16 %v230
      %v264 = vunpack.c.l.b16 %v231
      %v265 = vunpack.c.l.b16 %v232
      %v266 = vunpack.c.l.b16 %v233
      %v267 = vunpack.c.l.b16 %v234
      %v268 = vunpack.c.l.b16 %v235
      %v269 = vunpack.c.l.b16 %v236
      %v270 = vunpack.c.l.b16 %v237
      %v271 = vpack.c.b16 %v256, %v255
      %v272 = vpack.c.b16 %v258, %v257
      %v273 = vpack.c.b16 %v260, %v259
      %v274 = vpack.c.b16 %v262, %v261
      %v275 = vpack.c.b16 %v264, %v263
      %v276 = vpack.c.b16 %v266, %v265
      %v277 = vpack.c.b16 %v268, %v267
      %v278 = vpack.c.b16 %v270, %v269
      %vm279 = vcmask 31744
      %v281 = vsel %vm279, %v271, 0
      %v284 = vsel %vm279, %v272, 0
      %v287 = vsel %vm279, %v273, 0
      %v290 = vsel %vm279, %v274, 0
      %v293 = vsel %vm279, %v275, 0
      %v296 = vsel %vm279, %v276, 0
      %v299 = vsel %vm279, %v277, 0
      %v302 = vsel %vm279, %v278, 0
      %vm304 = vcmask 1041408
      %v306 = vsel %vm304, %v238, 0
      %308 = vmatprep.subr.bf16.mxu0 0
      %309 = vmatpush1.bf16.msra.mxu0 %v306
      %310 = vmatprep.subr.bf16.mxu0 0
      %311 = vmatpush1.bf16.msra.mxu0 0
      %312 = vmatprep.subr.bf16.mxu0 0
      %313 = vmatpush1.bf16.msra.mxu0 0
      %314 = vmatprep.subr.bf16.mxu0 0
      %315 = vmatpush1.bf16.msra.mxu0 0
      %316 = vmatprep.subr.bf16.mxu0 0
      %317 = vmatpush1.bf16.msra.mxu0 0
      %318 = vmatprep.subr.bf16.mxu0 0
      %319 = vmatpush1.bf16.msra.mxu0 0
      %320 = vmatprep.subr.bf16.mxu0 0
      %321 = vmatpush1.bf16.msra.mxu0 0
      %322 = vmatprep.subr.bf16.mxu0 0
      %323 = vmatpush1.bf16.msra.mxu0 0
      %324 = vmatprep.subr.bf16.mxu0 0
      %325 = vmatpush1.bf16.msra.mxu0 0
      %326 = vmatprep.subr.bf16.mxu0 0
      %327 = vmatpush1.bf16.msra.mxu0 0
      %328 = vmatprep.subr.bf16.mxu0 0
      %329 = vmatpush1.bf16.msra.mxu0 0
      %330 = vmatprep.subr.bf16.mxu0 0
      %331 = vmatpush1.bf16.msra.mxu0 0
      %332 = vmatprep.subr.bf16.mxu0 0
      %333 = vmatpush1.bf16.msra.mxu0 0
      %334 = vmatprep.subr.bf16.mxu0 0
      %335 = vmatpush1.bf16.msra.mxu0 0
      %336 = vmatprep.subr.bf16.mxu0 0
      %337 = vmatpush1.bf16.msra.mxu0 0
      %338 = vmatprep.subr.bf16.mxu0 0
      %339 = vmatpush1.bf16.msra.mxu0 0
      %340 = vmatprep.mubr.bf16.mxu0 0
      %341 = vmatmul.mubr.bf16.gmra.mrb[0].mxu0 %v281
      %v342 = vpop.f32.mrb[0].mxu0
      %v343 = vadd.f32 0.0, %v342
      %v344 = vpop.f32.mrb[0].mxu0
      %v345 = vpop.f32.mrb[0].mxu0
      %v346 = vadd.f32 0.0, %v345
      %v347 = vpop.f32.mrb[0].mxu0
      %348 = vmatprep.mubr.bf16.mxu0 0
      %349 = vmatmul.mubr.bf16.gmra.mrb[0].mxu0 %v284
      %v350 = vpop.f32.mrb[0].mxu0
      %v351 = vadd.f32 0.0, %v350
      %v352 = vpop.f32.mrb[0].mxu0
      %v353 = vpop.f32.mrb[0].mxu0
      %v354 = vadd.f32 0.0, %v353
      %v355 = vpop.f32.mrb[0].mxu0
      %356 = vmatprep.mubr.bf16.mxu0 0
      %357 = vmatmul.mubr.bf16.gmra.mrb[0].mxu0 %v287
      %v358 = vpop.f32.mrb[0].mxu0
      %v359 = vadd.f32 0.0, %v358
      %v360 = vpop.f32.mrb[0].mxu0
      %v361 = vpop.f32.mrb[0].mxu0
      %v362 = vadd.f32 0.0, %v361
      %v363 = vpop.f32.mrb[0].mxu0
      %364 = vmatprep.mubr.bf16.mxu0 0
      %365 = vmatmul.mubr.bf16.gmra.mrb[0].mxu0 %v290
      %v366 = vpop.f32.mrb[0].mxu0
      %v367 = vadd.f32 0.0, %v366
      %v368 = vpop.f32.mrb[0].mxu0
      %v369 = vpop.f32.mrb[0].mxu0
      %v370 = vadd.f32 0.0, %v369
      %v371 = vpop.f32.mrb[0].mxu0
      %372 = vmatprep.mubr.bf16.mxu0 0
      %373 = vmatmul.mubr.bf16.gmra.mrb[0].mxu0 %v293
      %v374 = vpop.f32.mrb[0].mxu0
      %v375 = vadd.f32 0.0, %v374
      %v376 = vpop.f32.mrb[0].mxu0
      %v377 = vpop.f32.mrb[0].mxu0
      %v378 = vadd.f32 0.0, %v377
      %v379 = vpop.f32.mrb[0].mxu0
      %380 = vmatprep.mubr.bf16.mxu0 0
      %381 = vmatmul.mubr.bf16.gmra.mrb[0].mxu0 %v296
      %v382 = vpop.f32.mrb[0].mxu0
      %v383 = vadd.f32 0.0, %v382
      %v384 = vpop.f32.mrb[0].mxu0
      %v385 = vpop.f32.mrb[0].mxu0
      %v386 = vadd.f32 0.0, %v385
      %v387 = vpop.f32.mrb[0].mxu0
      %388 = vmatprep.mubr.bf16.mxu0 0
      %389 = vmatmul.mubr.bf16.gmra.mrb[0].mxu0 %v299
      %v390 = vpop.f32.mrb[0].mxu0
      %v391 = vadd.f32 0.0, %v390
      %v392 = vpop.f32.mrb[0].mxu0
      %v393 = vpop.f32.mrb[0].mxu0
      %v394 = vadd.f32 0.0, %v393
      %v395 = vpop.f32.mrb[0].mxu0
      %396 = vmatprep.mubr.bf16.mxu0 0
      %397 = vmatmul.mubr.bf16.gmra.mrb[0].mxu0 %v302
      %v398 = vpop.f32.mrb[0].mxu0
      %v399 = vadd.f32 0.0, %v398
      %v400 = vpop.f32.mrb[0].mxu0
      %v401 = vpop.f32.mrb[0].mxu0
      %v402 = vadd.f32 0.0, %v401
      %v403 = vpop.f32.mrb[0].mxu0
      %404 = vdwg.mxu0
      %v405 = vpack.c.bf16 %v346, %v343
      %v406 = vpack.c.bf16 %v354, %v351
      %v407 = vpack.c.bf16 %v362, %v359
      %v408 = vpack.c.bf16 %v370, %v367
      %v409 = vpack.c.bf16 %v378, %v375
      %v410 = vpack.c.bf16 %v386, %v383
      %v411 = vpack.c.bf16 %v394, %v391
      %v412 = vpack.c.bf16 %v402, %v399
      %v421 = vunpack.c.l.b16 %v405
      %v422 = vunpack.c.h.b16 %v405
      %v423 = vunpack.c.l.b16 %v406
      %v424 = vunpack.c.h.b16 %v406
      %v425 = vunpack.c.l.b16 %v407
      %v426 = vunpack.c.h.b16 %v407
      %v427 = vunpack.c.l.b16 %v408
      %v428 = vunpack.c.h.b16 %v408
      %v429 = vunpack.c.l.b16 %v409
      %v430 = vunpack.c.h.b16 %v409
      %v431 = vunpack.c.l.b16 %v410
      %v432 = vunpack.c.h.b16 %v410
      %v433 = vunpack.c.l.b16 %v411
      %v434 = vunpack.c.h.b16 %v411
      %v435 = vunpack.c.l.b16 %v412
      %v436 = vunpack.c.h.b16 %v412
      %v437 = vpack.c.b16 %v421, %v421
      %v438 = vpack.c.b16 %v422, %v422
      %v439 = vpack.c.b16 %v423, %v423
      %v440 = vpack.c.b16 %v424, %v424
      %v441 = vpack.c.b16 %v425, %v425
      %v442 = vpack.c.b16 %v426, %v426
      %v443 = vpack.c.b16 %v427, %v427
      %v444 = vpack.c.b16 %v428, %v428
      %v445 = vpack.c.b16 %v429, %v429
      %v446 = vpack.c.b16 %v430, %v430
      %v447 = vpack.c.b16 %v431, %v431
      %v448 = vpack.c.b16 %v432, %v432
      %v449 = vpack.c.b16 %v433, %v433
      %v450 = vpack.c.b16 %v434, %v434
      %v451 = vpack.c.b16 %v435, %v435
      %v452 = vpack.c.b16 %v436, %v436
      %469 = vst [vmem:[%s207] sm:$0xf] %v437
      %470 = vst [vmem:[%s207 + $0x4] sm:$0xf] %v438
      %471 = vst [vmem:[%s207 + $0x8] sm:$0xf] %v439
      %472 = vst [vmem:[%s207 + $0xc] sm:$0xf] %v440
      %473 = vst [vmem:[%s207 + $0x10] sm:$0xf] %v441
      %474 = vst [vmem:[%s207 + $0x14] sm:$0xf] %v442
      %475 = vst [vmem:[%s207 + $0x18] sm:$0xf] %v443
      %476 = vst [vmem:[%s207 + $0x1c] sm:$0xf] %v444
      %477 = vst [vmem:[%s207 + $0x20] sm:$0xf] %v445
      %478 = vst [vmem:[%s207 + $0x24] sm:$0xf] %v446
      %479 = vst [vmem:[%s207 + $0x28] sm:$0xf] %v447
      %480 = vst [vmem:[%s207 + $0x2c] sm:$0xf] %v448
      %481 = vst [vmem:[%s207 + $0x30] sm:$0xf] %v449
      %482 = vst [vmem:[%s207 + $0x34] sm:$0xf] %v450
      %483 = vst [vmem:[%s207 + $0x38] sm:$0xf] %v451
      %484 = vst [vmem:[%s207 + $0x3c] sm:$0xf] %v452
      %v485 = vadd.f32 %v343, %v346
      %v486 = vadd.f32 %v485, %v351
      %v487 = vadd.f32 %v486, %v354
      %v488 = vadd.f32 %v487, %v359
      %v489 = vadd.f32 %v488, %v362
      %v490 = vadd.f32 %v489, %v367
      %v491 = vadd.f32 %v490, %v370
      %v492 = vadd.f32 %v491, %v375
      %v493 = vadd.f32 %v492, %v378
      %v494 = vadd.f32 %v493, %v383
      %v495 = vadd.f32 %v494, %v386
      %v496 = vadd.f32 %v495, %v391
      %v497 = vadd.f32 %v496, %v394
      %v498 = vadd.f32 %v497, %v399
      %v499 = vadd.f32 %v498, %v402
      %v500 = vrot.slane %v499, 4
      %v501 = vadd.f32 %v499, %v500
      %v502 = vrot.slane %v501, 2
      %v503 = vadd.f32 %v501, %v502
      %v504 = vrot.slane %v503, 1
      %v505 = vadd.f32 %v503, %v504
      %v506 = vmul.f32 %v343, %v343
      %v507 = vmul.f32 %v346, %v346
      %v508 = vmul.f32 %v351, %v351
      %v509 = vmul.f32 %v354, %v354
      %v510 = vmul.f32 %v359, %v359
      %v511 = vmul.f32 %v362, %v362
      %v512 = vmul.f32 %v367, %v367
      %v513 = vmul.f32 %v370, %v370
      %v514 = vmul.f32 %v375, %v375
      %v515 = vmul.f32 %v378, %v378
      %v516 = vmul.f32 %v383, %v383
      %v517 = vmul.f32 %v386, %v386
      %v518 = vmul.f32 %v391, %v391
      %v519 = vmul.f32 %v394, %v394
      %v520 = vmul.f32 %v399, %v399
      %v521 = vmul.f32 %v402, %v402
      %v522 = vadd.f32 %v506, %v507
      %v523 = vadd.f32 %v522, %v508
      %v524 = vadd.f32 %v523, %v509
      %v525 = vadd.f32 %v524, %v510
      %v526 = vadd.f32 %v525, %v511
      %v527 = vadd.f32 %v526, %v512
      %v528 = vadd.f32 %v527, %v513
      %v529 = vadd.f32 %v528, %v514
      %v530 = vadd.f32 %v529, %v515
      %v531 = vadd.f32 %v530, %v516
      %v532 = vadd.f32 %v531, %v517
      %v533 = vadd.f32 %v532, %v518
      %v534 = vadd.f32 %v533, %v519
      %v535 = vadd.f32 %v534, %v520
      %v536 = vadd.f32 %v535, %v521
      %v537 = vrot.slane %v536, 4
      %v538 = vadd.f32 %v536, %v537
      %v539 = vrot.slane %v538, 2
      %v540 = vadd.f32 %v538, %v539
      %v541 = vrot.slane %v540, 1
      %v542 = vadd.f32 %v540, %v541
      %vm543 = vcmask 1040384
      %v544 = vsel %vm543, %v505, %v542
      %545 = vst [vmem:[%s216] sm:$0x3] %v544
      %s546 = smul.u32 8, %s20
      %p547 = scmp.lt.s32.totalorder %s19, 1
      %s548 = scalar_select %p547, %s19, 1
      %p549 = scmp.lt.s32.totalorder %s546, 15
      %s550 = scalar_select %p549, %s546, 15
      %s551 = smul.addr %s550, 2
      %s552 = smul.addr %s548, 32
      %s553 = sadd.s32 %s551, %s552
      %s554 = smul.addr %s553, 4
      %s555 = scalar_lea.vmem %s2, %s554
      %p556 = scmp.lt.s32.totalorder %s19, 1
      %s557 = scalar_select %p556, %s19, 1
      %p558 = scmp.lt.s32.totalorder %s20, 1
      %s559 = scalar_select %p558, %s20, 1
      %s560 = smul.addr %s557, 2
      %s561 = sadd.s32 %s559, %s560
      %s562 = smul.addr %s561, 2
      %s563 = scalar_lea.vmem %s3, %s562
      // Predicated region
      $region29: #{conv_branch_forward.4} parent=27 // pred_check
        %p564 = pneg %p94
      $region30: #{conv_branch_forward.4} parent=27 // pred_check_branch
        %566 = sbr.rel (%p564) target = $region32
      $region31: #{conv_branch_forward.4} parent=27 // pred_region
        %s567 = smul.u32 8, %s20
      $region32: #{conv_branch_forward.4} parent=27 // pred_fallthru
        _
      // Predicated region
      $region33: #{conv_branch_forward.4} parent=27 // pred_check
        %p568 = pneg %p122
      $region34: #{conv_branch_forward.4} parent=27 // pred_check_branch
        %570 = sbr.rel (%p568) target = $region36
      $region35: #{conv_branch_forward.4} parent=27 // pred_region
        _
      $region36: #{conv_branch_forward.4} parent=27 // pred_fallthru
        _
    $region28: #{conv_branch_forward.4} parent=5 // pred_fallthru
      _
    %p571 = scmp.le.s32.totalorder 2, %s10
    // Predicated region
    $region37: #{conv_branch_forward.4} parent=5 // pred_check
      %p572 = pneg %p571
    $region38: #{conv_branch_forward.4} parent=5 // pred_check_branch
      %574 = sbr.rel (%p572) target = $region40
    $region39: #{conv_branch_forward.4} parent=5 // pred_region
      %s575 = ssub.s32 %s10, 2
      // Predicated region
      $region41: #{conv_branch_forward.4} parent=39 // pred_check
        %p576 = pneg %p100
      $region42: #{conv_branch_forward.4} parent=39 // pred_check_branch
        %578 = sbr.rel (%p576) target = $region44
      $region43: #{conv_branch_forward.4} parent=39 // pred_region
        %s579 = smul.u32 8, %s22
        %p580 = scmp.lt.s32.totalorder %s21, 1
        %s581 = scalar_select %p580, %s21, 1
        %p582 = scmp.lt.s32.totalorder %s579, 15
        %s583 = scalar_select %p582, %s579, 15
        %s584 = smul.addr %s583, 2
        %s585 = smul.addr %s581, 32
        %s586 = sadd.s32 %s584, %s585
        %s587 = smul.addr %s586, 4
        %s588 = scalar_lea.vmem %s2, %s587
      $region44: #{conv_branch_forward.4} parent=39 // pred_fallthru
        _
      // Predicated region
      $region45: #{conv_branch_forward.4} parent=39 // pred_check
        %p589 = pneg %p128
      $region46: #{conv_branch_forward.4} parent=39 // pred_check_branch
        %591 = sbr.rel (%p589) target = $region48
      $region47: #{conv_branch_forward.4} parent=39 // pred_region
        %p592 = scmp.lt.s32.totalorder %s21, 1
        %s593 = scalar_select %p592, %s21, 1
        %p594 = scmp.lt.s32.totalorder %s22, 1
        %s595 = scalar_select %p594, %s22, 1
        %s596 = smul.addr %s593, 2
        %s597 = sadd.s32 %s595, %s596
        %s598 = smul.addr %s597, 2
        %s599 = scalar_lea.vmem %s3, %s598
      $region48: #{conv_branch_forward.4} parent=39 // pred_fallthru
        _
    $region40: #{conv_branch_forward.4} parent=5 // pred_fallthru
      _
  $region6: #{conv_branch_forward.4} parent=0 // loop_footer
    %s14 = sadd.s32 1, %s10
  $region7: #{conv_branch_forward.4} parent=0 // loop_footer_branch
    %9 = sbr.rel target = $region3
  $region8: #{conv_branch_forward.4} parent=0 // loop_exit
    _

// kernel: conv_branch_forward.5
$region0: #{conv_branch_forward.5}
  #allocation0 [shape = 'u32[]', space=smem, size = 0x4, offset = 0x4, fixed_abs, tag = 'smem constant byte address 0x4 - core index']
  #allocation1 [shape = 'u32[144,128]{1,0:T(1,128)}', space=vmem, size = 0x12000, scoped, tag = 'internal scratch']
  %s0 = inlined_call_operand.vmem [shape: bf16[2,16,16,128], index: 0, kind: input, shape index: {}]
  %s1 = inlined_call_operand.vmem [shape: f32[2,128], index: 1, kind: input, shape index: {}]
  %s2 = inlined_call_operand.vmem [shape: bf16[2,16,16,128], index: 2, kind: output, shape index: {}]
  %s3 = sld [smem:[#allocation0]]
  $region41: #{conv_branch_forward.5} parent=0
    _
  %s5 = ssub.s32 1, %s3
  %s6 = scalar_select 0, %s5, %s3
  loop: start=0, step=1, limit=4
  $region2: #{conv_branch_forward.5} parent=0 // loop_pre_header
    _
  $region3: #{conv_branch_forward.5} parent=0 // loop_header
    %s8 = sphi 0, %s12
    %p9 = scmp.ge.s32.totalorder %s8, 4
    %s15 = sphi 0, %s27
    %s16 = sphi 0, %s23
    %s17 = sphi 0, %s15
    %s18 = sphi 0, %s16
    %s19 = sphi 0, %s17
    %s20 = sphi 0, %s18
    %s32 = sphi 0, %s34
    %s35 = sphi 0, %s32
    %s36 = sphi 0, %s35
    %s52 = sphi 0, %s36
    %s56 = sphi 0, %s56
    %s58 = sphi 0, %s56
    %s59 = sphi 0, %s58
    %s73 = sphi 0, %s59
    %s81 = sphi 0, %s83
    %s84 = sphi 0, %s81
    %s85 = sphi 0, %s84
    %s101 = sphi 0, %s85
  $region4: #{conv_branch_forward.5} parent=0 // loop_header_branch
    %11 = sbr.rel (%p9) target = $region8
  $region5: #{conv_branch_forward.5} parent=0 // loop_body
    %s13 = ssub.s32 %s8, 1
    %s14 = ssub.s32 %s8, 2
    %s21 = sadd.s32 1, %s16
    %p22 = scmp.ge.s32.totalorder %s21, 1
    %s23 = scalar_select %p22, 0, %s21
    %s24 = sadd.s32 1, %s15
    %s25 = scalar_select %p22, %s24, %s15
    %p26 = scmp.ge.s32.totalorder %s25, 2
    %s27 = scalar_select %p26, 0, %s25
    %s28 = ssub.s32 %s15, %s27
    %s29 = ssub.s32 %s16, %s23
    %s30 = sor.u32 %s28, %s29
    %p31 = scmp.eq.s32.totalorder %s30, 0
    %s33 = sadd.s32 %s32, 1
    %s34 = scalar_select %p31, %s32, %s33
    %p37 = pneg %p31
    %p38 = scmp.eq.s32.totalorder %s8, 1
    %p39 = por %p37, %p38
    %p40 = scmp.ne.s32.totalorder %s32, %s35
    %p41 = scmp.eq.s32.totalorder %s8, 0
    %p42 = por %p40, %p41
    %p43 = scmp.ne.s32.totalorder %s32, %s35
    %p44 = scmp.eq.s32.totalorder %s13, 1
    %p45 = por %p43, %p44
    %p46 = scmp.ne.s32.totalorder %s35, %s36
    %p47 = scmp.eq.s32.totalorder %s13, 0
    %p48 = por %p46, %p47
    %p49 = scmp.ne.s32.totalorder %s35, %s36
    %p50 = scmp.eq.s32.totalorder %s14, 1
    %p51 = por %p49, %p50
    %p53 = scmp.ne.s32.totalorder %s36, %s52
    %p54 = scmp.eq.s32.totalorder %s14, 0
    %p55 = por %p53, %p54
    %s57 = sadd.s32 %s56, 1
    %p60 = scmp.eq.s32.totalorder %s8, 1
    %p61 = scmp.ne.s32.totalorder %s56, %s58
    %p62 = scmp.eq.s32.totalorder %s8, 0
    %p63 = por %p61, %p62
    %p64 = scmp.ne.s32.totalorder %s56, %s58
    %p65 = scmp.eq.s32.totalorder %s13, 1
    %p66 = por %p64, %p65
    %p67 = scmp.ne.s32.totalorder %s58, %s59
    %p68 = scmp.eq.s32.totalorder %s13, 0
    %p69 = por %p67, %p68
    %p70 = scmp.ne.s32.totalorder %s58, %s59
    %p71 = scmp.eq.s32.totalorder %s14, 1
    %p72 = por %p70, %p71
    %p74 = scmp.ne.s32.totalorder %s59, %s73
    %p75 = scmp.eq.s32.totalorder %s14, 0
    %p76 = por %p74, %p75
    %s77 = ssub.s32 %s15, %s27
    %s78 = ssub.s32 %s16, %s23
    %s79 = sor.u32 %s77, %s78
    %p80 = scmp.eq.s32.totalorder %s79, 0
    %s82 = sadd.s32 %s81, 1
    %s83 = scalar_select %p80, %s81, %s82
    %p86 = pneg %p80
    %p87 = scmp.eq.s32.totalorder %s8, 1
    %p88 = por %p86, %p87
    %p89 = scmp.ne.s32.totalorder %s81, %s84
    %p90 = scmp.eq.s32.totalorder %s8, 0
    %p91 = por %p89, %p90
    %p92 = scmp.ne.s32.totalorder %s81, %s84
    %p93 = scmp.eq.s32.totalorder %s13, 1
    %p94 = por %p92, %p93
    %p95 = scmp.ne.s32.totalorder %s84, %s85
    %p96 = scmp.eq.s32.totalorder %s13, 0
    %p97 = por %p95, %p96
    %p98 = scmp.ne.s32.totalorder %s84, %s85
    %p99 = scmp.eq.s32.totalorder %s14, 1
    %p100 = por %p98, %p99
    %p102 = scmp.ne.s32.totalorder %s85, %s101
    %p103 = scmp.eq.s32.totalorder %s14, 0
    %p104 = por %p102, %p103
    %p105 = scmp.le.s32.totalorder 1, %s8
    %p106 = scmp.lt.s32.totalorder %s8, 3
    %p107 = pnand %p105, %p106
    %p108 = pneg %p107
    // Predicated region
    $region9: #{conv_branch_forward.5} parent=5 // pred_check
      _
    $region10: #{conv_branch_forward.5} parent=5 // pred_check_branch
      %110 = sbr.rel (%p107) target = $region12
    $region11: #{conv_branch_forward.5} parent=5 // pred_region
      %s111 = ssub.s32 %s8, 1
      // Predicated region
      $region13: #{conv_branch_forward.5} parent=11 // pred_check
        %p112 = pneg %p69
      $region14: #{conv_branch_forward.5} parent=11 // pred_check_branch
        %114 = sbr.rel (%p112) target = $region16
      $region15: #{conv_branch_forward.5} parent=11 // pred_region
        _
      $region16: #{conv_branch_forward.5} parent=11 // pred_fallthru
        _
    $region12: #{conv_branch_forward.5} parent=5 // pred_fallthru
      _
    %p115 = scmp.lt.s32.totalorder %s8, 2
    // Predicated region
    $region17: #{conv_branch_forward.5} parent=5 // pred_check
      %p116 = pneg %p115
    $region18: #{conv_branch_forward.5} parent=5 // pred_check_branch
      %118 = sbr.rel (%p116) target = $region20
    $region19: #{conv_branch_forward.5} parent=5 // pred_region
      // Predicated region
      $region21: #{conv_branch_forward.5} parent=19 // pred_check
        %p119 = pneg %p42
      $region22: #{conv_branch_forward.5} parent=19 // pred_check_branch
        %121 = sbr.rel (%p119) target = $region24
      $region23: #{conv_branch_forward.5} parent=19 // pred_region
        %s122 = smul.u32 16, %s16
        %p123 = scmp.lt.s32.totalorder %s15, 1
        %s124 = scalar_select %p123, %s15, 1
        %p125 = scmp.lt.s32.totalorder %s122, 15
        %s126 = scalar_select %p125, %s122, 15
        %s127 = smul.addr %s126, 2
        %s128 = smul.addr %s124, 32
        %s129 = sadd.s32 %s127, %s128
        %s130 = smul.addr %s129, 4
        %s131 = scalar_lea.vmem %s0, %s130
        %s132 = smul.u32 16, %s16
      $region24: #{conv_branch_forward.5} parent=19 // pred_fallthru
        _
    $region20: #{conv_branch_forward.5} parent=5 // pred_fallthru
      _
    %p133 = scmp.le.s32.totalorder 1, %s8
    %p134 = scmp.lt.s32.totalorder %s8, 3
    %p135 = pnand %p133, %p134
    %p136 = pneg %p135
    // Predicated region
    $region25: #{conv_branch_forward.5} parent=5 // pred_check
      _
    $region26: #{conv_branch_forward.5} parent=5 // pred_check_branch
      %138 = sbr.rel (%p135) target = $region28
    $region27: #{conv_branch_forward.5} parent=5 // pred_region
      %s139 = ssub.s32 %s8, 1
      %s140 = smul.u32 16, %s18
      %p141 = scmp.lt.s32.totalorder %s17, 1
      %s142 = scalar_select %p141, %s17, 1
      %p143 = scmp.lt.s32.totalorder %s140, 15
      %s144 = scalar_select %p143, %s140, 15
      %s145 = smul.addr %s144, 2
      %s146 = smul.addr %s142, 32
      %s147 = sadd.s32 %s145, %s146
      %s148 = smul.addr %s147, 4
      %s149 = scalar_lea.vmem %s0, %s148
      %p150 = pneg %p48
      %p151 = pneg %p45
      %p152 = pneg %p69
      %p153 = pneg %p66
      %p154 = pneg %p97
      %p155 = pneg %p94
      %s156 = smul.u32 16, %s18
      %p157 = scmp.lt.s32.totalorder %s17, 1
      %s158 = scalar_select %p157, %s17, 1
      %p159 = scmp.lt.s32.totalorder %s156, 15
      %s160 = scalar_select %p159, %s156, 15
      %s161 = smul.addr %s160, 2
      %s162 = smul.addr %s158, 32
      %s163 = sadd.s32 %s161, %s162
      %s164 = smul.addr %s163, 4
      %s165 = scalar_lea.vmem %s2, %s164
      %s166 = smul.u32 16, %s18
      %p167 = scmp.lt.s32.totalorder %s17, 1
      %s168 = scalar_select %p167, %s17, 1
      %p169 = scmp.lt.s32.totalorder %s166, 15
      %s170 = scalar_select %p169, %s166, 15
      %s171 = smul.addr %s170, 2
      %s172 = smul.addr %s168, 32
      %s173 = sadd.s32 %s171, %s172
      %s174 = smul.addr %s173, 4
      %s175 = scalar_lea.vmem %s0, %s174
      %s176 = smul.u32 16, %s18
      %s177 = smul.u32 16, %s18
      %p178 = scmp.lt.s32.totalorder %s17, 1
      %s179 = scalar_select %p178, %s17, 1
      %p180 = scmp.lt.s32.totalorder %s177, 15
      %s181 = scalar_select %p180, %s177, 15
      %s182 = smul.addr %s181, 2
      %s183 = smul.addr %s179, 32
      %s184 = sadd.s32 %s182, %s183
      %s185 = smul.addr %s184, 4
      %s186 = scalar_lea.vmem %s2, %s185
      %s187 = smul.u32 16, %s18
      %v188 = vld [vmem:[%s1] sm:$0x3]
      %v189 = vld [vmem:[%s175] sm:$0xf]
      %v190 = vld [vmem:[%s175 + $0x4] sm:$0xf]
      %v191 = vld [vmem:[%s175 + $0x8] sm:$0xf]
      %v192 = vld [vmem:[%s175 + $0xc] sm:$0xf]
      %v193 = vld [vmem:[%s175 + $0x10] sm:$0xf]
      %v194 = vld [vmem:[%s175 + $0x14] sm:$0xf]
      %v195 = vld [vmem:[%s175 + $0x18] sm:$0xf]
      %v196 = vld [vmem:[%s175 + $0x1c] sm:$0xf]
      %v197 = vld [vmem:[%s175 + $0x20] sm:$0xf]
      %v198 = vld [vmem:[%s175 + $0x24] sm:$0xf]
      %v199 = vld [vmem:[%s175 + $0x28] sm:$0xf]
      %v200 = vld [vmem:[%s175 + $0x2c] sm:$0xf]
      %v201 = vld [vmem:[%s175 + $0x30] sm:$0xf]
      %v202 = vld [vmem:[%s175 + $0x34] sm:$0xf]
      %v203 = vld [vmem:[%s175 + $0x38] sm:$0xf]
      %v204 = vld [vmem:[%s175 + $0x3c] sm:$0xf]
      %v205 = vld [vmem:[%s175 + $0x40] sm:$0xf]
      %v206 = vld [vmem:[%s175 + $0x44] sm:$0xf]
      %v207 = vld [vmem:[%s175 + $0x48] sm:$0xf]
      %v208 = vld [vmem:[%s175 + $0x4c] sm:$0xf]
      %v209 = vld [vmem:[%s175 + $0x50] sm:$0xf]
      %v210 = vld [vmem:[%s175 + $0x54] sm:$0xf]
      %v211 = vld [vmem:[%s175 + $0x58] sm:$0xf]
      %v212 = vld [vmem:[%s175 + $0x5c] sm:$0xf]
      %v213 = vld [vmem:[%s175 + $0x60] sm:$0xf]
      %v214 = vld [vmem:[%s175 + $0x64] sm:$0xf]
      %v215 = vld [vmem:[%s175 + $0x68] sm:$0xf]
      %v216 = vld [vmem:[%s175 + $0x6c] sm:$0xf]
      %v217 = vld [vmem:[%s175 + $0x70] sm:$0xf]
      %v218 = vld [vmem:[%s175 + $0x74] sm:$0xf]
      %v219 = vld [vmem:[%s175 + $0x78] sm:$0xf]
      %v220 = vld [vmem:[%s175 + $0x7c] sm:$0xf]
      %v221 = vunpack.c.l.bf16 %v189
      %v222 = vunpack.c.l.bf16 %v190
      %v223 = vunpack.c.l.bf16 %v191
      %v224 = vunpack.c.l.bf16 %v192
      %v225 = vunpack.c.l.bf16 %v193
      %v226 = vunpack.c.l.bf16 %v194
      %v227 = vunpack.c.l.bf16 %v195
      %v228 = vunpack.c.l.bf16 %v196
      %v229 = vunpack.c.l.bf16 %v197
      %v230 = vunpack.c.l.bf16 %v198
      %v231 = vunpack.c.l.bf16 %v199
      %v232 = vunpack.c.l.bf16 %v200
      %v233 = vunpack.c.l.bf16 %v201
      %v234 = vunpack.c.l.bf16 %v202
      %v235 = vunpack.c.l.bf16 %v203
      %v236 = vunpack.c.l.bf16 %v204
      %v237 = vunpack.c.l.bf16 %v205
      %v238 = vunpack.c.l.bf16 %v206
      %v239 = vunpack.c.l.bf16 %v207
      %v240 = vunpack.c.l.bf16 %v208
      %v241 = vunpack.c.l.bf16 %v209
      %v242 = vunpack.c.l.bf16 %v210
      %v243 = vunpack.c.l.bf16 %v211
      %v244 = vunpack.c.l.bf16 %v212
      %v245 = vunpack.c.l.bf16 %v213
      %v246 = vunpack.c.l.bf16 %v214
      %v247 = vunpack.c.l.bf16 %v215
      %v248 = vunpack.c.l.bf16 %v216
      %v249 = vunpack.c.l.bf16 %v217
      %v250 = vunpack.c.l.bf16 %v218
      %v251 = vunpack.c.l.bf16 %v219
      %v252 = vunpack.c.l.bf16 %v220
      %v253 = vlaneseq
      %v254 = vshrl.u32 %v253, 7
      %v255 = vsub.s32 0, %v254
      %v256 = vrot.slane %v188, %v255
      %v257 = vsub.f32 %v221, %v256
      %v258 = vsub.f32 %v222, %v256
      %v259 = vsub.f32 %v223, %v256
      %v260 = vsub.f32 %v224, %v256
      %v261 = vsub.f32 %v225, %v256
      %v262 = vsub.f32 %v226, %v256
      %v263 = vsub.f32 %v227, %v256
      %v264 = vsub.f32 %v228, %v256
      %v265 = vsub.f32 %v229, %v256
      %v266 = vsub.f32 %v230, %v256
      %v267 = vsub.f32 %v231, %v256
      %v268 = vsub.f32 %v232, %v256
      %v269 = vsub.f32 %v233, %v256
      %v270 = vsub.f32 %v234, %v256
      %v271 = vsub.f32 %v235, %v256
      %v272 = vsub.f32 %v236, %v256
      %v273 = vsub.f32 %v237, %v256
      %v274 = vsub.f32 %v238, %v256
      %v275 = vsub.f32 %v239, %v256
      %v276 = vsub.f32 %v240, %v256
      %v277 = vsub.f32 %v241, %v256
      %v278 = vsub.f32 %v242, %v256
      %v279 = vsub.f32 %v243, %v256
      %v280 = vsub.f32 %v244, %v256
      %v281 = vsub.f32 %v245, %v256
      %v282 = vsub.f32 %v246, %v256
      %v283 = vsub.f32 %v247, %v256
      %v284 = vsub.f32 %v248, %v256
      %v285 = vsub.f32 %v249, %v256
      %v286 = vsub.f32 %v250, %v256
      %v287 = vsub.f32 %v251, %v256
      %v288 = vsub.f32 %v252, %v256
      %v289 = vlaneseq
      %v290 = vshrl.u32 %v289, 7
      %v291 = vsub.s32 1, %v290
      %v292 = vrot.slane %v188, %v291
      %v293 = vmul.f32 %v257, %v292
      %v294 = vmul.f32 %v258, %v292
      %v295 = vmul.f32 %v259, %v292
      %v296 = vmul.f32 %v260, %v292
      %v297 = vmul.f32 %v261, %v292
      %v298 = vmul.f32 %v262, %v292
      %v299 = vmul.f32 %v263, %v292
      %v300 = vmul.f32 %v264, %v292
      %v301 = vmul.f32 %v265, %v292
      %v302 = vmul.f32 %v266, %v292
      %v303 = vmul.f32 %v267, %v292
      %v304 = vmul.f32 %v268, %v292
      %v305 = vmul.f32 %v269, %v292
      %v306 = vmul.f32 %v270, %v292
      %v307 = vmul.f32 %v271, %v292
      %v308 = vmul.f32 %v272, %v292
      %v309 = vmul.f32 %v273, %v292
      %v310 = vmul.f32 %v274, %v292
      %v311 = vmul.f32 %v275, %v292
      %v312 = vmul.f32 %v276, %v292
      %v313 = vmul.f32 %v277, %v292
      %v314 = vmul.f32 %v278, %v292
      %v315 = vmul.f32 %v279, %v292
      %v316 = vmul.f32 %v280, %v292
      %v317 = vmul.f32 %v281, %v292
      %v318 = vmul.f32 %v282, %v292
      %v319 = vmul.f32 %v283, %v292
      %v320 = vmul.f32 %v284, %v292
      %v321 = vmul.f32 %v285, %v292
      %v322 = vmul.f32 %v286, %v292
      %v323 = vmul.f32 %v287, %v292
      %v324 = vmul.f32 %v288, %v292
      %v325 = vmax.f32 %v293, 0.0
      %v326 = vmax.f32 %v294, 0.0
      %v327 = vmax.f32 %v295, 0.0
      %v328 = vmax.f32 %v296, 0.0
      %v329 = vmax.f32 %v297, 0.0
      %v330 = vmax.f32 %v298, 0.0
      %v331 = vmax.f32 %v299, 0.0
      %v332 = vmax.f32 %v300, 0.0
      %v333 = vmax.f32 %v301, 0.0
      %v334 = vmax.f32 %v302, 0.0
      %v335 = vmax.f32 %v303, 0.0
      %v336 = vmax.f32 %v304, 0.0
      %v337 = vmax.f32 %v305, 0.0
      %v338 = vmax.f32 %v306, 0.0
      %v339 = vmax.f32 %v307, 0.0
      %v340 = vmax.f32 %v308, 0.0
      %v341 = vmax.f32 %v309, 0.0
      %v342 = vmax.f32 %v310, 0.0
      %v343 = vmax.f32 %v311, 0.0
      %v344 = vmax.f32 %v312, 0.0
      %v345 = vmax.f32 %v313, 0.0
      %v346 = vmax.f32 %v314, 0.0
      %v347 = vmax.f32 %v315, 0.0
      %v348 = vmax.f32 %v316, 0.0
      %v349 = vmax.f32 %v317, 0.0
      %v350 = vmax.f32 %v318, 0.0
      %v351 = vmax.f32 %v319, 0.0
      %v352 = vmax.f32 %v320, 0.0
      %v353 = vmax.f32 %v321, 0.0
      %v354 = vmax.f32 %v322, 0.0
      %v355 = vmax.f32 %v323, 0.0
      %v356 = vmax.f32 %v324, 0.0
      %v357 = vpack.c.bf16 %v326, %v325
      %v358 = vpack.c.bf16 %v328, %v327
      %v359 = vpack.c.bf16 %v330, %v329
      %v360 = vpack.c.bf16 %v332, %v331
      %v361 = vpack.c.bf16 %v334, %v333
      %v362 = vpack.c.bf16 %v336, %v335
      %v363 = vpack.c.bf16 %v338, %v337
      %v364 = vpack.c.bf16 %v340, %v339
      %v365 = vpack.c.bf16 %v342, %v341
      %v366 = vpack.c.bf16 %v344, %v343
      %v367 = vpack.c.bf16 %v346, %v345
      %v368 = vpack.c.bf16 %v348, %v347
      %v369 = vpack.c.bf16 %v350, %v349
      %v370 = vpack.c.bf16 %v352, %v351
      %v371 = vpack.c.bf16 %v354, %v353
      %v372 = vpack.c.bf16 %v356, %v355
      %v389 = vunpack.c.l.b16 %v357
      %v390 = vunpack.c.h.b16 %v357
      %v391 = vunpack.c.l.b16 %v358
      %v392 = vunpack.c.h.b16 %v358
      %v393 = vunpack.c.l.b16 %v359
      %v394 = vunpack.c.h.b16 %v359
      %v395 = vunpack.c.l.b16 %v360
      %v396 = vunpack.c.h.b16 %v360
      %v397 = vunpack.c.l.b16 %v361
      %v398 = vunpack.c.h.b16 %v361
      %v399 = vunpack.c.l.b16 %v362
      %v400 = vunpack.c.h.b16 %v362
      %v401 = vunpack.c.l.b16 %v363
      %v402 = vunpack.c.h.b16 %v363
      %v403 = vunpack.c.l.b16 %v364
      %v404 = vunpack.c.h.b16 %v364
      %v405 = vunpack.c.l.b16 %v365
      %v406 = vunpack.c.h.b16 %v365
      %v407 = vunpack.c.l.b16 %v366
      %v408 = vunpack.c.h.b16 %v366
      %v409 = vunpack.c.l.b16 %v367
      %v410 = vunpack.c.h.b16 %v367
      %v411 = vunpack.c.l.b16 %v368
      %v412 = vunpack.c.h.b16 %v368
      %v413 = vunpack.c.l.b16 %v369
      %v414 = vunpack.c.h.b16 %v369
      %v415 = vunpack.c.l.b16 %v370
      %v416 = vunpack.c.h.b16 %v370
      %v417 = vunpack.c.l.b16 %v371
      %v418 = vunpack.c.h.b16 %v371
      %v419 = vunpack.c.l.b16 %v372
      %v420 = vunpack.c.h.b16 %v372
      %v421 = vpack.c.b16 %v389, %v389
      %v422 = vpack.c.b16 %v390, %v390
      %v423 = vpack.c.b16 %v391, %v391
      %v424 = vpack.c.b16 %v392, %v392
      %v425 = vpack.c.b16 %v393, %v393
      %v426 = vpack.c.b16 %v394, %v394
      %v427 = vpack.c.b16 %v395, %v395
      %v428 = vpack.c.b16 %v396, %v396
      %v429 = vpack.c.b16 %v397, %v397
      %v430 = vpack.c.b16 %v398, %v398
      %v431 = vpack.c.b16 %v399, %v399
      %v432 = vpack.c.b16 %v400, %v400
      %v433 = vpack.c.b16 %v401, %v401
      %v434 = vpack.c.b16 %v402, %v402
      %v435 = vpack.c.b16 %v403, %v403
      %v436 = vpack.c.b16 %v404, %v404
      %v437 = vpack.c.b16 %v405, %v405
      %v438 = vpack.c.b16 %v406, %v406
      %v439 = vpack.c.b16 %v407, %v407
      %v440 = vpack.c.b16 %v408, %v408
      %v441 = vpack.c.b16 %v409, %v409
      %v442 = vpack.c.b16 %v410, %v410
      %v443 = vpack.c.b16 %v411, %v411
      %v444 = vpack.c.b16 %v412, %v412
      %v445 = vpack.c.b16 %v413, %v413
      %v446 = vpack.c.b16 %v414, %v414
      %v447 = vpack.c.b16 %v415, %v415
      %v448 = vpack.c.b16 %v416, %v416
      %v449 = vpack.c.b16 %v417, %v417
      %v450 = vpack.c.b16 %v418, %v418
      %v451 = vpack.c.b16 %v419, %v419
      %v452 = vpack.c.b16 %v420, %v420
      %485 = vst [vmem:[%s186] sm:$0xf] %v421
      %486 = vst [vmem:[%s186 + $0x4] sm:$0xf] %v422
      %487 = vst [vmem:[%s186 + $0x8] sm:$0xf] %v423
      %488 = vst [vmem:[%s186 + $0xc] sm:$0xf] %v424
      %489 = vst [vmem:[%s186 + $0x10] sm:$0xf] %v425
      %490 = vst [vmem:[%s186 + $0x14] sm:$0xf] %v426
      %491 = vst [vmem:[%s186 + $0x18] sm:$0xf] %v427
      %492 = vst [vmem:[%s186 + $0x1c] sm:$0xf] %v428
      %493 = vst [vmem:[%s186 + $0x20] sm:$0xf] %v429
      %494 = vst [vmem:[%s186 + $0x24] sm:$0xf] %v430
      %495 = vst [vmem:[%s186 + $0x28] sm:$0xf] %v431
      %496 = vst [vmem:[%s186 + $0x2c] sm:$0xf] %v432
      %497 = vst [vmem:[%s186 + $0x30] sm:$0xf] %v433
      %498 = vst [vmem:[%s186 + $0x34] sm:$0xf] %v434
      %499 = vst [vmem:[%s186 + $0x38] sm:$0xf] %v435
      %500 = vst [vmem:[%s186 + $0x3c] sm:$0xf] %v436
      %501 = vst [vmem:[%s186 + $0x40] sm:$0xf] %v437
      %502 = vst [vmem:[%s186 + $0x44] sm:$0xf] %v438
      %503 = vst [vmem:[%s186 + $0x48] sm:$0xf] %v439
      %504 = vst [vmem:[%s186 + $0x4c] sm:$0xf] %v440
      %505 = vst [vmem:[%s186 + $0x50] sm:$0xf] %v441
      %506 = vst [vmem:[%s186 + $0x54] sm:$0xf] %v442
      %507 = vst [vmem:[%s186 + $0x58] sm:$0xf] %v443
      %508 = vst [vmem:[%s186 + $0x5c] sm:$0xf] %v444
      %509 = vst [vmem:[%s186 + $0x60] sm:$0xf] %v445
      %510 = vst [vmem:[%s186 + $0x64] sm:$0xf] %v446
      %511 = vst [vmem:[%s186 + $0x68] sm:$0xf] %v447
      %512 = vst [vmem:[%s186 + $0x6c] sm:$0xf] %v448
      %513 = vst [vmem:[%s186 + $0x70] sm:$0xf] %v449
      %514 = vst [vmem:[%s186 + $0x74] sm:$0xf] %v450
      %515 = vst [vmem:[%s186 + $0x78] sm:$0xf] %v451
      %516 = vst [vmem:[%s186 + $0x7c] sm:$0xf] %v452
      %s517 = smul.u32 16, %s18
      %p518 = scmp.lt.s32.totalorder %s17, 1
      %s519 = scalar_select %p518, %s17, 1
      %p520 = scmp.lt.s32.totalorder %s517, 15
      %s521 = scalar_select %p520, %s517, 15
      %s522 = smul.addr %s521, 2
      %s523 = smul.addr %s519, 32
      %s524 = sadd.s32 %s522, %s523
      %s525 = smul.addr %s524, 4
      %s526 = scalar_lea.vmem %s2, %s525
      // Predicated region
      $region29: #{conv_branch_forward.5} parent=27 // pred_check
        %p527 = pneg %p94
      $region30: #{conv_branch_forward.5} parent=27 // pred_check_branch
        %529 = sbr.rel (%p527) target = $region32
      $region31: #{conv_branch_forward.5} parent=27 // pred_region
        %s530 = smul.u32 16, %s18
      $region32: #{conv_branch_forward.5} parent=27 // pred_fallthru
        _
    $region28: #{conv_branch_forward.5} parent=5 // pred_fallthru
      _
    %p531 = scmp.le.s32.totalorder 2, %s8
    // Predicated region
    $region33: #{conv_branch_forward.5} parent=5 // pred_check
      %p532 = pneg %p531
    $region34: #{conv_branch_forward.5} parent=5 // pred_check_branch
      %534 = sbr.rel (%p532) target = $region36
    $region35: #{conv_branch_forward.5} parent=5 // pred_region
      %s535 = ssub.s32 %s8, 2
      // Predicated region
      $region37: #{conv_branch_forward.5} parent=35 // pred_check
        %p536 = pneg %p100
      $region38: #{conv_branch_forward.5} parent=35 // pred_check_branch
        %538 = sbr.rel (%p536) target = $region40
      $region39: #{conv_branch_forward.5} parent=35 // pred_region
        %s539 = smul.u32 16, %s20
        %p540 = scmp.lt.s32.totalorder %s19, 1
        %s541 = scalar_select %p540, %s19, 1
        %p542 = scmp.lt.s32.totalorder %s539, 15
        %s543 = scalar_select %p542, %s539, 15
        %s544 = smul.addr %s543, 2
        %s545 = smul.addr %s541, 32
        %s546 = sadd.s32 %s544, %s545
        %s547 = smul.addr %s546, 4
        %s548 = scalar_lea.vmem %s2, %s547
      $region40: #{conv_branch_forward.5} parent=35 // pred_fallthru
        _
    $region36: #{conv_branch_forward.5} parent=5 // pred_fallthru
      _
  $region6: #{conv_branch_forward.5} parent=0 // loop_footer
    %s12 = sadd.s32 1, %s8
  $region7: #{conv_branch_forward.5} parent=0 // loop_footer_branch
    %7 = sbr.rel target = $region3
  $region8: #{conv_branch_forward.5} parent=0 // loop_exit
    _

// kernel: conv_branch_forward.7
$region0: #{conv_branch_forward.7}
  #allocation0 [shape = 'u32[]', space=smem, size = 0x4, offset = 0x4, fixed_abs, tag = 'smem constant byte address 0x4 - core index']
  #allocation1 [shape = 'u32[144,128]{1,0:T(1,128)}', space=vmem, size = 0x12000, scoped, tag = 'internal scratch']
  %s0 = inlined_call_operand.vmem [shape: bf16[2,16,16,128], index: 0, kind: input, shape index: {}]
  %s1 = inlined_call_operand.vmem [shape: f32[2,128], index: 1, kind: input, shape index: {}]
  %s2 = inlined_call_operand.vmem [shape: f32[2,16,16,128], index: 2, kind: output, shape index: {}]
  %s3 = sld [smem:[#allocation0]]
  $region41: #{conv_branch_forward.7} parent=0
    _
  %s5 = ssub.s32 1, %s3
  %s6 = scalar_select 0, %s5, %s3
  loop: start=0, step=1, limit=4
  $region2: #{conv_branch_forward.7} parent=0 // loop_pre_header
    _
  $region3: #{conv_branch_forward.7} parent=0 // loop_header
    %s8 = sphi 0, %s12
    %p9 = scmp.ge.s32.totalorder %s8, 4
    %s15 = sphi 0, %s27
    %s16 = sphi 0, %s23
    %s17 = sphi 0, %s15
    %s18 = sphi 0, %s16
    %s19 = sphi 0, %s17
    %s20 = sphi 0, %s18
    %s32 = sphi 0, %s34
    %s35 = sphi 0, %s32
    %s36 = sphi 0, %s35
    %s52 = sphi 0, %s36
    %s56 = sphi 0, %s56
    %s58 = sphi 0, %s56
    %s59 = sphi 0, %s58
    %s73 = sphi 0, %s59
    %s81 = sphi 0, %s83
    %s84 = sphi 0, %s81
    %s85 = sphi 0, %s84
    %s101 = sphi 0, %s85
  $region4: #{conv_branch_forward.7} parent=0 // loop_header_branch
    %11 = sbr.rel (%p9) target = $region8
  $region5: #{conv_branch_forward.7} parent=0 // loop_body
    %s13 = ssub.s32 %s8, 1
    %s14 = ssub.s32 %s8, 2
    %s21 = sadd.s32 1, %s16
    %p22 = scmp.ge.s32.totalorder %s21, 1
    %s23 = scalar_select %p22, 0, %s21
    %s24 = sadd.s32 1, %s15
    %s25 = scalar_select %p22, %s24, %s15
    %p26 = scmp.ge.s32.totalorder %s25, 2
    %s27 = scalar_select %p26, 0, %s25
    %s28 = ssub.s32 %s15, %s27
    %s29 = ssub.s32 %s16, %s23
    %s30 = sor.u32 %s28, %s29
    %p31 = scmp.eq.s32.totalorder %s30, 0
    %s33 = sadd.s32 %s32, 1
    %s34 = scalar_select %p31, %s32, %s33
    %p37 = pneg %p31
    %p38 = scmp.eq.s32.totalorder %s8, 1
    %p39 = por %p37, %p38
    %p40 = scmp.ne.s32.totalorder %s32, %s35
    %p41 = scmp.eq.s32.totalorder %s8, 0
    %p42 = por %p40, %p41
    %p43 = scmp.ne.s32.totalorder %s32, %s35
    %p44 = scmp.eq.s32.totalorder %s13, 1
    %p45 = por %p43, %p44
    %p46 = scmp.ne.s32.totalorder %s35, %s36
    %p47 = scmp.eq.s32.totalorder %s13, 0
    %p48 = por %p46, %p47
    %p49 = scmp.ne.s32.totalorder %s35, %s36
    %p50 = scmp.eq.s32.totalorder %s14, 1
    %p51 = por %p49, %p50
    %p53 = scmp.ne.s32.totalorder %s36, %s52
    %p54 = scmp.eq.s32.totalorder %s14, 0
    %p55 = por %p53, %p54
    %s57 = sadd.s32 %s56, 1
    %p60 = scmp.eq.s32.totalorder %s8, 1
    %p61 = scmp.ne.s32.totalorder %s56, %s58
    %p62 = scmp.eq.s32.totalorder %s8, 0
    %p63 = por %p61, %p62
    %p64 = scmp.ne.s32.totalorder %s56, %s58
    %p65 = scmp.eq.s32.totalorder %s13, 1
    %p66 = por %p64, %p65
    %p67 = scmp.ne.s32.totalorder %s58, %s59
    %p68 = scmp.eq.s32.totalorder %s13, 0
    %p69 = por %p67, %p68
    %p70 = scmp.ne.s32.totalorder %s58, %s59
    %p71 = scmp.eq.s32.totalorder %s14, 1
    %p72 = por %p70, %p71
    %p74 = scmp.ne.s32.totalorder %s59, %s73
    %p75 = scmp.eq.s32.totalorder %s14, 0
    %p76 = por %p74, %p75
    %s77 = ssub.s32 %s15, %s27
    %s78 = ssub.s32 %s16, %s23
    %s79 = sor.u32 %s77, %s78
    %p80 = scmp.eq.s32.totalorder %s79, 0
    %s82 = sadd.s32 %s81, 1
    %s83 = scalar_select %p80, %s81, %s82
    %p86 = pneg %p80
    %p87 = scmp.eq.s32.totalorder %s8, 1
    %p88 = por %p86, %p87
    %p89 = scmp.ne.s32.totalorder %s81, %s84
    %p90 = scmp.eq.s32.totalorder %s8, 0
    %p91 = por %p89, %p90
    %p92 = scmp.ne.s32.totalorder %s81, %s84
    %p93 = scmp.eq.s32.totalorder %s13, 1
    %p94 = por %p92, %p93
    %p95 = scmp.ne.s32.totalorder %s84, %s85
    %p96 = scmp.eq.s32.totalorder %s13, 0
    %p97 = por %p95, %p96
    %p98 = scmp.ne.s32.totalorder %s84, %s85
    %p99 = scmp.eq.s32.totalorder %s14, 1
    %p100 = por %p98, %p99
    %p102 = scmp.ne.s32.totalorder %s85, %s101
    %p103 = scmp.eq.s32.totalorder %s14, 0
    %p104 = por %p102, %p103
    %p105 = scmp.le.s32.totalorder 1, %s8
    %p106 = scmp.lt.s32.totalorder %s8, 3
    %p107 = pnand %p105, %p106
    %p108 = pneg %p107
    // Predicated region
    $region9: #{conv_branch_forward.7} parent=5 // pred_check
      _
    $region10: #{conv_branch_forward.7} parent=5 // pred_check_branch
      %110 = sbr.rel (%p107) target = $region12
    $region11: #{conv_branch_forward.7} parent=5 // pred_region
      %s111 = ssub.s32 %s8, 1
      // Predicated region
      $region13: #{conv_branch_forward.7} parent=11 // pred_check
        %p112 = pneg %p69
      $region14: #{conv_branch_forward.7} parent=11 // pred_check_branch
        %114 = sbr.rel (%p112) target = $region16
      $region15: #{conv_branch_forward.7} parent=11 // pred_region
        _
      $region16: #{conv_branch_forward.7} parent=11 // pred_fallthru
        _
    $region12: #{conv_branch_forward.7} parent=5 // pred_fallthru
      _
    %p115 = scmp.lt.s32.totalorder %s8, 2
    // Predicated region
    $region17: #{conv_branch_forward.7} parent=5 // pred_check
      %p116 = pneg %p115
    $region18: #{conv_branch_forward.7} parent=5 // pred_check_branch
      %118 = sbr.rel (%p116) target = $region20
    $region19: #{conv_branch_forward.7} parent=5 // pred_region
      // Predicated region
      $region21: #{conv_branch_forward.7} parent=19 // pred_check
        %p119 = pneg %p42
      $region22: #{conv_branch_forward.7} parent=19 // pred_check_branch
        %121 = sbr.rel (%p119) target = $region24
      $region23: #{conv_branch_forward.7} parent=19 // pred_region
        %s122 = smul.u32 16, %s16
        %p123 = scmp.lt.s32.totalorder %s15, 1
        %s124 = scalar_select %p123, %s15, 1
        %p125 = scmp.lt.s32.totalorder %s122, 15
        %s126 = scalar_select %p125, %s122, 15
        %s127 = smul.addr %s126, 2
        %s128 = smul.addr %s124, 32
        %s129 = sadd.s32 %s127, %s128
        %s130 = smul.addr %s129, 4
        %s131 = scalar_lea.vmem %s0, %s130
        %s132 = smul.u32 16, %s16
      $region24: #{conv_branch_forward.7} parent=19 // pred_fallthru
        _
    $region20: #{conv_branch_forward.7} parent=5 // pred_fallthru
      _
    %p133 = scmp.le.s32.totalorder 1, %s8
    %p134 = scmp.lt.s32.totalorder %s8, 3
    %p135 = pnand %p133, %p134
    %p136 = pneg %p135
    // Predicated region
    $region25: #{conv_branch_forward.7} parent=5 // pred_check
      _
    $region26: #{conv_branch_forward.7} parent=5 // pred_check_branch
      %138 = sbr.rel (%p135) target = $region28
    $region27: #{conv_branch_forward.7} parent=5 // pred_region
      %s139 = ssub.s32 %s8, 1
      %s140 = smul.u32 16, %s18
      %p141 = scmp.lt.s32.totalorder %s17, 1
      %s142 = scalar_select %p141, %s17, 1
      %p143 = scmp.lt.s32.totalorder %s140, 15
      %s144 = scalar_select %p143, %s140, 15
      %s145 = smul.addr %s144, 2
      %s146 = smul.addr %s142, 32
      %s147 = sadd.s32 %s145, %s146
      %s148 = smul.addr %s147, 4
      %s149 = scalar_lea.vmem %s0, %s148
      %p150 = pneg %p48
      %p151 = pneg %p45
      %p152 = pneg %p69
      %p153 = pneg %p66
      %p154 = pneg %p97
      %p155 = pneg %p94
      %s156 = smul.u32 16, %s18
      %p157 = scmp.lt.s32.totalorder %s17, 1
      %s158 = scalar_select %p157, %s17, 1
      %p159 = scmp.lt.s32.totalorder %s156, 15
      %s160 = scalar_select %p159, %s156, 15
      %s161 = smul.addr %s160, 2
      %s162 = smul.addr %s158, 32
      %s163 = sadd.s32 %s161, %s162
      %s164 = smul.addr %s163, 8
      %s165 = scalar_lea.vmem %s2, %s164
      %s166 = smul.u32 16, %s18
      %p167 = scmp.lt.s32.totalorder %s17, 1
      %s168 = scalar_select %p167, %s17, 1
      %p169 = scmp.lt.s32.totalorder %s166, 15
      %s170 = scalar_select %p169, %s166, 15
      %s171 = smul.addr %s170, 2
      %s172 = smul.addr %s168, 32
      %s173 = sadd.s32 %s171, %s172
      %s174 = smul.addr %s173, 4
      %s175 = scalar_lea.vmem %s0, %s174
      %s176 = smul.u32 16, %s18
      %s177 = smul.u32 16, %s18
      %p178 = scmp.lt.s32.totalorder %s17, 1
      %s179 = scalar_select %p178, %s17, 1
      %p180 = scmp.lt.s32.totalorder %s177, 15
      %s181 = scalar_select %p180, %s177, 15
      %s182 = smul.addr %s181, 2
      %s183 = smul.addr %s179, 32
      %s184 = sadd.s32 %s182, %s183
      %s185 = smul.addr %s184, 8
      %s186 = scalar_lea.vmem %s2, %s185
      %s187 = smul.u32 16, %s18
      %v188 = vld [vmem:[%s1] sm:$0x3]
      %v189 = vld [vmem:[%s175] sm:$0xf]
      %v190 = vld [vmem:[%s175 + $0x4] sm:$0xf]
      %v191 = vld [vmem:[%s175 + $0x8] sm:$0xf]
      %v192 = vld [vmem:[%s175 + $0xc] sm:$0xf]
      %v193 = vld [vmem:[%s175 + $0x10] sm:$0xf]
      %v194 = vld [vmem:[%s175 + $0x14] sm:$0xf]
      %v195 = vld [vmem:[%s175 + $0x18] sm:$0xf]
      %v196 = vld [vmem:[%s175 + $0x1c] sm:$0xf]
      %v197 = vld [vmem:[%s175 + $0x20] sm:$0xf]
      %v198 = vld [vmem:[%s175 + $0x24] sm:$0xf]
      %v199 = vld [vmem:[%s175 + $0x28] sm:$0xf]
      %v200 = vld [vmem:[%s175 + $0x2c] sm:$0xf]
      %v201 = vld [vmem:[%s175 + $0x30] sm:$0xf]
      %v202 = vld [vmem:[%s175 + $0x34] sm:$0xf]
      %v203 = vld [vmem:[%s175 + $0x38] sm:$0xf]
      %v204 = vld [vmem:[%s175 + $0x3c] sm:$0xf]
      %v205 = vld [vmem:[%s175 + $0x40] sm:$0xf]
      %v206 = vld [vmem:[%s175 + $0x44] sm:$0xf]
      %v207 = vld [vmem:[%s175 + $0x48] sm:$0xf]
      %v208 = vld [vmem:[%s175 + $0x4c] sm:$0xf]
      %v209 = vld [vmem:[%s175 + $0x50] sm:$0xf]
      %v210 = vld [vmem:[%s175 + $0x54] sm:$0xf]
      %v211 = vld [vmem:[%s175 + $0x58] sm:$0xf]
      %v212 = vld [vmem:[%s175 + $0x5c] sm:$0xf]
      %v213 = vld [vmem:[%s175 + $0x60] sm:$0xf]
      %v214 = vld [vmem:[%s175 + $0x64] sm:$0xf]
      %v215 = vld [vmem:[%s175 + $0x68] sm:$0xf]
      %v216 = vld [vmem:[%s175 + $0x6c] sm:$0xf]
      %v217 = vld [vmem:[%s175 + $0x70] sm:$0xf]
      %v218 = vld [vmem:[%s175 + $0x74] sm:$0xf]
      %v219 = vld [vmem:[%s175 + $0x78] sm:$0xf]
      %v220 = vld [vmem:[%s175 + $0x7c] sm:$0xf]
      %v221 = vunpack.c.l.bf16 %v189
      %v222 = vunpack.c.l.bf16 %v190
      %v223 = vunpack.c.l.bf16 %v191
      %v224 = vunpack.c.l.bf16 %v192
      %v225 = vunpack.c.l.bf16 %v193
      %v226 = vunpack.c.l.bf16 %v194
      %v227 = vunpack.c.l.bf16 %v195
      %v228 = vunpack.c.l.bf16 %v196
      %v229 = vunpack.c.l.bf16 %v197
      %v230 = vunpack.c.l.bf16 %v198
      %v231 = vunpack.c.l.bf16 %v199
      %v232 = vunpack.c.l.bf16 %v200
      %v233 = vunpack.c.l.bf16 %v201
      %v234 = vunpack.c.l.bf16 %v202
      %v235 = vunpack.c.l.bf16 %v203
      %v236 = vunpack.c.l.bf16 %v204
      %v237 = vunpack.c.l.bf16 %v205
      %v238 = vunpack.c.l.bf16 %v206
      %v239 = vunpack.c.l.bf16 %v207
      %v240 = vunpack.c.l.bf16 %v208
      %v241 = vunpack.c.l.bf16 %v209
      %v242 = vunpack.c.l.bf16 %v210
      %v243 = vunpack.c.l.bf16 %v211
      %v244 = vunpack.c.l.bf16 %v212
      %v245 = vunpack.c.l.bf16 %v213
      %v246 = vunpack.c.l.bf16 %v214
      %v247 = vunpack.c.l.bf16 %v215
      %v248 = vunpack.c.l.bf16 %v216
      %v249 = vunpack.c.l.bf16 %v217
      %v250 = vunpack.c.l.bf16 %v218
      %v251 = vunpack.c.l.bf16 %v219
      %v252 = vunpack.c.l.bf16 %v220
      %v253 = vlaneseq
      %v254 = vshrl.u32 %v253, 7
      %v255 = vsub.s32 0, %v254
      %v256 = vrot.slane %v188, %v255
      %v257 = vsub.f32 %v221, %v256
      %v258 = vsub.f32 %v222, %v256
      %v259 = vsub.f32 %v223, %v256
      %v260 = vsub.f32 %v224, %v256
      %v261 = vsub.f32 %v225, %v256
      %v262 = vsub.f32 %v226, %v256
      %v263 = vsub.f32 %v227, %v256
      %v264 = vsub.f32 %v228, %v256
      %v265 = vsub.f32 %v229, %v256
      %v266 = vsub.f32 %v230, %v256
      %v267 = vsub.f32 %v231, %v256
      %v268 = vsub.f32 %v232, %v256
      %v269 = vsub.f32 %v233, %v256
      %v270 = vsub.f32 %v234, %v256
      %v271 = vsub.f32 %v235, %v256
      %v272 = vsub.f32 %v236, %v256
      %v273 = vsub.f32 %v237, %v256
      %v274 = vsub.f32 %v238, %v256
      %v275 = vsub.f32 %v239, %v256
      %v276 = vsub.f32 %v240, %v256
      %v277 = vsub.f32 %v241, %v256
      %v278 = vsub.f32 %v242, %v256
      %v279 = vsub.f32 %v243, %v256
      %v280 = vsub.f32 %v244, %v256
      %v281 = vsub.f32 %v245, %v256
      %v282 = vsub.f32 %v246, %v256
      %v283 = vsub.f32 %v247, %v256
      %v284 = vsub.f32 %v248, %v256
      %v285 = vsub.f32 %v249, %v256
      %v286 = vsub.f32 %v250, %v256
      %v287 = vsub.f32 %v251, %v256
      %v288 = vsub.f32 %v252, %v256
      %v289 = vlaneseq
      %v290 = vshrl.u32 %v289, 7
      %v291 = vsub.s32 1, %v290
      %v292 = vrot.slane %v188, %v291
      %v293 = vmul.f32 %v257, %v292
      %v294 = vmul.f32 %v258, %v292
      %v295 = vmul.f32 %v259, %v292
      %v296 = vmul.f32 %v260, %v292
      %v297 = vmul.f32 %v261, %v292
      %v298 = vmul.f32 %v262, %v292
      %v299 = vmul.f32 %v263, %v292
      %v300 = vmul.f32 %v264, %v292
      %v301 = vmul.f32 %v265, %v292
      %v302 = vmul.f32 %v266, %v292
      %v303 = vmul.f32 %v267, %v292
      %v304 = vmul.f32 %v268, %v292
      %v305 = vmul.f32 %v269, %v292
      %v306 = vmul.f32 %v270, %v292
      %v307 = vmul.f32 %v271, %v292
      %v308 = vmul.f32 %v272, %v292
      %v309 = vmul.f32 %v273, %v292
      %v310 = vmul.f32 %v274, %v292
      %v311 = vmul.f32 %v275, %v292
      %v312 = vmul.f32 %v276, %v292
      %v313 = vmul.f32 %v277, %v292
      %v314 = vmul.f32 %v278, %v292
      %v315 = vmul.f32 %v279, %v292
      %v316 = vmul.f32 %v280, %v292
      %v317 = vmul.f32 %v281, %v292
      %v318 = vmul.f32 %v282, %v292
      %v319 = vmul.f32 %v283, %v292
      %v320 = vmul.f32 %v284, %v292
      %v321 = vmul.f32 %v285, %v292
      %v322 = vmul.f32 %v286, %v292
      %v323 = vmul.f32 %v287, %v292
      %v324 = vmul.f32 %v288, %v292
      %v325 = vmax.f32 %v293, 0.0
      %v326 = vmax.f32 %v294, 0.0
      %v327 = vmax.f32 %v295, 0.0
      %v328 = vmax.f32 %v296, 0.0
      %v329 = vmax.f32 %v297, 0.0
      %v330 = vmax.f32 %v298, 0.0
      %v331 = vmax.f32 %v299, 0.0
      %v332 = vmax.f32 %v300, 0.0
      %v333 = vmax.f32 %v301, 0.0
      %v334 = vmax.f32 %v302, 0.0
      %v335 = vmax.f32 %v303, 0.0
      %v336 = vmax.f32 %v304, 0.0
      %v337 = vmax.f32 %v305, 0.0
      %v338 = vmax.f32 %v306, 0.0
      %v339 = vmax.f32 %v307, 0.0
      %v340 = vmax.f32 %v308, 0.0
      %v341 = vmax.f32 %v309, 0.0
      %v342 = vmax.f32 %v310, 0.0
      %v343 = vmax.f32 %v311, 0.0
      %v344 = vmax.f32 %v312, 0.0
      %v345 = vmax.f32 %v313, 0.0
      %v346 = vmax.f32 %v314, 0.0
      %v347 = vmax.f32 %v315, 0.0
      %v348 = vmax.f32 %v316, 0.0
      %v349 = vmax.f32 %v317, 0.0
      %v350 = vmax.f32 %v318, 0.0
      %v351 = vmax.f32 %v319, 0.0
      %v352 = vmax.f32 %v320, 0.0
      %v353 = vmax.f32 %v321, 0.0
      %v354 = vmax.f32 %v322, 0.0
      %v355 = vmax.f32 %v323, 0.0
      %v356 = vmax.f32 %v324, 0.0
      %357 = vst [vmem:[%s186] sm:$0xff] %v325
      %358 = vst [vmem:[%s186 + $0x8] sm:$0xff] %v326
      %359 = vst [vmem:[%s186 + $0x10] sm:$0xff] %v327
      %360 = vst [vmem:[%s186 + $0x18] sm:$0xff] %v328
      %361 = vst [vmem:[%s186 + $0x20] sm:$0xff] %v329
      %362 = vst [vmem:[%s186 + $0x28] sm:$0xff] %v330
      %363 = vst [vmem:[%s186 + $0x30] sm:$0xff] %v331
      %364 = vst [vmem:[%s186 + $0x38] sm:$0xff] %v332
      %365 = vst [vmem:[%s186 + $0x40] sm:$0xff] %v333
      %366 = vst [vmem:[%s186 + $0x48] sm:$0xff] %v334
      %367 = vst [vmem:[%s186 + $0x50] sm:$0xff] %v335
      %368 = vst [vmem:[%s186 + $0x58] sm:$0xff] %v336
      %369 = vst [vmem:[%s186 + $0x60] sm:$0xff] %v337
      %370 = vst [vmem:[%s186 + $0x68] sm:$0xff] %v338
      %371 = vst [vmem:[%s186 + $0x70] sm:$0xff] %v339
      %372 = vst [vmem:[%s186 + $0x78] sm:$0xff] %v340
      %373 = vst [vmem:[%s186 + $0x80] sm:$0xff] %v341
      %374 = vst [vmem:[%s186 + $0x88] sm:$0xff] %v342
      %375 = vst [vmem:[%s186 + $0x90] sm:$0xff] %v343
      %376 = vst [vmem:[%s186 + $0x98] sm:$0xff] %v344
      %377 = vst [vmem:[%s186 + $0xa0] sm:$0xff] %v345
      %378 = vst [vmem:[%s186 + $0xa8] sm:$0xff] %v346
      %379 = vst [vmem:[%s186 + $0xb0] sm:$0xff] %v347
      %380 = vst [vmem:[%s186 + $0xb8] sm:$0xff] %v348
      %381 = vst [vmem:[%s186 + $0xc0] sm:$0xff] %v349
      %382 = vst [vmem:[%s186 + $0xc8] sm:$0xff] %v350
      %383 = vst [vmem:[%s186 + $0xd0] sm:$0xff] %v351
      %384 = vst [vmem:[%s186 + $0xd8] sm:$0xff] %v352
      %385 = vst [vmem:[%s186 + $0xe0] sm:$0xff] %v353
      %386 = vst [vmem:[%s186 + $0xe8] sm:$0xff] %v354
      %387 = vst [vmem:[%s186 + $0xf0] sm:$0xff] %v355
      %388 = vst [vmem:[%s186 + $0xf8] sm:$0xff] %v356
      %s389 = smul.u32 16, %s18
      %p390 = scmp.lt.s32.totalorder %s17, 1
      %s391 = scalar_select %p390, %s17, 1
      %p392 = scmp.lt.s32.totalorder %s389, 15
      %s393 = scalar_select %p392, %s389, 15
      %s394 = smul.addr %s393, 2
      %s395 = smul.addr %s391, 32
      %s396 = sadd.s32 %s394, %s395
      %s397 = smul.addr %s396, 8
      %s398 = scalar_lea.vmem %s2, %s397
      // Predicated region
      $region29: #{conv_branch_forward.7} parent=27 // pred_check
        %p399 = pneg %p94
      $region30: #{conv_branch_forward.7} parent=27 // pred_check_branch
        %401 = sbr.rel (%p399) target = $region32
      $region31: #{conv_branch_forward.7} parent=27 // pred_region
        %s402 = smul.u32 16, %s18
      $region32: #{conv_branch_forward.7} parent=27 // pred_fallthru
        _
    $region28: #{conv_branch_forward.7} parent=5 // pred_fallthru
      _
    %p403 = scmp.le.s32.totalorder 2, %s8
    // Predicated region
    $region33: #{conv_branch_forward.7} parent=5 // pred_check
      %p404 = pneg %p403
    $region34: #{conv_branch_forward.7} parent=5 // pred_check_branch
      %406 = sbr.rel (%p404) target = $region36
    $region35: #{conv_branch_forward.7} parent=5 // pred_region
      %s407 = ssub.s32 %s8, 2
      // Predicated region
      $region37: #{conv_branch_forward.7} parent=35 // pred_check
        %p408 = pneg %p100
      $region38: #{conv_branch_forward.7} parent=35 // pred_check_branch
        %410 = sbr.rel (%p408) target = $region40
      $region39: #{conv_branch_forward.7} parent=35 // pred_region
        %s411 = smul.u32 16, %s20
        %p412 = scmp.lt.s32.totalorder %s19, 1
        %s413 = scalar_select %p412, %s19, 1
        %p414 = scmp.lt.s32.totalorder %s411, 15
        %s415 = scalar_select %p414, %s411, 15
        %s416 = smul.addr %s415, 2
        %s417 = smul.addr %s413, 32
        %s418 = sadd.s32 %s416, %s417
        %s419 = smul.addr %s418, 8
        %s420 = scalar_lea.vmem %s2, %s419
      $region40: #{conv_branch_forward.7} parent=35 // pred_fallthru
        _
    $region36: #{conv_branch_forward.7} parent=5 // pred_fallthru
      _
  $region6: #{conv_branch_forward.7} parent=0 // loop_footer
    %s12 = sadd.s32 1, %s8
  $region7: #{conv_branch_forward.7} parent=0 // loop_footer_branch
    %7 = sbr.rel target = $region3
  $region8: #{conv_branch_forward.7} parent=0 // loop_exit
    _

// kernel: conv_branch_forward.6
$region0: #{conv_branch_forward.6}
  #allocation0 [shape = 'u32[]', space=smem, size = 0x4, offset = 0x4, fixed_abs, tag = 'smem constant byte address 0x4 - core index']
  #allocation1 [shape = 'u32[144,128]{1,0:T(1,128)}', space=vmem, size = 0x12000, scoped, tag = 'internal scratch']
  #allocation2 [shape = 'bf16[18,18,128]{2,1,0:T(8,128)(2,1)}', space=vmem, size = 0x1b000, scoped, tag = 'scratch operand']
  %s0 = inlined_call_operand.vmem [shape: bf16[2,16,16,128], index: 0, kind: input, shape index: {}]
  %s1 = inlined_call_operand.vmem [shape: bf16[1152,128], index: 1, kind: input, shape index: {}]
  %s2 = inlined_call_operand.vmem [shape: bf16[2,16,16,128], index: 2, kind: output, shape index: {0}]
  %s3 = inlined_call_operand.vmem [shape: f32[2,2,2,128], index: 3, kind: output, shape index: {1}]
  %4 = xla_tuple %s2, %s3
  %s5 = sld [smem:[#allocation0]]
  $region53: #{conv_branch_forward.6} parent=0
    _
  %s7 = ssub.s32 1, %s5
  %s8 = scalar_select 0, %s7, %s5
  loop: start=0, step=1, limit=6
  $region2: #{conv_branch_forward.6} parent=0 // loop_pre_header
    _
  $region3: #{conv_branch_forward.6} parent=0 // loop_header
    %s10 = sphi 0, %s14
    %p11 = scmp.ge.s32.totalorder %s10, 6
    %s17 = sphi 0, %s29
    %s18 = sphi 0, %s25
    %s19 = sphi 0, %s17
    %s20 = sphi 0, %s18
    %s21 = sphi 0, %s19
    %s22 = sphi 0, %s20
    %s32 = sphi 0, %s34
    %s35 = sphi 0, %s32
    %s36 = sphi 0, %s35
    %s52 = sphi 0, %s36
    %s56 = sphi 0, %s56
    %s58 = sphi 0, %s56
    %s59 = sphi 0, %s58
    %s73 = sphi 0, %s59
    %s81 = sphi 0, %s83
    %s84 = sphi 0, %s81
    %s85 = sphi 0, %s84
    %s101 = sphi 0, %s85
    %s109 = sphi 0, %s111
    %s112 = sphi 0, %s109
    %s113 = sphi 0, %s112
    %s129 = sphi 0, %s113
  $region4: #{conv_branch_forward.6} parent=0 // loop_header_branch
    %13 = sbr.rel (%p11) target = $region8
  $region5: #{conv_branch_forward.6} parent=0 // loop_body
    %s15 = ssub.s32 %s10, 1
    %s16 = ssub.s32 %s10, 2
    %s23 = sadd.s32 1, %s18
    %p24 = scmp.ge.s32.totalorder %s23, 2
    %s25 = scalar_select %p24, 0, %s23
    %s26 = sadd.s32 1, %s17
    %s27 = scalar_select %p24, %s26, %s17
    %p28 = scmp.ge.s32.totalorder %s27, 2
    %s29 = scalar_select %p28, 0, %s27
    %s30 = ssub.s32 %s17, %s29
    %p31 = scmp.eq.s32.totalorder %s30, 0
    %s33 = sadd.s32 %s32, 1
    %s34 = scalar_select %p31, %s32, %s33
    %p37 = pneg %p31
    %p38 = scmp.eq.s32.totalorder %s10, 3
    %p39 = por %p37, %p38
    %p40 = scmp.ne.s32.totalorder %s32, %s35
    %p41 = scmp.eq.s32.totalorder %s10, 0
    %p42 = por %p40, %p41
    %p43 = scmp.ne.s32.totalorder %s32, %s35
    %p44 = scmp.eq.s32.totalorder %s15, 3
    %p45 = por %p43, %p44
    %p46 = scmp.ne.s32.totalorder %s35, %s36
    %p47 = scmp.eq.s32.totalorder %s15, 0
    %p48 = por %p46, %p47
    %p49 = scmp.ne.s32.totalorder %s35, %s36
    %p50 = scmp.eq.s32.totalorder %s16, 3
    %p51 = por %p49, %p50
    %p53 = scmp.ne.s32.totalorder %s36, %s52
    %p54 = scmp.eq.s32.totalorder %s16, 0
    %p55 = por %p53, %p54
    %s57 = sadd.s32 %s56, 1
    %p60 = scmp.eq.s32.totalorder %s10, 3
    %p61 = scmp.ne.s32.totalorder %s56, %s58
    %p62 = scmp.eq.s32.totalorder %s10, 0
    %p63 = por %p61, %p62
    %p64 = scmp.ne.s32.totalorder %s56, %s58
    %p65 = scmp.eq.s32.totalorder %s15, 3
    %p66 = por %p64, %p65
    %p67 = scmp.ne.s32.totalorder %s58, %s59
    %p68 = scmp.eq.s32.totalorder %s15, 0
    %p69 = por %p67, %p68
    %p70 = scmp.ne.s32.totalorder %s58, %s59
    %p71 = scmp.eq.s32.totalorder %s16, 3
    %p72 = por %p70, %p71
    %p74 = scmp.ne.s32.totalorder %s59, %s73
    %p75 = scmp.eq.s32.totalorder %s16, 0
    %p76 = por %p74, %p75
    %s77 = ssub.s32 %s17, %s29
    %s78 = ssub.s32 %s18, %s25
    %s79 = sor.u32 %s77, %s78
    %p80 = scmp.eq.s32.totalorder %s79, 0
    %s82 = sadd.s32 %s81, 1
    %s83 = scalar_select %p80, %s81, %s82
    %p86 = pneg %p80
    %p87 = scmp.eq.s32.totalorder %s10, 3
    %p88 = por %p86, %p87
    %p89 = scmp.ne.s32.totalorder %s81, %s84
    %p90 = scmp.eq.s32.totalorder %s10, 0
    %p91 = por %p89, %p90
    %p92 = scmp.ne.s32.totalorder %s81, %s84
    %p93 = scmp.eq.s32.totalorder %s15, 3
    %p94 = por %p92, %p93
    %p95 = scmp.ne.s32.totalorder %s84, %s85
    %p96 = scmp.eq.s32.totalorder %s15, 0
    %p97 = por %p95, %p96
    %p98 = scmp.ne.s32.totalorder %s84, %s85
    %p99 = scmp.eq.s32.totalorder %s16, 3
    %p100 = por %p98, %p99
    %p102 = scmp.ne.s32.totalorder %s85, %s101
    %p103 = scmp.eq.s32.totalorder %s16, 0
    %p104 = por %p102, %p103
    %s105 = ssub.s32 %s17, %s29
    %s106 = ssub.s32 %s18, %s25
    %s107 = sor.u32 %s105, %s106
    %p108 = scmp.eq.s32.totalorder %s107, 0
    %s110 = sadd.s32 %s109, 1
    %s111 = scalar_select %p108, %s109, %s110
    %p114 = pneg %p108
    %p115 = scmp.eq.s32.totalorder %s10, 3
    %p116 = por %p114, %p115
    %p117 = scmp.ne.s32.totalorder %s109, %s112
    %p118 = scmp.eq.s32.totalorder %s10, 0
    %p119 = por %p117, %p118
    %p120 = scmp.ne.s32.totalorder %s109, %s112
    %p121 = scmp.eq.s32.totalorder %s15, 3
    %p122 = por %p120, %p121
    %p123 = scmp.ne.s32.totalorder %s112, %s113
    %p124 = scmp.eq.s32.totalorder %s15, 0
    %p125 = por %p123, %p124
    %p126 = scmp.ne.s32.totalorder %s112, %s113
    %p127 = scmp.eq.s32.totalorder %s16, 3
    %p128 = por %p126, %p127
    %p130 = scmp.ne.s32.totalorder %s113, %s129
    %p131 = scmp.eq.s32.totalorder %s16, 0
    %p132 = por %p130, %p131
    %p133 = scmp.le.s32.totalorder 1, %s10
    %p134 = scmp.lt.s32.totalorder %s10, 5
    %p135 = pnand %p133, %p134
    %p136 = pneg %p135
    // Predicated region
    $region9: #{conv_branch_forward.6} parent=5 // pred_check
      _
    $region10: #{conv_branch_forward.6} parent=5 // pred_check_branch
      %138 = sbr.rel (%p135) target = $region12
    $region11: #{conv_branch_forward.6} parent=5 // pred_region
      %s139 = ssub.s32 %s10, 1
      // Predicated region
      $region13: #{conv_branch_forward.6} parent=11 // pred_check
        %p140 = pneg %p69
      $region14: #{conv_branch_forward.6} parent=11 // pred_check_branch
        %142 = sbr.rel (%p140) target = $region16
      $region15: #{conv_branch_forward.6} parent=11 // pred_region
        _
      $region16: #{conv_branch_forward.6} parent=11 // pred_fallthru
        _
    $region12: #{conv_branch_forward.6} parent=5 // pred_fallthru
      _
    %p143 = scmp.lt.s32.totalorder %s10, 4
    // Predicated region
    $region17: #{conv_branch_forward.6} parent=5 // pred_check
      %p144 = pneg %p143
    $region18: #{conv_branch_forward.6} parent=5 // pred_check_branch
      %146 = sbr.rel (%p144) target = $region20
    $region19: #{conv_branch_forward.6} parent=5 // pred_region
      // Predicated region
      $region21: #{conv_branch_forward.6} parent=19 // pred_check
        %p147 = pneg %p42
      $region22: #{conv_branch_forward.6} parent=19 // pred_check_branch
        %149 = sbr.rel (%p147) target = $region24
      $region23: #{conv_branch_forward.6} parent=19 // pred_region
        %p150 = scmp.lt.s32.totalorder %s17, 1
        %s151 = scalar_select %p150, %s17, 1
        %s152 = smul.addr %s151, 32
        %s153 = smul.addr %s152, 4
        %s154 = scalar_lea.vmem %s0, %s153
      $region24: #{conv_branch_forward.6} parent=19 // pred_fallthru
        _
    $region20: #{conv_branch_forward.6} parent=5 // pred_fallthru
      _
    %p155 = scmp.le.s32.totalorder 1, %s10
    %p156 = scmp.lt.s32.totalorder %s10, 5
    %p157 = pnand %p155, %p156
    %p158 = pneg %p157
    // Predicated region
    $region25: #{conv_branch_forward.6} parent=5 // pred_check
      _
    $region26: #{conv_branch_forward.6} parent=5 // pred_check_branch
      %160 = sbr.rel (%p157) target = $region28
    $region27: #{conv_branch_forward.6} parent=5 // pred_region
      %s161 = ssub.s32 %s10, 1
      %p162 = scmp.lt.s32.totalorder %s19, 1
      %s163 = scalar_select %p162, %s19, 1
      %s164 = smul.addr %s163, 32
      %s165 = smul.addr %s164, 4
      %s166 = scalar_lea.vmem %s0, %s165
      %p167 = pneg %p48
      %p168 = pneg %p45
      %p169 = pneg %p69
      %p170 = pneg %p66
      %p171 = pneg %p97
      %p172 = pneg %p94
      %s173 = smul.u32 8, %s20
      %p174 = scmp.lt.s32.totalorder %s19, 1
      %s175 = scalar_select %p174, %s19, 1
      %p176 = scmp.lt.s32.totalorder %s173, 15
      %s177 = scalar_select %p176, %s173, 15
      %s178 = smul.addr %s177, 2
      %s179 = smul.addr %s175, 32
      %s180 = sadd.s32 %s178, %s179
      %s181 = smul.addr %s180, 4
      %s182 = scalar_lea.vmem %s2, %s181
      %p183 = pneg %p125
      %p184 = pneg %p122
      %p185 = scmp.lt.s32.totalorder %s19, 1
      %s186 = scalar_select %p185, %s19, 1
      %p187 = scmp.lt.s32.totalorder %s20, 1
      %s188 = scalar_select %p187, %s20, 1
      %s189 = smul.addr %s186, 2
      %s190 = sadd.s32 %s188, %s189
      %s191 = smul.addr %s190, 2
      %s192 = scalar_lea.vmem %s3, %s191
      %p193 = scmp.lt.s32.totalorder %s19, 1
      %s194 = scalar_select %p193, %s19, 1
      %s195 = smul.addr %s194, 32
      %s196 = smul.addr %s195, 4
      %s197 = scalar_lea.vmem %s0, %s196
      %s198 = smul.u32 8, %s20
      %p199 = scmp.lt.s32.totalorder %s19, 1
      %s200 = scalar_select %p199, %s19, 1
      %p201 = scmp.lt.s32.totalorder %s198, 15
      %s202 = scalar_select %p201, %s198, 15
      %s203 = smul.addr %s202, 2
      %s204 = smul.addr %s200, 32
      %s205 = sadd.s32 %s203, %s204
      %s206 = smul.addr %s205, 4
      %s207 = scalar_lea.vmem %s2, %s206
      %s208 = smul.u32 8, %s20
      %p209 = scmp.lt.s32.totalorder %s19, 1
      %s210 = scalar_select %p209, %s19, 1
      %p211 = scmp.lt.s32.totalorder %s20, 1
      %s212 = scalar_select %p211, %s20, 1
      %s213 = smul.addr %s210, 2
      %s214 = sadd.s32 %s212, %s213
      %s215 = smul.addr %s214, 2
      %s216 = scalar_lea.vmem %s3, %s215
      %s218 = smul.u32 %s20, 8
      %p219 = scmp.eq.s32.totalorder %s20, 0
      // Predicated region
      $region29: #{conv_branch_forward.6} parent=27 // pred_check
        %p220 = pneg %p219
      $region30: #{conv_branch_forward.6} parent=27 // pred_check_branch
        %222 = sbr.rel (%p220) target = $region32
      $region31: #{conv_branch_forward.6} parent=27 // pred_region
        %223 = vst [vmem:[#allocation2] sm:$0xf] 0
        %224 = vst [vmem:[#allocation2 + $0x4] sm:$0xf] 0
        %225 = vst [vmem:[#allocation2 + $0x8] sm:$0x1] 0
        %226 = vst [vmem:[#allocation2 + $0xc] sm:$0xf] 0
        %227 = vst [vmem:[#allocation2 + $0x10] sm:$0xf] 0
        %228 = vst [vmem:[#allocation2 + $0x14] sm:$0x1] 0
        %229 = vst [vmem:[#allocation2 + $0x18] sm:$0xf] 0
        %230 = vst [vmem:[#allocation2 + $0x1c] sm:$0xf] 0
        %231 = vst [vmem:[#allocation2 + $0x20] sm:$0x1] 0
        %232 = vst [vmem:[#allocation2 + $0x24] sm:$0xf] 0
        %233 = vst [vmem:[#allocation2 + $0x28] sm:$0xf] 0
        %234 = vst [vmem:[#allocation2 + $0x2c] sm:$0x1] 0
        %235 = vst [vmem:[#allocation2 + $0x30] sm:$0xf] 0
        %236 = vst [vmem:[#allocation2 + $0x34] sm:$0xf] 0
        %237 = vst [vmem:[#allocation2 + $0x38] sm:$0x1] 0
        %238 = vst [vmem:[#allocation2 + $0x3c] sm:$0xf] 0
        %239 = vst [vmem:[#allocation2 + $0x40] sm:$0xf] 0
        %240 = vst [vmem:[#allocation2 + $0x44] sm:$0x1] 0
        %241 = vst [vmem:[#allocation2 + $0x48] sm:$0xf] 0
        %242 = vst [vmem:[#allocation2 + $0x4c] sm:$0xf] 0
        %243 = vst [vmem:[#allocation2 + $0x50] sm:$0x1] 0
        %244 = vst [vmem:[#allocation2 + $0x54] sm:$0xf] 0
        %245 = vst [vmem:[#allocation2 + $0x58] sm:$0xf] 0
        %246 = vst [vmem:[#allocation2 + $0x5c] sm:$0x1] 0
        %247 = vst [vmem:[#allocation2 + $0x60] sm:$0xf] 0
        %248 = vst [vmem:[#allocation2 + $0x64] sm:$0xf] 0
        %249 = vst [vmem:[#allocation2 + $0x68] sm:$0x1] 0
        %250 = vst [vmem:[#allocation2 + $0x6c] sm:$0xf] 0
        %251 = vst [vmem:[#allocation2 + $0x70] sm:$0xf] 0
        %252 = vst [vmem:[#allocation2 + $0x74] sm:$0x1] 0
        %253 = vst [vmem:[#allocation2 + $0x78] sm:$0xf] 0
        %254 = vst [vmem:[#allocation2 + $0x7c] sm:$0xf] 0
        %255 = vst [vmem:[#allocation2 + $0x80] sm:$0x1] 0
        %256 = vst [vmem:[#allocation2 + $0x84] sm:$0xf] 0
        %257 = vst [vmem:[#allocation2 + $0x88] sm:$0xf] 0
        %258 = vst [vmem:[#allocation2 + $0x8c] sm:$0x1] 0
        %259 = vst [vmem:[#allocation2 + $0x90] sm:$0xf] 0
        %260 = vst [vmem:[#allocation2 + $0x94] sm:$0xf] 0
        %261 = vst [vmem:[#allocation2 + $0x98] sm:$0x1] 0
        %262 = vst [vmem:[#allocation2 + $0x9c] sm:$0xf] 0
        %263 = vst [vmem:[#allocation2 + $0xa0] sm:$0xf] 0
        %264 = vst [vmem:[#allocation2 + $0xa4] sm:$0x1] 0
        %265 = vst [vmem:[#allocation2 + $0xa8] sm:$0xf] 0
        %266 = vst [vmem:[#allocation2 + $0xac] sm:$0xf] 0
        %267 = vst [vmem:[#allocation2 + $0xb0] sm:$0x1] 0
        %268 = vst [vmem:[#allocation2 + $0xb4] sm:$0xf] 0
        %269 = vst [vmem:[#allocation2 + $0xb8] sm:$0xf] 0
        %270 = vst [vmem:[#allocation2 + $0xbc] sm:$0x1] 0
        %271 = vst [vmem:[#allocation2 + $0xc0] sm:$0xf] 0
        %272 = vst [vmem:[#allocation2 + $0xc4] sm:$0xf] 0
        %273 = vst [vmem:[#allocation2 + $0xc8] sm:$0x1] 0
        %274 = vst [vmem:[#allocation2 + $0xcc] sm:$0xf] 0
        %275 = vst [vmem:[#allocation2 + $0xd0] sm:$0xf] 0
        %276 = vst [vmem:[#allocation2 + $0xd4] sm:$0x1] 0
        %v277 = vld [vmem:[%s197] sm:$0xf]
        %v278 = vld [vmem:[%s197 + $0x4] sm:$0xf]
        %v279 = vld [vmem:[%s197 + $0x8] sm:$0xf]
        %v280 = vld [vmem:[%s197 + $0xc] sm:$0xf]
        %v281 = vld [vmem:[%s197 + $0x10] sm:$0xf]
        %v282 = vld [vmem:[%s197 + $0x14] sm:$0xf]
        %v283 = vld [vmem:[%s197 + $0x18] sm:$0xf]
        %v284 = vld [vmem:[%s197 + $0x1c] sm:$0xf]
        %v285 = vld [vmem:[%s197 + $0x20] sm:$0xf]
        %v286 = vld [vmem:[%s197 + $0x24] sm:$0xf]
        %v287 = vld [vmem:[%s197 + $0x28] sm:$0xf]
        %v288 = vld [vmem:[%s197 + $0x2c] sm:$0xf]
        %v289 = vld [vmem:[%s197 + $0x30] sm:$0xf]
        %v290 = vld [vmem:[%s197 + $0x34] sm:$0xf]
        %v291 = vld [vmem:[%s197 + $0x38] sm:$0xf]
        %v292 = vld [vmem:[%s197 + $0x3c] sm:$0xf]
        %v293 = vld [vmem:[%s197 + $0x40] sm:$0xf]
        %v294 = vld [vmem:[%s197 + $0x44] sm:$0xf]
        %v295 = vld [vmem:[%s197 + $0x48] sm:$0xf]
        %v296 = vld [vmem:[%s197 + $0x4c] sm:$0xf]
        %v297 = vld [vmem:[%s197 + $0x50] sm:$0xf]
        %v298 = vld [vmem:[%s197 + $0x54] sm:$0xf]
        %v299 = vld [vmem:[%s197 + $0x58] sm:$0xf]
        %v300 = vld [vmem:[%s197 + $0x5c] sm:$0xf]
        %v301 = vld [vmem:[%s197 + $0x60] sm:$0xf]
        %v302 = vld [vmem:[%s197 + $0x64] sm:$0xf]
        %v303 = vld [vmem:[%s197 + $0x68] sm:$0xf]
        %v304 = vld [vmem:[%s197 + $0x6c] sm:$0xf]
        %v305 = vld [vmem:[%s197 + $0x70] sm:$0xf]
        %v306 = vld [vmem:[%s197 + $0x74] sm:$0xf]
        %v307 = vld [vmem:[%s197 + $0x78] sm:$0xf]
        %v308 = vld [vmem:[%s197 + $0x7c] sm:$0xf]
        %vm309 = vsmask.f32 256
        %vm310 = vsmask.f32 4368
        %vm311 = vmor %vm309, %vm310
        %v313 = vshrl.u32 %v277, 16
        %v315 = vrot.slane %v313, 7
        %v316 = vshll.u32 %v277, 16
        %v318 = vor.u32 %v315, %v316
        %v319 = vrot.slane %v315, 4
        %v321 = vshrl.u32 %v278, 16
        %v323 = vrot.slane %v321, 7
        %v324 = vshll.u32 %v278, 16
        %v326 = vor.u32 %v323, %v324
        %v327 = vsel %vm311, %v319, %v326
        %v328 = vrot.slane %v323, 4
        %v330 = vshrl.u32 %v279, 16
        %v332 = vrot.slane %v330, 7
        %v333 = vshll.u32 %v279, 16
        %v335 = vor.u32 %v332, %v333
        %v336 = vrot.slane %v332, 4
        %v338 = vshrl.u32 %v280, 16
        %v340 = vrot.slane %v338, 7
        %v341 = vshll.u32 %v280, 16
        %v343 = vor.u32 %v340, %v341
        %v344 = vsel %vm311, %v336, %v343
        %v345 = vrot.slane %v340, 4
        %v347 = vshrl.u32 %v281, 16
        %v349 = vrot.slane %v347, 7
        %v350 = vshll.u32 %v281, 16
        %v352 = vor.u32 %v349, %v350
        %v353 = vrot.slane %v349, 4
        %v355 = vshrl.u32 %v282, 16
        %v357 = vrot.slane %v355, 7
        %v358 = vshll.u32 %v282, 16
        %v360 = vor.u32 %v357, %v358
        %v361 = vsel %vm311, %v353, %v360
        %v362 = vrot.slane %v357, 4
        %v364 = vshrl.u32 %v283, 16
        %v366 = vrot.slane %v364, 7
        %v367 = vshll.u32 %v283, 16
        %v369 = vor.u32 %v366, %v367
        %v370 = vrot.slane %v366, 4
        %v372 = vshrl.u32 %v284, 16
        %v374 = vrot.slane %v372, 7
        %v375 = vshll.u32 %v284, 16
        %v377 = vor.u32 %v374, %v375
        %v378 = vsel %vm311, %v370, %v377
        %v379 = vrot.slane %v374, 4
        %v381 = vshrl.u32 %v285, 16
        %v383 = vrot.slane %v381, 7
        %v384 = vshll.u32 %v285, 16
        %v386 = vor.u32 %v383, %v384
        %v387 = vrot.slane %v383, 4
        %v389 = vshrl.u32 %v286, 16
        %v391 = vrot.slane %v389, 7
        %v392 = vshll.u32 %v286, 16
        %v394 = vor.u32 %v391, %v392
        %v395 = vsel %vm311, %v387, %v394
        %v396 = vrot.slane %v391, 4
        %v398 = vshrl.u32 %v287, 16
        %v400 = vrot.slane %v398, 7
        %v401 = vshll.u32 %v287, 16
        %v403 = vor.u32 %v400, %v401
        %v404 = vrot.slane %v400, 4
        %v406 = vshrl.u32 %v288, 16
        %v408 = vrot.slane %v406, 7
        %v409 = vshll.u32 %v288, 16
        %v411 = vor.u32 %v408, %v409
        %v412 = vsel %vm311, %v404, %v411
        %v413 = vrot.slane %v408, 4
        %v415 = vshrl.u32 %v289, 16
        %v417 = vrot.slane %v415, 7
        %v418 = vshll.u32 %v289, 16
        %v420 = vor.u32 %v417, %v418
        %v421 = vrot.slane %v417, 4
        %v423 = vshrl.u32 %v290, 16
        %v425 = vrot.slane %v423, 7
        %v426 = vshll.u32 %v290, 16
        %v428 = vor.u32 %v425, %v426
        %v429 = vsel %vm311, %v421, %v428
        %v430 = vrot.slane %v425, 4
        %v432 = vshrl.u32 %v291, 16
        %v434 = vrot.slane %v432, 7
        %v435 = vshll.u32 %v291, 16
        %v437 = vor.u32 %v434, %v435
        %v438 = vrot.slane %v434, 4
        %v440 = vshrl.u32 %v292, 16
        %v442 = vrot.slane %v440, 7
        %v443 = vshll.u32 %v292, 16
        %v445 = vor.u32 %v442, %v443
        %v446 = vsel %vm311, %v438, %v445
        %v447 = vrot.slane %v442, 4
        %v449 = vshrl.u32 %v293, 16
        %v451 = vrot.slane %v449, 7
        %v452 = vshll.u32 %v293, 16
        %v454 = vor.u32 %v451, %v452
        %v455 = vrot.slane %v451, 4
        %v457 = vshrl.u32 %v294, 16
        %v459 = vrot.slane %v457, 7
        %v460 = vshll.u32 %v294, 16
        %v462 = vor.u32 %v459, %v460
        %v463 = vsel %vm311, %v455, %v462
        %v464 = vrot.slane %v459, 4
        %v466 = vshrl.u32 %v295, 16
        %v468 = vrot.slane %v466, 7
        %v469 = vshll.u32 %v295, 16
        %v471 = vor.u32 %v468, %v469
        %v472 = vrot.slane %v468, 4
        %v474 = vshrl.u32 %v296, 16
        %v476 = vrot.slane %v474, 7
        %v477 = vshll.u32 %v296, 16
        %v479 = vor.u32 %v476, %v477
        %v480 = vsel %vm311, %v472, %v479
        %v481 = vrot.slane %v476, 4
        %v483 = vshrl.u32 %v297, 16
        %v485 = vrot.slane %v483, 7
        %v486 = vshll.u32 %v297, 16
        %v488 = vor.u32 %v485, %v486
        %v489 = vrot.slane %v485, 4
        %v491 = vshrl.u32 %v298, 16
        %v493 = vrot.slane %v491, 7
        %v494 = vshll.u32 %v298, 16
        %v496 = vor.u32 %v493, %v494
        %v497 = vsel %vm311, %v489, %v496
        %v498 = vrot.slane %v493, 4
        %v500 = vshrl.u32 %v299, 16
        %v502 = vrot.slane %v500, 7
        %v503 = vshll.u32 %v299, 16
        %v505 = vor.u32 %v502, %v503
        %v506 = vrot.slane %v502, 4
        %v508 = vshrl.u32 %v300, 16
        %v510 = vrot.slane %v508, 7
        %v511 = vshll.u32 %v300, 16
        %v513 = vor.u32 %v510, %v511
        %v514 = vsel %vm311, %v506, %v513
        %v515 = vrot.slane %v510, 4
        %v517 = vshrl.u32 %v301, 16
        %v519 = vrot.slane %v517, 7
        %v520 = vshll.u32 %v301, 16
        %v522 = vor.u32 %v519, %v520
        %v523 = vrot.slane %v519, 4
        %v525 = vshrl.u32 %v302, 16
        %v527 = vrot.slane %v525, 7
        %v528 = vshll.u32 %v302, 16
        %v530 = vor.u32 %v527, %v528
        %v531 = vsel %vm311, %v523, %v530
        %v532 = vrot.slane %v527, 4
        %v534 = vshrl.u32 %v303, 16
        %v536 = vrot.slane %v534, 7
        %v537 = vshll.u32 %v303, 16
        %v539 = vor.u32 %v536, %v537
        %v540 = vrot.slane %v536, 4
        %v542 = vshrl.u32 %v304, 16
        %v544 = vrot.slane %v542, 7
        %v545 = vshll.u32 %v304, 16
        %v547 = vor.u32 %v544, %v545
        %v548 = vsel %vm311, %v540, %v547
        %v549 = vrot.slane %v544, 4
        %v551 = vshrl.u32 %v305, 16
        %v553 = vrot.slane %v551, 7
        %v554 = vshll.u32 %v305, 16
        %v556 = vor.u32 %v553, %v554
        %v557 = vrot.slane %v553, 4
        %v559 = vshrl.u32 %v306, 16
        %v561 = vrot.slane %v559, 7
        %v562 = vshll.u32 %v306, 16
        %v564 = vor.u32 %v561, %v562
        %v565 = vsel %vm311, %v557, %v564
        %v566 = vrot.slane %v561, 4
        %v568 = vshrl.u32 %v307, 16
        %v570 = vrot.slane %v568, 7
        %v571 = vshll.u32 %v307, 16
        %v573 = vor.u32 %v570, %v571
        %v574 = vrot.slane %v570, 4
        %v576 = vshrl.u32 %v308, 16
        %v578 = vrot.slane %v576, 7
        %v579 = vshll.u32 %v308, 16
        %v581 = vor.u32 %v578, %v579
        %v582 = vsel %vm311, %v574, %v581
        %v583 = vrot.slane %v578, 4
        %s632 = scalar_lea.vmem [#allocation2], 12
        %vm633 = vcmask 1043456
        %vm634 = vsmask.f32 7938
        %vm635 = vmand %vm633, %vm634
        %v636 = vld [vmem:[%s632] sm:$0xf]
        %v637 = vsel %vm635, %v318, %v636
        %638 = vst [vmem:[%s632] sm:$0xf] %v637
        %639 = vst [vmem:[%s632 + $0x4] sm:$0xf] %v327
        %vm640 = vcmask 1040384
        %vm641 = vmand %vm640, %vm309
        %v642 = vld [vmem:[%s632 + $0x8] sm:$0x1]
        %v643 = vsel %vm641, %v328, %v642
        %644 = vst [vmem:[%s632 + $0x8] sm:$0x1] %v643
        %v645 = vld [vmem:[%s632 + $0xc] sm:$0xf]
        %v646 = vsel %vm635, %v335, %v645
        %647 = vst [vmem:[%s632 + $0xc] sm:$0xf] %v646
        %648 = vst [vmem:[%s632 + $0x10] sm:$0xf] %v344
        %v649 = vld [vmem:[%s632 + $0x14] sm:$0x1]
        %v650 = vsel %vm641, %v345, %v649
        %651 = vst [vmem:[%s632 + $0x14] sm:$0x1] %v650
        %v652 = vld [vmem:[%s632 + $0x18] sm:$0xf]
        %v653 = vsel %vm635, %v352, %v652
        %654 = vst [vmem:[%s632 + $0x18] sm:$0xf] %v653
        %655 = vst [vmem:[%s632 + $0x1c] sm:$0xf] %v361
        %v656 = vld [vmem:[%s632 + $0x20] sm:$0x1]
        %v657 = vsel %vm641, %v362, %v656
        %658 = vst [vmem:[%s632 + $0x20] sm:$0x1] %v657
        %v659 = vld [vmem:[%s632 + $0x24] sm:$0xf]
        %v660 = vsel %vm635, %v369, %v659
        %661 = vst [vmem:[%s632 + $0x24] sm:$0xf] %v660
        %662 = vst [vmem:[%s632 + $0x28] sm:$0xf] %v378
        %v663 = vld [vmem:[%s632 + $0x2c] sm:$0x1]
        %v664 = vsel %vm641, %v379, %v663
        %665 = vst [vmem:[%s632 + $0x2c] sm:$0x1] %v664
        %v666 = vld [vmem:[%s632 + $0x30] sm:$0xf]
        %v667 = vsel %vm635, %v386, %v666
        %668 = vst [vmem:[%s632 + $0x30] sm:$0xf] %v667
        %669 = vst [vmem:[%s632 + $0x34] sm:$0xf] %v395
        %v670 = vld [vmem:[%s632 + $0x38] sm:$0x1]
        %v671 = vsel %vm641, %v396, %v670
        %672 = vst [vmem:[%s632 + $0x38] sm:$0x1] %v671
        %v673 = vld [vmem:[%s632 + $0x3c] sm:$0xf]
        %v674 = vsel %vm635, %v403, %v673
        %675 = vst [vmem:[%s632 + $0x3c] sm:$0xf] %v674
        %676 = vst [vmem:[%s632 + $0x40] sm:$0xf] %v412
        %v677 = vld [vmem:[%s632 + $0x44] sm:$0x1]
        %v678 = vsel %vm641, %v413, %v677
        %679 = vst [vmem:[%s632 + $0x44] sm:$0x1] %v678
        %v680 = vld [vmem:[%s632 + $0x48] sm:$0xf]
        %v681 = vsel %vm635, %v420, %v680
        %682 = vst [vmem:[%s632 + $0x48] sm:$0xf] %v681
        %683 = vst [vmem:[%s632 + $0x4c] sm:$0xf] %v429
        %v684 = vld [vmem:[%s632 + $0x50] sm:$0x1]
        %v685 = vsel %vm641, %v430, %v684
        %686 = vst [vmem:[%s632 + $0x50] sm:$0x1] %v685
        %v687 = vld [vmem:[%s632 + $0x54] sm:$0xf]
        %v688 = vsel %vm635, %v437, %v687
        %689 = vst [vmem:[%s632 + $0x54] sm:$0xf] %v688
        %690 = vst [vmem:[%s632 + $0x58] sm:$0xf] %v446
        %v691 = vld [vmem:[%s632 + $0x5c] sm:$0x1]
        %v692 = vsel %vm641, %v447, %v691
        %693 = vst [vmem:[%s632 + $0x5c] sm:$0x1] %v692
        %v694 = vld [vmem:[%s632 + $0x60] sm:$0xf]
        %v695 = vsel %vm635, %v454, %v694
        %696 = vst [vmem:[%s632 + $0x60] sm:$0xf] %v695
        %697 = vst [vmem:[%s632 + $0x64] sm:$0xf] %v463
        %v698 = vld [vmem:[%s632 + $0x68] sm:$0x1]
        %v699 = vsel %vm641, %v464, %v698
        %700 = vst [vmem:[%s632 + $0x68] sm:$0x1] %v699
        %v701 = vld [vmem:[%s632 + $0x6c] sm:$0xf]
        %v702 = vsel %vm635, %v471, %v701
        %703 = vst [vmem:[%s632 + $0x6c] sm:$0xf] %v702
        %704 = vst [vmem:[%s632 + $0x70] sm:$0xf] %v480
        %v705 = vld [vmem:[%s632 + $0x74] sm:$0x1]
        %v706 = vsel %vm641, %v481, %v705
        %707 = vst [vmem:[%s632 + $0x74] sm:$0x1] %v706
        %v708 = vld [vmem:[%s632 + $0x78] sm:$0xf]
        %v709 = vsel %vm635, %v488, %v708
        %710 = vst [vmem:[%s632 + $0x78] sm:$0xf] %v709
        %711 = vst [vmem:[%s632 + $0x7c] sm:$0xf] %v497
        %v712 = vld [vmem:[%s632 + $0x80] sm:$0x1]
        %v713 = vsel %vm641, %v498, %v712
        %714 = vst [vmem:[%s632 + $0x80] sm:$0x1] %v713
        %v715 = vld [vmem:[%s632 + $0x84] sm:$0xf]
        %v716 = vsel %vm635, %v505, %v715
        %717 = vst [vmem:[%s632 + $0x84] sm:$0xf] %v716
        %718 = vst [vmem:[%s632 + $0x88] sm:$0xf] %v514
        %v719 = vld [vmem:[%s632 + $0x8c] sm:$0x1]
        %v720 = vsel %vm641, %v515, %v719
        %721 = vst [vmem:[%s632 + $0x8c] sm:$0x1] %v720
        %v722 = vld [vmem:[%s632 + $0x90] sm:$0xf]
        %v723 = vsel %vm635, %v522, %v722
        %724 = vst [vmem:[%s632 + $0x90] sm:$0xf] %v723
        %725 = vst [vmem:[%s632 + $0x94] sm:$0xf] %v531
        %v726 = vld [vmem:[%s632 + $0x98] sm:$0x1]
        %v727 = vsel %vm641, %v532, %v726
        %728 = vst [vmem:[%s632 + $0x98] sm:$0x1] %v727
        %v729 = vld [vmem:[%s632 + $0x9c] sm:$0xf]
        %v730 = vsel %vm635, %v539, %v729
        %731 = vst [vmem:[%s632 + $0x9c] sm:$0xf] %v730
        %732 = vst [vmem:[%s632 + $0xa0] sm:$0xf] %v548
        %v733 = vld [vmem:[%s632 + $0xa4] sm:$0x1]
        %v734 = vsel %vm641, %v549, %v733
        %735 = vst [vmem:[%s632 + $0xa4] sm:$0x1] %v734
        %v736 = vld [vmem:[%s632 + $0xa8] sm:$0xf]
        %v737 = vsel %vm635, %v556, %v736
        %738 = vst [vmem:[%s632 + $0xa8] sm:$0xf] %v737
        %739 = vst [vmem:[%s632 + $0xac] sm:$0xf] %v565
        %v740 = vld [vmem:[%s632 + $0xb0] sm:$0x1]
        %v741 = vsel %vm641, %v566, %v740
        %742 = vst [vmem:[%s632 + $0xb0] sm:$0x1] %v741
        %v743 = vld [vmem:[%s632 + $0xb4] sm:$0xf]
        %v744 = vsel %vm635, %v573, %v743
        %745 = vst [vmem:[%s632 + $0xb4] sm:$0xf] %v744
        %746 = vst [vmem:[%s632 + $0xb8] sm:$0xf] %v582
        %v747 = vld [vmem:[%s632 + $0xbc] sm:$0x1]
        %v748 = vsel %vm641, %v583, %v747
        %749 = vst [vmem:[%s632 + $0xbc] sm:$0x1] %v748
      $region32: #{conv_branch_forward.6} parent=27 // pred_fallthru
        _
      %s750 = smul.u32 %s218, 3
      %s751 = smul.addr %s750, 4
      %s752 = scalar_lea.vmem [#allocation2], %s751
      %v753 = vld [vmem:[%s752] sm:$0xf]
      %v754 = vld [vmem:[%s752 + $0x4] sm:$0xf]
      %v755 = vld [vmem:[%s752 + $0xc] sm:$0xf]
      %v756 = vld [vmem:[%s752 + $0x10] sm:$0xf]
      %v757 = vld [vmem:[%s752 + $0x18] sm:$0xf]
      %v758 = vld [vmem:[%s752 + $0x1c] sm:$0xf]
      %v759 = vld [vmem:[%s752 + $0x24] sm:$0xf]
      %v760 = vld [vmem:[%s752 + $0x28] sm:$0xf]
      %v761 = vld [vmem:[%s752 + $0x30] sm:$0xf]
      %v762 = vld [vmem:[%s752 + $0x34] sm:$0xf]
      %v763 = vld [vmem:[%s752 + $0x3c] sm:$0xf]
      %v764 = vld [vmem:[%s752 + $0x40] sm:$0xf]
      %v765 = vld [vmem:[%s752 + $0x48] sm:$0xf]
      %v766 = vld [vmem:[%s752 + $0x4c] sm:$0xf]
      %v767 = vld [vmem:[%s752 + $0x54] sm:$0xf]
      %v768 = vld [vmem:[%s752 + $0x58] sm:$0xf]
      %v769 = vld [vmem:[%s752 + $0x8] sm:$0x1]
      %v770 = vld [vmem:[%s752 + $0x14] sm:$0x1]
      %v771 = vld [vmem:[%s752 + $0x20] sm:$0x1]
      %v772 = vld [vmem:[%s752 + $0x2c] sm:$0x1]
      %v773 = vld [vmem:[%s752 + $0x38] sm:$0x1]
      %v774 = vld [vmem:[%s752 + $0x44] sm:$0x1]
      %v775 = vld [vmem:[%s752 + $0x50] sm:$0x1]
      %v776 = vld [vmem:[%s752 + $0x5c] sm:$0x1]
      %vm777 = vsmask.f32 3328
      %vm778 = vsmask.f32 7440
      %vm779 = vmor %vm777, %vm778
      %v781 = vshrl.u32 %v753, 16
      %v783 = vrot.slane %v781, 4
      %v784 = vshll.u32 %v753, 16
      %v786 = vrot.slane %v784, 5
      %v787 = vor.u32 %v783, %v786
      %v788 = vrot.slane %v787, 4
      %v790 = vshll.u32 %v754, 16
      %v792 = vrot.slane %v790, 5
      %v793 = vsel %vm779, %v788, %v792
      %v794 = vshrl.u32 %v754, 16
      %v796 = vrot.slane %v794, 4
      %v797 = vor.u32 %v796, %v792
      %v798 = vrot.slane %v797, 4
      %v800 = vshll.u32 %v769, 16
      %v802 = vrot.slane %v800, 5
      %v803 = vsel %vm779, %v798, %v802
      %v805 = vshrl.u32 %v755, 16
      %v807 = vrot.slane %v805, 4
      %v808 = vshll.u32 %v755, 16
      %v810 = vrot.slane %v808, 5
      %v811 = vor.u32 %v807, %v810
      %v812 = vrot.slane %v811, 4
      %v814 = vshll.u32 %v756, 16
      %v816 = vrot.slane %v814, 5
      %v817 = vsel %vm779, %v812, %v816
      %v818 = vshrl.u32 %v756, 16
      %v820 = vrot.slane %v818, 4
      %v821 = vor.u32 %v820, %v816
      %v822 = vrot.slane %v821, 4
      %v824 = vshll.u32 %v770, 16
      %v826 = vrot.slane %v824, 5
      %v827 = vsel %vm779, %v822, %v826
      %v829 = vshrl.u32 %v757, 16
      %v831 = vrot.slane %v829, 4
      %v832 = vshll.u32 %v757, 16
      %v834 = vrot.slane %v832, 5
      %v835 = vor.u32 %v831, %v834
      %v836 = vrot.slane %v835, 4
      %v838 = vshll.u32 %v758, 16
      %v840 = vrot.slane %v838, 5
      %v841 = vsel %vm779, %v836, %v840
      %v842 = vshrl.u32 %v758, 16
      %v844 = vrot.slane %v842, 4
      %v845 = vor.u32 %v844, %v840
      %v846 = vrot.slane %v845, 4
      %v848 = vshll.u32 %v771, 16
      %v850 = vrot.slane %v848, 5
      %v851 = vsel %vm779, %v846, %v850
      %v853 = vshrl.u32 %v759, 16
      %v855 = vrot.slane %v853, 4
      %v856 = vshll.u32 %v759, 16
      %v858 = vrot.slane %v856, 5
      %v859 = vor.u32 %v855, %v858
      %v860 = vrot.slane %v859, 4
      %v862 = vshll.u32 %v760, 16
      %v864 = vrot.slane %v862, 5
      %v865 = vsel %vm779, %v860, %v864
      %v866 = vshrl.u32 %v760, 16
      %v868 = vrot.slane %v866, 4
      %v869 = vor.u32 %v868, %v864
      %v870 = vrot.slane %v869, 4
      %v872 = vshll.u32 %v772, 16
      %v874 = vrot.slane %v872, 5
      %v875 = vsel %vm779, %v870, %v874
      %v877 = vshrl.u32 %v761, 16
      %v879 = vrot.slane %v877, 4
      %v880 = vshll.u32 %v761, 16
      %v882 = vrot.slane %v880, 5
      %v883 = vor.u32 %v879, %v882
      %v884 = vrot.slane %v883, 4
      %v886 = vshll.u32 %v762, 16
      %v888 = vrot.slane %v886, 5
      %v889 = vsel %vm779, %v884, %v888
      %v890 = vshrl.u32 %v762, 16
      %v892 = vrot.slane %v890, 4
      %v893 = vor.u32 %v892, %v888
      %v894 = vrot.slane %v893, 4
      %v896 = vshll.u32 %v773, 16
      %v898 = vrot.slane %v896, 5
      %v899 = vsel %vm779, %v894, %v898
      %v901 = vshrl.u32 %v763, 16
      %v903 = vrot.slane %v901, 4
      %v904 = vshll.u32 %v763, 16
      %v906 = vrot.slane %v904, 5
      %v907 = vor.u32 %v903, %v906
      %v908 = vrot.slane %v907, 4
      %v910 = vshll.u32 %v764, 16
      %v912 = vrot.slane %v910, 5
      %v913 = vsel %vm779, %v908, %v912
      %v914 = vshrl.u32 %v764, 16
      %v916 = vrot.slane %v914, 4
      %v917 = vor.u32 %v916, %v912
      %v918 = vrot.slane %v917, 4
      %v920 = vshll.u32 %v774, 16
      %v922 = vrot.slane %v920, 5
      %v923 = vsel %vm779, %v918, %v922
      %v925 = vshrl.u32 %v765, 16
      %v927 = vrot.slane %v925, 4
      %v928 = vshll.u32 %v765, 16
      %v930 = vrot.slane %v928, 5
      %v931 = vor.u32 %v927, %v930
      %v932 = vrot.slane %v931, 4
      %v934 = vshll.u32 %v766, 16
      %v936 = vrot.slane %v934, 5
      %v937 = vsel %vm779, %v932, %v936
      %v938 = vshrl.u32 %v766, 16
      %v940 = vrot.slane %v938, 4
      %v941 = vor.u32 %v940, %v936
      %v942 = vrot.slane %v941, 4
      %v944 = vshll.u32 %v775, 16
      %v946 = vrot.slane %v944, 5
      %v947 = vsel %vm779, %v942, %v946
      %v949 = vshrl.u32 %v767, 16
      %v951 = vrot.slane %v949, 4
      %v952 = vshll.u32 %v767, 16
      %v954 = vrot.slane %v952, 5
      %v955 = vor.u32 %v951, %v954
      %v956 = vrot.slane %v955, 4
      %v958 = vshll.u32 %v768, 16
      %v960 = vrot.slane %v958, 5
      %v961 = vsel %vm779, %v956, %v960
      %v962 = vshrl.u32 %v768, 16
      %v964 = vrot.slane %v962, 4
      %v965 = vor.u32 %v964, %v960
      %v966 = vrot.slane %v965, 4
      %v968 = vshll.u32 %v776, 16
      %v970 = vrot.slane %v968, 5
      %v971 = vsel %vm779, %v966, %v970
      %v972 = vld [vmem:[%s752] sm:$0xe]
      %v973 = vld [vmem:[%s752 + $0xc] sm:$0xe]
      %v974 = vld [vmem:[%s752 + $0x18] sm:$0xe]
      %v975 = vld [vmem:[%s752 + $0x24] sm:$0xe]
      %v976 = vld [vmem:[%s752 + $0x30] sm:$0xe]
      %v977 = vld [vmem:[%s752 + $0x3c] sm:$0xe]
      %v978 = vld [vmem:[%s752 + $0x48] sm:$0xe]
      %v979 = vld [vmem:[%s752 + $0x54] sm:$0xe]
      %vm1004 = vcmask 1042432
      %vm1005 = vcmask 1046532
      %vm1006 = vmor %vm1004, %vm1005
      %v1007 = vrot.slane %v972, 5
      %v1008 = vrot.slane %v1007, 4
      %v1009 = vrot.slane %v754, 5
      %v1010 = vsel %vm1006, %v1008, %v1009
      %v1011 = vrot.slane %v1009, 4
      %v1012 = vrot.slane %v769, 5
      %v1013 = vsel %vm1006, %v1011, %v1012
      %v1014 = vrot.slane %v973, 5
      %v1015 = vrot.slane %v1014, 4
      %v1016 = vrot.slane %v756, 5
      %v1017 = vsel %vm1006, %v1015, %v1016
      %v1018 = vrot.slane %v1016, 4
      %v1019 = vrot.slane %v770, 5
      %v1020 = vsel %vm1006, %v1018, %v1019
      %v1021 = vrot.slane %v974, 5
      %v1022 = vrot.slane %v1021, 4
      %v1023 = vrot.slane %v758, 5
      %v1024 = vsel %vm1006, %v1022, %v1023
      %v1025 = vrot.slane %v1023, 4
      %v1026 = vrot.slane %v771, 5
      %v1027 = vsel %vm1006, %v1025, %v1026
      %v1028 = vrot.slane %v975, 5
      %v1029 = vrot.slane %v1028, 4
      %v1030 = vrot.slane %v760, 5
      %v1031 = vsel %vm1006, %v1029, %v1030
      %v1032 = vrot.slane %v1030, 4
      %v1033 = vrot.slane %v772, 5
      %v1034 = vsel %vm1006, %v1032, %v1033
      %v1035 = vrot.slane %v976, 5
      %v1036 = vrot.slane %v1035, 4
      %v1037 = vrot.slane %v762, 5
      %v1038 = vsel %vm1006, %v1036, %v1037
      %v1039 = vrot.slane %v1037, 4
      %v1040 = vrot.slane %v773, 5
      %v1041 = vsel %vm1006, %v1039, %v1040
      %v1042 = vrot.slane %v977, 5
      %v1043 = vrot.slane %v1042, 4
      %v1044 = vrot.slane %v764, 5
      %v1045 = vsel %vm1006, %v1043, %v1044
      %v1046 = vrot.slane %v1044, 4
      %v1047 = vrot.slane %v774, 5
      %v1048 = vsel %vm1006, %v1046, %v1047
      %v1049 = vrot.slane %v978, 5
      %v1050 = vrot.slane %v1049, 4
      %v1051 = vrot.slane %v766, 5
      %v1052 = vsel %vm1006, %v1050, %v1051
      %v1053 = vrot.slane %v1051, 4
      %v1054 = vrot.slane %v775, 5
      %v1055 = vsel %vm1006, %v1053, %v1054
      %v1056 = vrot.slane %v979, 5
      %v1057 = vrot.slane %v1056, 4
      %v1058 = vrot.slane %v768, 5
      %v1059 = vsel %vm1006, %v1057, %v1058
      %v1060 = vrot.slane %v1058, 4
      %v1061 = vrot.slane %v776, 5
      %v1062 = vsel %vm1006, %v1060, %v1061
      %s1063 = sadd.s32 %s218, 1
      %s1064 = smul.u32 %s1063, 3
      %s1065 = smul.addr %s1064, 4
      %s1066 = scalar_lea.vmem [#allocation2], %s1065
      %v1067 = vld [vmem:[%s1066] sm:$0xf]
      %v1068 = vld [vmem:[%s1066 + $0x4] sm:$0xf]
      %v1069 = vld [vmem:[%s1066 + $0xc] sm:$0xf]
      %v1070 = vld [vmem:[%s1066 + $0x10] sm:$0xf]
      %v1071 = vld [vmem:[%s1066 + $0x18] sm:$0xf]
      %v1072 = vld [vmem:[%s1066 + $0x1c] sm:$0xf]
      %v1073 = vld [vmem:[%s1066 + $0x24] sm:$0xf]
      %v1074 = vld [vmem:[%s1066 + $0x28] sm:$0xf]
      %v1075 = vld [vmem:[%s1066 + $0x30] sm:$0xf]
      %v1076 = vld [vmem:[%s1066 + $0x34] sm:$0xf]
      %v1077 = vld [vmem:[%s1066 + $0x3c] sm:$0xf]
      %v1078 = vld [vmem:[%s1066 + $0x40] sm:$0xf]
      %v1079 = vld [vmem:[%s1066 + $0x48] sm:$0xf]
      %v1080 = vld [vmem:[%s1066 + $0x4c] sm:$0xf]
      %v1081 = vld [vmem:[%s1066 + $0x54] sm:$0xf]
      %v1082 = vld [vmem:[%s1066 + $0x58] sm:$0xf]
      %v1083 = vld [vmem:[%s1066 + $0x8] sm:$0x1]
      %v1084 = vld [vmem:[%s1066 + $0x14] sm:$0x1]
      %v1085 = vld [vmem:[%s1066 + $0x20] sm:$0x1]
      %v1086 = vld [vmem:[%s1066 + $0x2c] sm:$0x1]
      %v1087 = vld [vmem:[%s1066 + $0x38] sm:$0x1]
      %v1088 = vld [vmem:[%s1066 + $0x44] sm:$0x1]
      %v1089 = vld [vmem:[%s1066 + $0x50] sm:$0x1]
      %v1090 = vld [vmem:[%s1066 + $0x5c] sm:$0x1]
      %v1092 = vshrl.u32 %v1067, 16
      %v1094 = vrot.slane %v1092, 4
      %v1095 = vshll.u32 %v1067, 16
      %v1097 = vrot.slane %v1095, 5
      %v1098 = vor.u32 %v1094, %v1097
      %v1099 = vrot.slane %v1098, 4
      %v1101 = vshll.u32 %v1068, 16
      %v1103 = vrot.slane %v1101, 5
      %v1104 = vsel %vm779, %v1099, %v1103
      %v1105 = vshrl.u32 %v1068, 16
      %v1107 = vrot.slane %v1105, 4
      %v1108 = vor.u32 %v1107, %v1103
      %v1109 = vrot.slane %v1108, 4
      %v1111 = vshll.u32 %v1083, 16
      %v1113 = vrot.slane %v1111, 5
      %v1114 = vsel %vm779, %v1109, %v1113
      %v1116 = vshrl.u32 %v1069, 16
      %v1118 = vrot.slane %v1116, 4
      %v1119 = vshll.u32 %v1069, 16
      %v1121 = vrot.slane %v1119, 5
      %v1122 = vor.u32 %v1118, %v1121
      %v1123 = vrot.slane %v1122, 4
      %v1125 = vshll.u32 %v1070, 16
      %v1127 = vrot.slane %v1125, 5
      %v1128 = vsel %vm779, %v1123, %v1127
      %v1129 = vshrl.u32 %v1070, 16
      %v1131 = vrot.slane %v1129, 4
      %v1132 = vor.u32 %v1131, %v1127
      %v1133 = vrot.slane %v1132, 4
      %v1135 = vshll.u32 %v1084, 16
      %v1137 = vrot.slane %v1135, 5
      %v1138 = vsel %vm779, %v1133, %v1137
      %v1140 = vshrl.u32 %v1071, 16
      %v1142 = vrot.slane %v1140, 4
      %v1143 = vshll.u32 %v1071, 16
      %v1145 = vrot.slane %v1143, 5
      %v1146 = vor.u32 %v1142, %v1145
      %v1147 = vrot.slane %v1146, 4
      %v1149 = vshll.u32 %v1072, 16
      %v1151 = vrot.slane %v1149, 5
      %v1152 = vsel %vm779, %v1147, %v1151
      %v1153 = vshrl.u32 %v1072, 16
      %v1155 = vrot.slane %v1153, 4
      %v1156 = vor.u32 %v1155, %v1151
      %v1157 = vrot.slane %v1156, 4
      %v1159 = vshll.u32 %v1085, 16
      %v1161 = vrot.slane %v1159, 5
      %v1162 = vsel %vm779, %v1157, %v1161
      %v1164 = vshrl.u32 %v1073, 16
      %v1166 = vrot.slane %v1164, 4
      %v1167 = vshll.u32 %v1073, 16
      %v1169 = vrot.slane %v1167, 5
      %v1170 = vor.u32 %v1166, %v1169
      %v1171 = vrot.slane %v1170, 4
      %v1173 = vshll.u32 %v1074, 16
      %v1175 = vrot.slane %v1173, 5
      %v1176 = vsel %vm779, %v1171, %v1175
      %v1177 = vshrl.u32 %v1074, 16
      %v1179 = vrot.slane %v1177, 4
      %v1180 = vor.u32 %v1179, %v1175
      %v1181 = vrot.slane %v1180, 4
      %v1183 = vshll.u32 %v1086, 16
      %v1185 = vrot.slane %v1183, 5
      %v1186 = vsel %vm779, %v1181, %v1185
      %v1188 = vshrl.u32 %v1075, 16
      %v1190 = vrot.slane %v1188, 4
      %v1191 = vshll.u32 %v1075, 16
      %v1193 = vrot.slane %v1191, 5
      %v1194 = vor.u32 %v1190, %v1193
      %v1195 = vrot.slane %v1194, 4
      %v1197 = vshll.u32 %v1076, 16
      %v1199 = vrot.slane %v1197, 5
      %v1200 = vsel %vm779, %v1195, %v1199
      %v1201 = vshrl.u32 %v1076, 16
      %v1203 = vrot.slane %v1201, 4
      %v1204 = vor.u32 %v1203, %v1199
      %v1205 = vrot.slane %v1204, 4
      %v1207 = vshll.u32 %v1087, 16
      %v1209 = vrot.slane %v1207, 5
      %v1210 = vsel %vm779, %v1205, %v1209
      %v1212 = vshrl.u32 %v1077, 16
      %v1214 = vrot.slane %v1212, 4
      %v1215 = vshll.u32 %v1077, 16
      %v1217 = vrot.slane %v1215, 5
      %v1218 = vor.u32 %v1214, %v1217
      %v1219 = vrot.slane %v1218, 4
      %v1221 = vshll.u32 %v1078, 16
      %v1223 = vrot.slane %v1221, 5
      %v1224 = vsel %vm779, %v1219, %v1223
      %v1225 = vshrl.u32 %v1078, 16
      %v1227 = vrot.slane %v1225, 4
      %v1228 = vor.u32 %v1227, %v1223
      %v1229 = vrot.slane %v1228, 4
      %v1231 = vshll.u32 %v1088, 16
      %v1233 = vrot.slane %v1231, 5
      %v1234 = vsel %vm779, %v1229, %v1233
      %v1236 = vshrl.u32 %v1079, 16
      %v1238 = vrot.slane %v1236, 4
      %v1239 = vshll.u32 %v1079, 16
      %v1241 = vrot.slane %v1239, 5
      %v1242 = vor.u32 %v1238, %v1241
      %v1243 = vrot.slane %v1242, 4
      %v1245 = vshll.u32 %v1080, 16
      %v1247 = vrot.slane %v1245, 5
      %v1248 = vsel %vm779, %v1243, %v1247
      %v1249 = vshrl.u32 %v1080, 16
      %v1251 = vrot.slane %v1249, 4
      %v1252 = vor.u32 %v1251, %v1247
      %v1253 = vrot.slane %v1252, 4
      %v1255 = vshll.u32 %v1089, 16
      %v1257 = vrot.slane %v1255, 5
      %v1258 = vsel %vm779, %v1253, %v1257
      %v1260 = vshrl.u32 %v1081, 16
      %v1262 = vrot.slane %v1260, 4
      %v1263 = vshll.u32 %v1081, 16
      %v1265 = vrot.slane %v1263, 5
      %v1266 = vor.u32 %v1262, %v1265
      %v1267 = vrot.slane %v1266, 4
      %v1269 = vshll.u32 %v1082, 16
      %v1271 = vrot.slane %v1269, 5
      %v1272 = vsel %vm779, %v1267, %v1271
      %v1273 = vshrl.u32 %v1082, 16
      %v1275 = vrot.slane %v1273, 4
      %v1276 = vor.u32 %v1275, %v1271
      %v1277 = vrot.slane %v1276, 4
      %v1279 = vshll.u32 %v1090, 16
      %v1281 = vrot.slane %v1279, 5
      %v1282 = vsel %vm779, %v1277, %v1281
      %v1283 = vld [vmem:[%s1066] sm:$0xe]
      %v1284 = vld [vmem:[%s1066 + $0xc] sm:$0xe]
      %v1285 = vld [vmem:[%s1066 + $0x18] sm:$0xe]
      %v1286 = vld [vmem:[%s1066 + $0x24] sm:$0xe]
      %v1287 = vld [vmem:[%s1066 + $0x30] sm:$0xe]
      %v1288 = vld [vmem:[%s1066 + $0x3c] sm:$0xe]
      %v1289 = vld [vmem:[%s1066 + $0x48] sm:$0xe]
      %v1290 = vld [vmem:[%s1066 + $0x54] sm:$0xe]
      %v1315 = vrot.slane %v1283, 5
      %v1316 = vrot.slane %v1315, 4
      %v1317 = vrot.slane %v1068, 5
      %v1318 = vsel %vm1006, %v1316, %v1317
      %v1319 = vrot.slane %v1317, 4
      %v1320 = vrot.slane %v1083, 5
      %v1321 = vsel %vm1006, %v1319, %v1320
      %v1322 = vrot.slane %v1284, 5
      %v1323 = vrot.slane %v1322, 4
      %v1324 = vrot.slane %v1070, 5
      %v1325 = vsel %vm1006, %v1323, %v1324
      %v1326 = vrot.slane %v1324, 4
      %v1327 = vrot.slane %v1084, 5
      %v1328 = vsel %vm1006, %v1326, %v1327
      %v1329 = vrot.slane %v1285, 5
      %v1330 = vrot.slane %v1329, 4
      %v1331 = vrot.slane %v1072, 5
      %v1332 = vsel %vm1006, %v1330, %v1331
      %v1333 = vrot.slane %v1331, 4
      %v1334 = vrot.slane %v1085, 5
      %v1335 = vsel %vm1006, %v1333, %v1334
      %v1336 = vrot.slane %v1286, 5
      %v1337 = vrot.slane %v1336, 4
      %v1338 = vrot.slane %v1074, 5
      %v1339 = vsel %vm1006, %v1337, %v1338
      %v1340 = vrot.slane %v1338, 4
      %v1341 = vrot.slane %v1086, 5
      %v1342 = vsel %vm1006, %v1340, %v1341
      %v1343 = vrot.slane %v1287, 5
      %v1344 = vrot.slane %v1343, 4
      %v1345 = vrot.slane %v1076, 5
      %v1346 = vsel %vm1006, %v1344, %v1345
      %v1347 = vrot.slane %v1345, 4
      %v1348 = vrot.slane %v1087, 5
      %v1349 = vsel %vm1006, %v1347, %v1348
      %v1350 = vrot.slane %v1288, 5
      %v1351 = vrot.slane %v1350, 4
      %v1352 = vrot.slane %v1078, 5
      %v1353 = vsel %vm1006, %v1351, %v1352
      %v1354 = vrot.slane %v1352, 4
      %v1355 = vrot.slane %v1088, 5
      %v1356 = vsel %vm1006, %v1354, %v1355
      %v1357 = vrot.slane %v1289, 5
      %v1358 = vrot.slane %v1357, 4
      %v1359 = vrot.slane %v1080, 5
      %v1360 = vsel %vm1006, %v1358, %v1359
      %v1361 = vrot.slane %v1359, 4
      %v1362 = vrot.slane %v1089, 5
      %v1363 = vsel %vm1006, %v1361, %v1362
      %v1364 = vrot.slane %v1290, 5
      %v1365 = vrot.slane %v1364, 4
      %v1366 = vrot.slane %v1082, 5
      %v1367 = vsel %vm1006, %v1365, %v1366
      %v1368 = vrot.slane %v1366, 4
      %v1369 = vrot.slane %v1090, 5
      %v1370 = vsel %vm1006, %v1368, %v1369
      %s1371 = sadd.s32 %s218, 2
      %s1372 = smul.u32 %s1371, 3
      %s1373 = smul.addr %s1372, 4
      %s1374 = scalar_lea.vmem [#allocation2], %s1373
      %v1375 = vld [vmem:[%s1374] sm:$0xf]
      %v1376 = vld [vmem:[%s1374 + $0x4] sm:$0xf]
      %v1377 = vld [vmem:[%s1374 + $0xc] sm:$0xf]
      %v1378 = vld [vmem:[%s1374 + $0x10] sm:$0xf]
      %v1379 = vld [vmem:[%s1374 + $0x18] sm:$0xf]
      %v1380 = vld [vmem:[%s1374 + $0x1c] sm:$0xf]
      %v1381 = vld [vmem:[%s1374 + $0x24] sm:$0xf]
      %v1382 = vld [vmem:[%s1374 + $0x28] sm:$0xf]
      %v1383 = vld [vmem:[%s1374 + $0x30] sm:$0xf]
      %v1384 = vld [vmem:[%s1374 + $0x34] sm:$0xf]
      %v1385 = vld [vmem:[%s1374 + $0x3c] sm:$0xf]
      %v1386 = vld [vmem:[%s1374 + $0x40] sm:$0xf]
      %v1387 = vld [vmem:[%s1374 + $0x48] sm:$0xf]
      %v1388 = vld [vmem:[%s1374 + $0x4c] sm:$0xf]
      %v1389 = vld [vmem:[%s1374 + $0x54] sm:$0xf]
      %v1390 = vld [vmem:[%s1374 + $0x58] sm:$0xf]
      %v1391 = vld [vmem:[%s1374 + $0x8] sm:$0x1]
      %v1392 = vld [vmem:[%s1374 + $0x14] sm:$0x1]
      %v1393 = vld [vmem:[%s1374 + $0x20] sm:$0x1]
      %v1394 = vld [vmem:[%s1374 + $0x2c] sm:$0x1]
      %v1395 = vld [vmem:[%s1374 + $0x38] sm:$0x1]
      %v1396 = vld [vmem:[%s1374 + $0x44] sm:$0x1]
      %v1397 = vld [vmem:[%s1374 + $0x50] sm:$0x1]
      %v1398 = vld [vmem:[%s1374 + $0x5c] sm:$0x1]
      %v1400 = vshrl.u32 %v1375, 16
      %v1402 = vrot.slane %v1400, 4
      %v1403 = vshll.u32 %v1375, 16
      %v1405 = vrot.slane %v1403, 5
      %v1406 = vor.u32 %v1402, %v1405
      %v1407 = vrot.slane %v1406, 4
      %v1409 = vshll.u32 %v1376, 16
      %v1411 = vrot.slane %v1409, 5
      %v1412 = vsel %vm779, %v1407, %v1411
      %v1413 = vshrl.u32 %v1376, 16
      %v1415 = vrot.slane %v1413, 4
      %v1416 = vor.u32 %v1415, %v1411
      %v1417 = vrot.slane %v1416, 4
      %v1419 = vshll.u32 %v1391, 16
      %v1421 = vrot.slane %v1419, 5
      %v1422 = vsel %vm779, %v1417, %v1421
      %v1424 = vshrl.u32 %v1377, 16
      %v1426 = vrot.slane %v1424, 4
      %v1427 = vshll.u32 %v1377, 16
      %v1429 = vrot.slane %v1427, 5
      %v1430 = vor.u32 %v1426, %v1429
      %v1431 = vrot.slane %v1430, 4
      %v1433 = vshll.u32 %v1378, 16
      %v1435 = vrot.slane %v1433, 5
      %v1436 = vsel %vm779, %v1431, %v1435
      %v1437 = vshrl.u32 %v1378, 16
      %v1439 = vrot.slane %v1437, 4
      %v1440 = vor.u32 %v1439, %v1435
      %v1441 = vrot.slane %v1440, 4
      %v1443 = vshll.u32 %v1392, 16
      %v1445 = vrot.slane %v1443, 5
      %v1446 = vsel %vm779, %v1441, %v1445
      %v1448 = vshrl.u32 %v1379, 16
      %v1450 = vrot.slane %v1448, 4
      %v1451 = vshll.u32 %v1379, 16
      %v1453 = vrot.slane %v1451, 5
      %v1454 = vor.u32 %v1450, %v1453
      %v1455 = vrot.slane %v1454, 4
      %v1457 = vshll.u32 %v1380, 16
      %v1459 = vrot.slane %v1457, 5
      %v1460 = vsel %vm779, %v1455, %v1459
      %v1461 = vshrl.u32 %v1380, 16
      %v1463 = vrot.slane %v1461, 4
      %v1464 = vor.u32 %v1463, %v1459
      %v1465 = vrot.slane %v1464, 4
      %v1467 = vshll.u32 %v1393, 16
      %v1469 = vrot.slane %v1467, 5
      %v1470 = vsel %vm779, %v1465, %v1469
      %v1472 = vshrl.u32 %v1381, 16
      %v1474 = vrot.slane %v1472, 4
      %v1475 = vshll.u32 %v1381, 16
      %v1477 = vrot.slane %v1475, 5
      %v1478 = vor.u32 %v1474, %v1477
      %v1479 = vrot.slane %v1478, 4
      %v1481 = vshll.u32 %v1382, 16
      %v1483 = vrot.slane %v1481, 5
      %v1484 = vsel %vm779, %v1479, %v1483
      %v1485 = vshrl.u32 %v1382, 16
      %v1487 = vrot.slane %v1485, 4
      %v1488 = vor.u32 %v1487, %v1483
      %v1489 = vrot.slane %v1488, 4
      %v1491 = vshll.u32 %v1394, 16
      %v1493 = vrot.slane %v1491, 5
      %v1494 = vsel %vm779, %v1489, %v1493
      %v1496 = vshrl.u32 %v1383, 16
      %v1498 = vrot.slane %v1496, 4
      %v1499 = vshll.u32 %v1383, 16
      %v1501 = vrot.slane %v1499, 5
      %v1502 = vor.u32 %v1498, %v1501
      %v1503 = vrot.slane %v1502, 4
      %v1505 = vshll.u32 %v1384, 16
      %v1507 = vrot.slane %v1505, 5
      %v1508 = vsel %vm779, %v1503, %v1507
      %v1509 = vshrl.u32 %v1384, 16
      %v1511 = vrot.slane %v1509, 4
      %v1512 = vor.u32 %v1511, %v1507
      %v1513 = vrot.slane %v1512, 4
      %v1515 = vshll.u32 %v1395, 16
      %v1517 = vrot.slane %v1515, 5
      %v1518 = vsel %vm779, %v1513, %v1517
      %v1520 = vshrl.u32 %v1385, 16
      %v1522 = vrot.slane %v1520, 4
      %v1523 = vshll.u32 %v1385, 16
      %v1525 = vrot.slane %v1523, 5
      %v1526 = vor.u32 %v1522, %v1525
      %v1527 = vrot.slane %v1526, 4
      %v1529 = vshll.u32 %v1386, 16
      %v1531 = vrot.slane %v1529, 5
      %v1532 = vsel %vm779, %v1527, %v1531
      %v1533 = vshrl.u32 %v1386, 16
      %v1535 = vrot.slane %v1533, 4
      %v1536 = vor.u32 %v1535, %v1531
      %v1537 = vrot.slane %v1536, 4
      %v1539 = vshll.u32 %v1396, 16
      %v1541 = vrot.slane %v1539, 5
      %v1542 = vsel %vm779, %v1537, %v1541
      %v1544 = vshrl.u32 %v1387, 16
      %v1546 = vrot.slane %v1544, 4
      %v1547 = vshll.u32 %v1387, 16
      %v1549 = vrot.slane %v1547, 5
      %v1550 = vor.u32 %v1546, %v1549
      %v1551 = vrot.slane %v1550, 4
      %v1553 = vshll.u32 %v1388, 16
      %v1555 = vrot.slane %v1553, 5
      %v1556 = vsel %vm779, %v1551, %v1555
      %v1557 = vshrl.u32 %v1388, 16
      %v1559 = vrot.slane %v1557, 4
      %v1560 = vor.u32 %v1559, %v1555
      %v1561 = vrot.slane %v1560, 4
      %v1563 = vshll.u32 %v1397, 16
      %v1565 = vrot.slane %v1563, 5
      %v1566 = vsel %vm779, %v1561, %v1565
      %v1568 = vshrl.u32 %v1389, 16
      %v1570 = vrot.slane %v1568, 4
      %v1571 = vshll.u32 %v1389, 16
      %v1573 = vrot.slane %v1571, 5
      %v1574 = vor.u32 %v1570, %v1573
      %v1575 = vrot.slane %v1574, 4
      %v1577 = vshll.u32 %v1390, 16
      %v1579 = vrot.slane %v1577, 5
      %v1580 = vsel %vm779, %v1575, %v1579
      %v1581 = vshrl.u32 %v1390, 16
      %v1583 = vrot.slane %v1581, 4
      %v1584 = vor.u32 %v1583, %v1579
      %v1585 = vrot.slane %v1584, 4
      %v1587 = vshll.u32 %v1398, 16
      %v1589 = vrot.slane %v1587, 5
      %v1590 = vsel %vm779, %v1585, %v1589
      %v1591 = vld [vmem:[%s1374] sm:$0xe]
      %v1592 = vld [vmem:[%s1374 + $0xc] sm:$0xe]
      %v1593 = vld [vmem:[%s1374 + $0x18] sm:$0xe]
      %v1594 = vld [vmem:[%s1374 + $0x24] sm:$0xe]
      %v1595 = vld [vmem:[%s1374 + $0x30] sm:$0xe]
      %v1596 = vld [vmem:[%s1374 + $0x3c] sm:$0xe]
      %v1597 = vld [vmem:[%s1374 + $0x48] sm:$0xe]
      %v1598 = vld [vmem:[%s1374 + $0x54] sm:$0xe]
      %v1623 = vrot.slane %v1591, 5
      %v1624 = vrot.slane %v1623, 4
      %v1625 = vrot.slane %v1376, 5
      %v1626 = vsel %vm1006, %v1624, %v1625
      %v1627 = vrot.slane %v1625, 4
      %v1628 = vrot.slane %v1391, 5
      %v1629 = vsel %vm1006, %v1627, %v1628
      %v1630 = vrot.slane %v1592, 5
      %v1631 = vrot.slane %v1630, 4
      %v1632 = vrot.slane %v1378, 5
      %v1633 = vsel %vm1006, %v1631, %v1632
      %v1634 = vrot.slane %v1632, 4
      %v1635 = vrot.slane %v1392, 5
      %v1636 = vsel %vm1006, %v1634, %v1635
      %v1637 = vrot.slane %v1593, 5
      %v1638 = vrot.slane %v1637, 4
      %v1639 = vrot.slane %v1380, 5
      %v1640 = vsel %vm1006, %v1638, %v1639
      %v1641 = vrot.slane %v1639, 4
      %v1642 = vrot.slane %v1393, 5
      %v1643 = vsel %vm1006, %v1641, %v1642
      %v1644 = vrot.slane %v1594, 5
      %v1645 = vrot.slane %v1644, 4
      %v1646 = vrot.slane %v1382, 5
      %v1647 = vsel %vm1006, %v1645, %v1646
      %v1648 = vrot.slane %v1646, 4
      %v1649 = vrot.slane %v1394, 5
      %v1650 = vsel %vm1006, %v1648, %v1649
      %v1651 = vrot.slane %v1595, 5
      %v1652 = vrot.slane %v1651, 4
      %v1653 = vrot.slane %v1384, 5
      %v1654 = vsel %vm1006, %v1652, %v1653
      %v1655 = vrot.slane %v1653, 4
      %v1656 = vrot.slane %v1395, 5
      %v1657 = vsel %vm1006, %v1655, %v1656
      %v1658 = vrot.slane %v1596, 5
      %v1659 = vrot.slane %v1658, 4
      %v1660 = vrot.slane %v1386, 5
      %v1661 = vsel %vm1006, %v1659, %v1660
      %v1662 = vrot.slane %v1660, 4
      %v1663 = vrot.slane %v1396, 5
      %v1664 = vsel %vm1006, %v1662, %v1663
      %v1665 = vrot.slane %v1597, 5
      %v1666 = vrot.slane %v1665, 4
      %v1667 = vrot.slane %v1388, 5
      %v1668 = vsel %vm1006, %v1666, %v1667
      %v1669 = vrot.slane %v1667, 4
      %v1670 = vrot.slane %v1397, 5
      %v1671 = vsel %vm1006, %v1669, %v1670
      %v1672 = vrot.slane %v1598, 5
      %v1673 = vrot.slane %v1672, 4
      %v1674 = vrot.slane %v1390, 5
      %v1675 = vsel %vm1006, %v1673, %v1674
      %v1676 = vrot.slane %v1674, 4
      %v1677 = vrot.slane %v1398, 5
      %v1678 = vsel %vm1006, %v1676, %v1677
      %v1687 = vunpack.c.l.b16 %v753
      %v1688 = vunpack.c.l.b16 %v754
      %v1689 = vunpack.c.l.b16 %v755
      %v1690 = vunpack.c.l.b16 %v756
      %v1691 = vunpack.c.l.b16 %v757
      %v1692 = vunpack.c.l.b16 %v758
      %v1693 = vunpack.c.l.b16 %v759
      %v1694 = vunpack.c.l.b16 %v760
      %v1695 = vunpack.c.l.b16 %v761
      %v1696 = vunpack.c.l.b16 %v762
      %v1697 = vunpack.c.l.b16 %v763
      %v1698 = vunpack.c.l.b16 %v764
      %v1699 = vunpack.c.l.b16 %v765
      %v1700 = vunpack.c.l.b16 %v766
      %v1701 = vunpack.c.l.b16 %v767
      %v1702 = vunpack.c.l.b16 %v768
      %v1703 = vpack.c.b16 %v1688, %v1687
      %v1704 = vpack.c.b16 %v1690, %v1689
      %v1705 = vpack.c.b16 %v1692, %v1691
      %v1706 = vpack.c.b16 %v1694, %v1693
      %v1707 = vpack.c.b16 %v1696, %v1695
      %v1708 = vpack.c.b16 %v1698, %v1697
      %v1709 = vpack.c.b16 %v1700, %v1699
      %v1710 = vpack.c.b16 %v1702, %v1701
      %v1719 = vunpack.c.l.b16 %v793
      %v1720 = vunpack.c.l.b16 %v803
      %v1721 = vunpack.c.l.b16 %v817
      %v1722 = vunpack.c.l.b16 %v827
      %v1723 = vunpack.c.l.b16 %v841
      %v1724 = vunpack.c.l.b16 %v851
      %v1725 = vunpack.c.l.b16 %v865
      %v1726 = vunpack.c.l.b16 %v875
      %v1727 = vunpack.c.l.b16 %v889
      %v1728 = vunpack.c.l.b16 %v899
      %v1729 = vunpack.c.l.b16 %v913
      %v1730 = vunpack.c.l.b16 %v923
      %v1731 = vunpack.c.l.b16 %v937
      %v1732 = vunpack.c.l.b16 %v947
      %v1733 = vunpack.c.l.b16 %v961
      %v1734 = vunpack.c.l.b16 %v971
      %v1735 = vpack.c.b16 %v1720, %v1719
      %v1736 = vpack.c.b16 %v1722, %v1721
      %v1737 = vpack.c.b16 %v1724, %v1723
      %v1738 = vpack.c.b16 %v1726, %v1725
      %v1739 = vpack.c.b16 %v1728, %v1727
      %v1740 = vpack.c.b16 %v1730, %v1729
      %v1741 = vpack.c.b16 %v1732, %v1731
      %v1742 = vpack.c.b16 %v1734, %v1733
      %v1751 = vunpack.c.l.b16 %v1010
      %v1752 = vunpack.c.l.b16 %v1013
      %v1753 = vunpack.c.l.b16 %v1017
      %v1754 = vunpack.c.l.b16 %v1020
      %v1755 = vunpack.c.l.b16 %v1024
      %v1756 = vunpack.c.l.b16 %v1027
      %v1757 = vunpack.c.l.b16 %v1031
      %v1758 = vunpack.c.l.b16 %v1034
      %v1759 = vunpack.c.l.b16 %v1038
      %v1760 = vunpack.c.l.b16 %v1041
      %v1761 = vunpack.c.l.b16 %v1045
      %v1762 = vunpack.c.l.b16 %v1048
      %v1763 = vunpack.c.l.b16 %v1052
      %v1764 = vunpack.c.l.b16 %v1055
      %v1765 = vunpack.c.l.b16 %v1059
      %v1766 = vunpack.c.l.b16 %v1062
      %v1767 = vpack.c.b16 %v1752, %v1751
      %v1768 = vpack.c.b16 %v1754, %v1753
      %v1769 = vpack.c.b16 %v1756, %v1755
      %v1770 = vpack.c.b16 %v1758, %v1757
      %v1771 = vpack.c.b16 %v1760, %v1759
      %v1772 = vpack.c.b16 %v1762, %v1761
      %v1773 = vpack.c.b16 %v1764, %v1763
      %v1774 = vpack.c.b16 %v1766, %v1765
      %v1791 = vunpack.c.l.b16 %v1067
      %v1792 = vunpack.c.l.b16 %v1068
      %v1793 = vunpack.c.l.b16 %v1069
      %v1794 = vunpack.c.l.b16 %v1070
      %v1795 = vunpack.c.l.b16 %v1071
      %v1796 = vunpack.c.l.b16 %v1072
      %v1797 = vunpack.c.l.b16 %v1073
      %v1798 = vunpack.c.l.b16 %v1074
      %v1799 = vunpack.c.l.b16 %v1075
      %v1800 = vunpack.c.l.b16 %v1076
      %v1801 = vunpack.c.l.b16 %v1077
      %v1802 = vunpack.c.l.b16 %v1078
      %v1803 = vunpack.c.l.b16 %v1079
      %v1804 = vunpack.c.l.b16 %v1080
      %v1805 = vunpack.c.l.b16 %v1081
      %v1806 = vunpack.c.l.b16 %v1082
      %v1807 = vpack.c.b16 %v1792, %v1791
      %v1808 = vpack.c.b16 %v1794, %v1793
      %v1809 = vpack.c.b16 %v1796, %v1795
      %v1810 = vpack.c.b16 %v1798, %v1797
      %v1811 = vpack.c.b16 %v1800, %v1799
      %v1812 = vpack.c.b16 %v1802, %v1801
      %v1813 = vpack.c.b16 %v1804, %v1803
      %v1814 = vpack.c.b16 %v1806, %v1805
      %v1823 = vunpack.c.l.b16 %v1104
      %v1824 = vunpack.c.l.b16 %v1114
      %v1825 = vunpack.c.l.b16 %v1128
      %v1826 = vunpack.c.l.b16 %v1138
      %v1827 = vunpack.c.l.b16 %v1152
      %v1828 = vunpack.c.l.b16 %v1162
      %v1829 = vunpack.c.l.b16 %v1176
      %v1830 = vunpack.c.l.b16 %v1186
      %v1831 = vunpack.c.l.b16 %v1200
      %v1832 = vunpack.c.l.b16 %v1210
      %v1833 = vunpack.c.l.b16 %v1224
      %v1834 = vunpack.c.l.b16 %v1234
      %v1835 = vunpack.c.l.b16 %v1248
      %v1836 = vunpack.c.l.b16 %v1258
      %v1837 = vunpack.c.l.b16 %v1272
      %v1838 = vunpack.c.l.b16 %v1282
      %v1839 = vpack.c.b16 %v1824, %v1823
      %v1840 = vpack.c.b16 %v1826, %v1825
      %v1841 = vpack.c.b16 %v1828, %v1827
      %v1842 = vpack.c.b16 %v1830, %v1829
      %v1843 = vpack.c.b16 %v1832, %v1831
      %v1844 = vpack.c.b16 %v1834, %v1833
      %v1845 = vpack.c.b16 %v1836, %v1835
      %v1846 = vpack.c.b16 %v1838, %v1837
      %v1855 = vunpack.c.l.b16 %v1318
      %v1856 = vunpack.c.l.b16 %v1321
      %v1857 = vunpack.c.l.b16 %v1325
      %v1858 = vunpack.c.l.b16 %v1328
      %v1859 = vunpack.c.l.b16 %v1332
      %v1860 = vunpack.c.l.b16 %v1335
      %v1861 = vunpack.c.l.b16 %v1339
      %v1862 = vunpack.c.l.b16 %v1342
      %v1863 = vunpack.c.l.b16 %v1346
      %v1864 = vunpack.c.l.b16 %v1349
      %v1865 = vunpack.c.l.b16 %v1353
      %v1866 = vunpack.c.l.b16 %v1356
      %v1867 = vunpack.c.l.b16 %v1360
      %v1868 = vunpack.c.l.b16 %v1363
      %v1869 = vunpack.c.l.b16 %v1367
      %v1870 = vunpack.c.l.b16 %v1370
      %v1871 = vpack.c.b16 %v1856, %v1855
      %v1872 = vpack.c.b16 %v1858, %v1857
      %v1873 = vpack.c.b16 %v1860, %v1859
      %v1874 = vpack.c.b16 %v1862, %v1861
      %v1875 = vpack.c.b16 %v1864, %v1863
      %v1876 = vpack.c.b16 %v1866, %v1865
      %v1877 = vpack.c.b16 %v1868, %v1867
      %v1878 = vpack.c.b16 %v1870, %v1869
      %v1895 = vunpack.c.l.b16 %v1375
      %v1896 = vunpack.c.l.b16 %v1376
      %v1897 = vunpack.c.l.b16 %v1377
      %v1898 = vunpack.c.l.b16 %v1378
      %v1899 = vunpack.c.l.b16 %v1379
      %v1900 = vunpack.c.l.b16 %v1380
      %v1901 = vunpack.c.l.b16 %v1381
      %v1902 = vunpack.c.l.b16 %v1382
      %v1903 = vunpack.c.l.b16 %v1383
      %v1904 = vunpack.c.l.b16 %v1384
      %v1905 = vunpack.c.l.b16 %v1385
      %v1906 = vunpack.c.l.b16 %v1386
      %v1907 = vunpack.c.l.b16 %v1387
      %v1908 = vunpack.c.l.b16 %v1388
      %v1909 = vunpack.c.l.b16 %v1389
      %v1910 = vunpack.c.l.b16 %v1390
      %v1911 = vpack.c.b16 %v1896, %v1895
      %v1912 = vpack.c.b16 %v1898, %v1897
      %v1913 = vpack.c.b16 %v1900, %v1899
      %v1914 = vpack.c.b16 %v1902, %v1901
      %v1915 = vpack.c.b16 %v1904, %v1903
      %v1916 = vpack.c.b16 %v1906, %v1905
      %v1917 = vpack.c.b16 %v1908, %v1907
      %v1918 = vpack.c.b16 %v1910, %v1909
      %v1927 = vunpack.c.l.b16 %v1412
      %v1928 = vunpack.c.l.b16 %v1422
      %v1929 = vunpack.c.l.b16 %v1436
      %v1930 = vunpack.c.l.b16 %v1446
      %v1931 = vunpack.c.l.b16 %v1460
      %v1932 = vunpack.c.l.b16 %v1470
      %v1933 = vunpack.c.l.b16 %v1484
      %v1934 = vunpack.c.l.b16 %v1494
      %v1935 = vunpack.c.l.b16 %v1508
      %v1936 = vunpack.c.l.b16 %v1518
      %v1937 = vunpack.c.l.b16 %v1532
      %v1938 = vunpack.c.l.b16 %v1542
      %v1939 = vunpack.c.l.b16 %v1556
      %v1940 = vunpack.c.l.b16 %v1566
      %v1941 = vunpack.c.l.b16 %v1580
      %v1942 = vunpack.c.l.b16 %v1590
      %v1943 = vpack.c.b16 %v1928, %v1927
      %v1944 = vpack.c.b16 %v1930, %v1929
      %v1945 = vpack.c.b16 %v1932, %v1931
      %v1946 = vpack.c.b16 %v1934, %v1933
      %v1947 = vpack.c.b16 %v1936, %v1935
      %v1948 = vpack.c.b16 %v1938, %v1937
      %v1949 = vpack.c.b16 %v1940, %v1939
      %v1950 = vpack.c.b16 %v1942, %v1941
      %v1959 = vunpack.c.l.b16 %v1626
      %v1960 = vunpack.c.l.b16 %v1629
      %v1961 = vunpack.c.l.b16 %v1633
      %v1962 = vunpack.c.l.b16 %v1636
      %v1963 = vunpack.c.l.b16 %v1640
      %v1964 = vunpack.c.l.b16 %v1643
      %v1965 = vunpack.c.l.b16 %v1647
      %v1966 = vunpack.c.l.b16 %v1650
      %v1967 = vunpack.c.l.b16 %v1654
      %v1968 = vunpack.c.l.b16 %v1657
      %v1969 = vunpack.c.l.b16 %v1661
      %v1970 = vunpack.c.l.b16 %v1664
      %v1971 = vunpack.c.l.b16 %v1668
      %v1972 = vunpack.c.l.b16 %v1671
      %v1973 = vunpack.c.l.b16 %v1675
      %v1974 = vunpack.c.l.b16 %v1678
      %v1975 = vpack.c.b16 %v1960, %v1959
      %v1976 = vpack.c.b16 %v1962, %v1961
      %v1977 = vpack.c.b16 %v1964, %v1963
      %v1978 = vpack.c.b16 %v1966, %v1965
      %v1979 = vpack.c.b16 %v1968, %v1967
      %v1980 = vpack.c.b16 %v1970, %v1969
      %v1981 = vpack.c.b16 %v1972, %v1971
      %v1982 = vpack.c.b16 %v1974, %v1973
      %v1991 = vld [vmem:[%s1] sm:$0xf]
      %v1992 = vld [vmem:[%s1 + $0x4] sm:$0xf]
      %v1993 = vld [vmem:[%s1 + $0x8] sm:$0xf]
      %v1994 = vld [vmem:[%s1 + $0xc] sm:$0xf]
      %v1995 = vld [vmem:[%s1 + $0x10] sm:$0xf]
      %v1996 = vld [vmem:[%s1 + $0x14] sm:$0xf]
      %v1997 = vld [vmem:[%s1 + $0x18] sm:$0xf]
      %v1998 = vld [vmem:[%s1 + $0x1c] sm:$0xf]
      %v1999 = vld [vmem:[%s1 + $0x20] sm:$0xf]
      %v2000 = vld [vmem:[%s1 + $0x24] sm:$0xf]
      %v2001 = vld [vmem:[%s1 + $0x28] sm:$0xf]
      %v2002 = vld [vmem:[%s1 + $0x2c] sm:$0xf]
      %v2003 = vld [vmem:[%s1 + $0x30] sm:$0xf]
      %v2004 = vld [vmem:[%s1 + $0x34] sm:$0xf]
      %v2005 = vld [vmem:[%s1 + $0x38] sm:$0xf]
      %v2006 = vld [vmem:[%s1 + $0x3c] sm:$0xf]
      %v2007 = vld [vmem:[%s1 + $0x40] sm:$0xf]
      %v2008 = vld [vmem:[%s1 + $0x44] sm:$0xf]
      %v2009 = vld [vmem:[%s1 + $0x48] sm:$0xf]
      %v2010 = vld [vmem:[%s1 + $0x4c] sm:$0xf]
      %v2011 = vld [vmem:[%s1 + $0x50] sm:$0xf]
      %v2012 = vld [vmem:[%s1 + $0x54] sm:$0xf]
      %v2013 = vld [vmem:[%s1 + $0x58] sm:$0xf]
      %v2014 = vld [vmem:[%s1 + $0x5c] sm:$0xf]
      %v2015 = vld [vmem:[%s1 + $0x60] sm:$0xf]
      %v2016 = vld [vmem:[%s1 + $0x64] sm:$0xf]
      %v2017 = vld [vmem:[%s1 + $0x68] sm:$0xf]
      %v2018 = vld [vmem:[%s1 + $0x6c] sm:$0xf]
      %v2019 = vld [vmem:[%s1 + $0x70] sm:$0xf]
      %v2020 = vld [vmem:[%s1 + $0x74] sm:$0xf]
      %v2021 = vld [vmem:[%s1 + $0x78] sm:$0xf]
      %v2022 = vld [vmem:[%s1 + $0x7c] sm:$0xf]
      %v2023 = vld [vmem:[%s1 + $0x80] sm:$0xf]
      %v2024 = vld [vmem:[%s1 + $0x84] sm:$0xf]
      %v2025 = vld [vmem:[%s1 + $0x88] sm:$0xf]
      %v2026 = vld [vmem:[%s1 + $0x8c] sm:$0xf]
      %v2027 = vld [vmem:[%s1 + $0x90] sm:$0xf]
      %v2028 = vld [vmem:[%s1 + $0x94] sm:$0xf]
      %v2029 = vld [vmem:[%s1 + $0x98] sm:$0xf]
      %v2030 = vld [vmem:[%s1 + $0x9c] sm:$0xf]
      %v2031 = vld [vmem:[%s1 + $0xa0] sm:$0xf]
      %v2032 = vld [vmem:[%s1 + $0xa4] sm:$0xf]
      %v2033 = vld [vmem:[%s1 + $0xa8] sm:$0xf]
      %v2034 = vld [vmem:[%s1 + $0xac] sm:$0xf]
      %v2035 = vld [vmem:[%s1 + $0xb0] sm:$0xf]
      %v2036 = vld [vmem:[%s1 + $0xb4] sm:$0xf]
      %v2037 = vld [vmem:[%s1 + $0xb8] sm:$0xf]
      %v2038 = vld [vmem:[%s1 + $0xbc] sm:$0xf]
      %v2039 = vld [vmem:[%s1 + $0xc0] sm:$0xf]
      %v2040 = vld [vmem:[%s1 + $0xc4] sm:$0xf]
      %v2041 = vld [vmem:[%s1 + $0xc8] sm:$0xf]
      %v2042 = vld [vmem:[%s1 + $0xcc] sm:$0xf]
      %v2043 = vld [vmem:[%s1 + $0xd0] sm:$0xf]
      %v2044 = vld [vmem:[%s1 + $0xd4] sm:$0xf]
      %v2045 = vld [vmem:[%s1 + $0xd8] sm:$0xf]
      %v2046 = vld [vmem:[%s1 + $0xdc] sm:$0xf]
      %v2047 = vld [vmem:[%s1 + $0xe0] sm:$0xf]
      %v2048 = vld [vmem:[%s1 + $0xe4] sm:$0xf]
      %v2049 = vld [vmem:[%s1 + $0xe8] sm:$0xf]
      %v2050 = vld [vmem:[%s1 + $0xec] sm:$0xf]
      %v2051 = vld [vmem:[%s1 + $0xf0] sm:$0xf]
      %v2052 = vld [vmem:[%s1 + $0xf4] sm:$0xf]
      %v2053 = vld [vmem:[%s1 + $0xf8] sm:$0xf]
      %v2054 = vld [vmem:[%s1 + $0xfc] sm:$0xf]
      %v2055 = vld [vmem:[%s1 + $0x100] sm:$0xf]
      %v2056 = vld [vmem:[%s1 + $0x104] sm:$0xf]
      %v2057 = vld [vmem:[%s1 + $0x108] sm:$0xf]
      %v2058 = vld [vmem:[%s1 + $0x10c] sm:$0xf]
      %v2059 = vld [vmem:[%s1 + $0x110] sm:$0xf]
      %v2060 = vld [vmem:[%s1 + $0x114] sm:$0xf]
      %v2061 = vld [vmem:[%s1 + $0x118] sm:$0xf]
      %v2062 = vld [vmem:[%s1 + $0x11c] sm:$0xf]
      %v2063 = vld [vmem:[%s1 + $0x120] sm:$0xf]
      %v2064 = vld [vmem:[%s1 + $0x124] sm:$0xf]
      %v2065 = vld [vmem:[%s1 + $0x128] sm:$0xf]
      %v2066 = vld [vmem:[%s1 + $0x12c] sm:$0xf]
      %v2067 = vld [vmem:[%s1 + $0x130] sm:$0xf]
      %v2068 = vld [vmem:[%s1 + $0x134] sm:$0xf]
      %v2069 = vld [vmem:[%s1 + $0x138] sm:$0xf]
      %v2070 = vld [vmem:[%s1 + $0x13c] sm:$0xf]
      %v2071 = vld [vmem:[%s1 + $0x140] sm:$0xf]
      %v2072 = vld [vmem:[%s1 + $0x144] sm:$0xf]
      %v2073 = vld [vmem:[%s1 + $0x148] sm:$0xf]
      %v2074 = vld [vmem:[%s1 + $0x14c] sm:$0xf]
      %v2075 = vld [vmem:[%s1 + $0x150] sm:$0xf]
      %v2076 = vld [vmem:[%s1 + $0x154] sm:$0xf]
      %v2077 = vld [vmem:[%s1 + $0x158] sm:$0xf]
      %v2078 = vld [vmem:[%s1 + $0x15c] sm:$0xf]
      %v2079 = vld [vmem:[%s1 + $0x160] sm:$0xf]
      %v2080 = vld [vmem:[%s1 + $0x164] sm:$0xf]
      %v2081 = vld [vmem:[%s1 + $0x168] sm:$0xf]
      %v2082 = vld [vmem:[%s1 + $0x16c] sm:$0xf]
      %v2083 = vld [vmem:[%s1 + $0x170] sm:$0xf]
      %v2084 = vld [vmem:[%s1 + $0x174] sm:$0xf]
      %v2085 = vld [vmem:[%s1 + $0x178] sm:$0xf]
      %v2086 = vld [vmem:[%s1 + $0x17c] sm:$0xf]
      %v2087 = vld [vmem:[%s1 + $0x180] sm:$0xf]
      %v2088 = vld [vmem:[%s1 + $0x184] sm:$0xf]
      %v2089 = vld [vmem:[%s1 + $0x188] sm:$0xf]
      %v2090 = vld [vmem:[%s1 + $0x18c] sm:$0xf]
      %v2091 = vld [vmem:[%s1 + $0x190] sm:$0xf]
      %v2092 = vld [vmem:[%s1 + $0x194] sm:$0xf]
      %v2093 = vld [vmem:[%s1 + $0x198] sm:$0xf]
      %v2094 = vld [vmem:[%s1 + $0x19c] sm:$0xf]
      %v2095 = vld [vmem:[%s1 + $0x1a0] sm:$0xf]
      %v2096 = vld [vmem:[%s1 + $0x1a4] sm:$0xf]
      %v2097 = vld [vmem:[%s1 + $0x1a8] sm:$0xf]
      %v2098 = vld [vmem:[%s1 + $0x1ac] sm:$0xf]
      %v2099 = vld [vmem:[%s1 + $0x1b0] sm:$0xf]
      %v2100 = vld [vmem:[%s1 + $0x1b4] sm:$0xf]
      %v2101 = vld [vmem:[%s1 + $0x1b8] sm:$0xf]
      %v2102 = vld [vmem:[%s1 + $0x1bc] sm:$0xf]
      %v2103 = vld [vmem:[%s1 + $0x1c0] sm:$0xf]
      %v2104 = vld [vmem:[%s1 + $0x1c4] sm:$0xf]
      %v2105 = vld [vmem:[%s1 + $0x1c8] sm:$0xf]
      %v2106 = vld [vmem:[%s1 + $0x1cc] sm:$0xf]
      %v2107 = vld [vmem:[%s1 + $0x1d0] sm:$0xf]
      %v2108 = vld [vmem:[%s1 + $0x1d4] sm:$0xf]
      %v2109 = vld [vmem:[%s1 + $0x1d8] sm:$0xf]
      %v2110 = vld [vmem:[%s1 + $0x1dc] sm:$0xf]
      %v2111 = vld [vmem:[%s1 + $0x1e0] sm:$0xf]
      %v2112 = vld [vmem:[%s1 + $0x1e4] sm:$0xf]
      %v2113 = vld [vmem:[%s1 + $0x1e8] sm:$0xf]
      %v2114 = vld [vmem:[%s1 + $0x1ec] sm:$0xf]
      %v2115 = vld [vmem:[%s1 + $0x1f0] sm:$0xf]
      %v2116 = vld [vmem:[%s1 + $0x1f4] sm:$0xf]
      %v2117 = vld [vmem:[%s1 + $0x1f8] sm:$0xf]
      %v2118 = vld [vmem:[%s1 + $0x1fc] sm:$0xf]
      %v2119 = vld [vmem:[%s1 + $0x200] sm:$0xf]
      %v2120 = vld [vmem:[%s1 + $0x204] sm:$0xf]
      %v2121 = vld [vmem:[%s1 + $0x208] sm:$0xf]
      %v2122 = vld [vmem:[%s1 + $0x20c] sm:$0xf]
      %v2123 = vld [vmem:[%s1 + $0x210] sm:$0xf]
      %v2124 = vld [vmem:[%s1 + $0x214] sm:$0xf]
      %v2125 = vld [vmem:[%s1 + $0x218] sm:$0xf]
      %v2126 = vld [vmem:[%s1 + $0x21c] sm:$0xf]
      %v2127 = vld [vmem:[%s1 + $0x220] sm:$0xf]
      %v2128 = vld [vmem:[%s1 + $0x224] sm:$0xf]
      %v2129 = vld [vmem:[%s1 + $0x228] sm:$0xf]
      %v2130 = vld [vmem:[%s1 + $0x22c] sm:$0xf]
      %v2131 = vld [vmem:[%s1 + $0x230] sm:$0xf]
      %v2132 = vld [vmem:[%s1 + $0x234] sm:$0xf]
      %v2133 = vld [vmem:[%s1 + $0x238] sm:$0xf]
      %v2134 = vld [vmem:[%s1 + $0x23c] sm:$0xf]
      %v2279 = vunpack.c.l.b16 %v1991
      %v2280 = vunpack.c.l.b16 %v1992
      %v2281 = vunpack.c.l.b16 %v1993
      %v2282 = vunpack.c.l.b16 %v1994
      %v2283 = vunpack.c.l.b16 %v1995
      %v2284 = vunpack.c.l.b16 %v1996
      %v2285 = vunpack.c.l.b16 %v1997
      %v2286 = vunpack.c.l.b16 %v1998
      %v2287 = vunpack.c.l.b16 %v1999
      %v2288 = vunpack.c.l.b16 %v2000
      %v2289 = vunpack.c.l.b16 %v2001
      %v2290 = vunpack.c.l.b16 %v2002
      %v2291 = vunpack.c.l.b16 %v2003
      %v2292 = vunpack.c.l.b16 %v2004
      %v2293 = vunpack.c.l.b16 %v2005
      %v2294 = vunpack.c.l.b16 %v2006
      %v2295 = vunpack.c.l.b16 %v2007
      %v2296 = vunpack.c.l.b16 %v2008
      %v2297 = vunpack.c.l.b16 %v2009
      %v2298 = vunpack.c.l.b16 %v2010
      %v2299 = vunpack.c.l.b16 %v2011
      %v2300 = vunpack.c.l.b16 %v2012
      %v2301 = vunpack.c.l.b16 %v2013
      %v2302 = vunpack.c.l.b16 %v2014
      %v2303 = vunpack.c.l.b16 %v2015
      %v2304 = vunpack.c.l.b16 %v2016
      %v2305 = vunpack.c.l.b16 %v2017
      %v2306 = vunpack.c.l.b16 %v2018
      %v2307 = vunpack.c.l.b16 %v2019
      %v2308 = vunpack.c.l.b16 %v2020
      %v2309 = vunpack.c.l.b16 %v2021
      %v2310 = vunpack.c.l.b16 %v2022
      %v2311 = vunpack.c.l.b16 %v2023
      %v2312 = vunpack.c.l.b16 %v2024
      %v2313 = vunpack.c.l.b16 %v2025
      %v2314 = vunpack.c.l.b16 %v2026
      %v2315 = vunpack.c.l.b16 %v2027
      %v2316 = vunpack.c.l.b16 %v2028
      %v2317 = vunpack.c.l.b16 %v2029
      %v2318 = vunpack.c.l.b16 %v2030
      %v2319 = vunpack.c.l.b16 %v2031
      %v2320 = vunpack.c.l.b16 %v2032
      %v2321 = vunpack.c.l.b16 %v2033
      %v2322 = vunpack.c.l.b16 %v2034
      %v2323 = vunpack.c.l.b16 %v2035
      %v2324 = vunpack.c.l.b16 %v2036
      %v2325 = vunpack.c.l.b16 %v2037
      %v2326 = vunpack.c.l.b16 %v2038
      %v2327 = vunpack.c.l.b16 %v2039
      %v2328 = vunpack.c.l.b16 %v2040
      %v2329 = vunpack.c.l.b16 %v2041
      %v2330 = vunpack.c.l.b16 %v2042
      %v2331 = vunpack.c.l.b16 %v2043
      %v2332 = vunpack.c.l.b16 %v2044
      %v2333 = vunpack.c.l.b16 %v2045
      %v2334 = vunpack.c.l.b16 %v2046
      %v2335 = vunpack.c.l.b16 %v2047
      %v2336 = vunpack.c.l.b16 %v2048
      %v2337 = vunpack.c.l.b16 %v2049
      %v2338 = vunpack.c.l.b16 %v2050
      %v2339 = vunpack.c.l.b16 %v2051
      %v2340 = vunpack.c.l.b16 %v2052
      %v2341 = vunpack.c.l.b16 %v2053
      %v2342 = vunpack.c.l.b16 %v2054
      %v2343 = vunpack.c.l.b16 %v2055
      %v2344 = vunpack.c.l.b16 %v2056
      %v2345 = vunpack.c.l.b16 %v2057
      %v2346 = vunpack.c.l.b16 %v2058
      %v2347 = vunpack.c.l.b16 %v2059
      %v2348 = vunpack.c.l.b16 %v2060
      %v2349 = vunpack.c.l.b16 %v2061
      %v2350 = vunpack.c.l.b16 %v2062
      %v2351 = vunpack.c.l.b16 %v2063
      %v2352 = vunpack.c.l.b16 %v2064
      %v2353 = vunpack.c.l.b16 %v2065
      %v2354 = vunpack.c.l.b16 %v2066
      %v2355 = vunpack.c.l.b16 %v2067
      %v2356 = vunpack.c.l.b16 %v2068
      %v2357 = vunpack.c.l.b16 %v2069
      %v2358 = vunpack.c.l.b16 %v2070
      %v2359 = vunpack.c.l.b16 %v2071
      %v2360 = vunpack.c.l.b16 %v2072
      %v2361 = vunpack.c.l.b16 %v2073
      %v2362 = vunpack.c.l.b16 %v2074
      %v2363 = vunpack.c.l.b16 %v2075
      %v2364 = vunpack.c.l.b16 %v2076
      %v2365 = vunpack.c.l.b16 %v2077
      %v2366 = vunpack.c.l.b16 %v2078
      %v2367 = vunpack.c.l.b16 %v2079
      %v2368 = vunpack.c.l.b16 %v2080
      %v2369 = vunpack.c.l.b16 %v2081
      %v2370 = vunpack.c.l.b16 %v2082
      %v2371 = vunpack.c.l.b16 %v2083
      %v2372 = vunpack.c.l.b16 %v2084
      %v2373 = vunpack.c.l.b16 %v2085
      %v2374 = vunpack.c.l.b16 %v2086
      %v2375 = vunpack.c.l.b16 %v2087
      %v2376 = vunpack.c.l.b16 %v2088
      %v2377 = vunpack.c.l.b16 %v2089
      %v2378 = vunpack.c.l.b16 %v2090
      %v2379 = vunpack.c.l.b16 %v2091
      %v2380 = vunpack.c.l.b16 %v2092
      %v2381 = vunpack.c.l.b16 %v2093
      %v2382 = vunpack.c.l.b16 %v2094
      %v2383 = vunpack.c.l.b16 %v2095
      %v2384 = vunpack.c.l.b16 %v2096
      %v2385 = vunpack.c.l.b16 %v2097
      %v2386 = vunpack.c.l.b16 %v2098
      %v2387 = vunpack.c.l.b16 %v2099
      %v2388 = vunpack.c.l.b16 %v2100
      %v2389 = vunpack.c.l.b16 %v2101
      %v2390 = vunpack.c.l.b16 %v2102
      %v2391 = vunpack.c.l.b16 %v2103
      %v2392 = vunpack.c.l.b16 %v2104
      %v2393 = vunpack.c.l.b16 %v2105
      %v2394 = vunpack.c.l.b16 %v2106
      %v2395 = vunpack.c.l.b16 %v2107
      %v2396 = vunpack.c.l.b16 %v2108
      %v2397 = vunpack.c.l.b16 %v2109
      %v2398 = vunpack.c.l.b16 %v2110
      %v2399 = vunpack.c.l.b16 %v2111
      %v2400 = vunpack.c.l.b16 %v2112
      %v2401 = vunpack.c.l.b16 %v2113
      %v2402 = vunpack.c.l.b16 %v2114
      %v2403 = vunpack.c.l.b16 %v2115
      %v2404 = vunpack.c.l.b16 %v2116
      %v2405 = vunpack.c.l.b16 %v2117
      %v2406 = vunpack.c.l.b16 %v2118
      %v2407 = vunpack.c.l.b16 %v2119
      %v2408 = vunpack.c.l.b16 %v2120
      %v2409 = vunpack.c.l.b16 %v2121
      %v2410 = vunpack.c.l.b16 %v2122
      %v2411 = vunpack.c.l.b16 %v2123
      %v2412 = vunpack.c.l.b16 %v2124
      %v2413 = vunpack.c.l.b16 %v2125
      %v2414 = vunpack.c.l.b16 %v2126
      %v2415 = vunpack.c.l.b16 %v2127
      %v2416 = vunpack.c.l.b16 %v2128
      %v2417 = vunpack.c.l.b16 %v2129
      %v2418 = vunpack.c.l.b16 %v2130
      %v2419 = vunpack.c.l.b16 %v2131
      %v2420 = vunpack.c.l.b16 %v2132
      %v2421 = vunpack.c.l.b16 %v2133
      %v2422 = vunpack.c.l.b16 %v2134
      %v2423 = vpack.c.b16 %v2280, %v2279
      %v2424 = vpack.c.b16 %v2282, %v2281
      %v2425 = vpack.c.b16 %v2284, %v2283
      %v2426 = vpack.c.b16 %v2286, %v2285
      %v2427 = vpack.c.b16 %v2288, %v2287
      %v2428 = vpack.c.b16 %v2290, %v2289
      %v2429 = vpack.c.b16 %v2292, %v2291
      %v2430 = vpack.c.b16 %v2294, %v2293
      %v2431 = vpack.c.b16 %v2296, %v2295
      %v2432 = vpack.c.b16 %v2298, %v2297
      %v2433 = vpack.c.b16 %v2300, %v2299
      %v2434 = vpack.c.b16 %v2302, %v2301
      %v2435 = vpack.c.b16 %v2304, %v2303
      %v2436 = vpack.c.b16 %v2306, %v2305
      %v2437 = vpack.c.b16 %v2308, %v2307
      %v2438 = vpack.c.b16 %v2310, %v2309
      %v2439 = vpack.c.b16 %v2312, %v2311
      %v2440 = vpack.c.b16 %v2314, %v2313
      %v2441 = vpack.c.b16 %v2316, %v2315
      %v2442 = vpack.c.b16 %v2318, %v2317
      %v2443 = vpack.c.b16 %v2320, %v2319
      %v2444 = vpack.c.b16 %v2322, %v2321
      %v2445 = vpack.c.b16 %v2324, %v2323
      %v2446 = vpack.c.b16 %v2326, %v2325
      %v2447 = vpack.c.b16 %v2328, %v2327
      %v2448 = vpack.c.b16 %v2330, %v2329
      %v2449 = vpack.c.b16 %v2332, %v2331
      %v2450 = vpack.c.b16 %v2334, %v2333
      %v2451 = vpack.c.b16 %v2336, %v2335
      %v2452 = vpack.c.b16 %v2338, %v2337
      %v2453 = vpack.c.b16 %v2340, %v2339
      %v2454 = vpack.c.b16 %v2342, %v2341
      %v2455 = vpack.c.b16 %v2344, %v2343
      %v2456 = vpack.c.b16 %v2346, %v2345
      %v2457 = vpack.c.b16 %v2348, %v2347
      %v2458 = vpack.c.b16 %v2350, %v2349
      %v2459 = vpack.c.b16 %v2352, %v2351
      %v2460 = vpack.c.b16 %v2354, %v2353
      %v2461 = vpack.c.b16 %v2356, %v2355
      %v2462 = vpack.c.b16 %v2358, %v2357
      %v2463 = vpack.c.b16 %v2360, %v2359
      %v2464 = vpack.c.b16 %v2362, %v2361
      %v2465 = vpack.c.b16 %v2364, %v2363
      %v2466 = vpack.c.b16 %v2366, %v2365
      %v2467 = vpack.c.b16 %v2368, %v2367
      %v2468 = vpack.c.b16 %v2370, %v2369
      %v2469 = vpack.c.b16 %v2372, %v2371
      %v2470 = vpack.c.b16 %v2374, %v2373
      %v2471 = vpack.c.b16 %v2376, %v2375
      %v2472 = vpack.c.b16 %v2378, %v2377
      %v2473 = vpack.c.b16 %v2380, %v2379
      %v2474 = vpack.c.b16 %v2382, %v2381
      %v2475 = vpack.c.b16 %v2384, %v2383
      %v2476 = vpack.c.b16 %v2386, %v2385
      %v2477 = vpack.c.b16 %v2388, %v2387
      %v2478 = vpack.c.b16 %v2390, %v2389
      %v2479 = vpack.c.b16 %v2392, %v2391
      %v2480 = vpack.c.b16 %v2394, %v2393
      %v2481 = vpack.c.b16 %v2396, %v2395
      %v2482 = vpack.c.b16 %v2398, %v2397
      %v2483 = vpack.c.b16 %v2400, %v2399
      %v2484 = vpack.c.b16 %v2402, %v2401
      %v2485 = vpack.c.b16 %v2404, %v2403
      %v2486 = vpack.c.b16 %v2406, %v2405
      %v2487 = vpack.c.b16 %v2408, %v2407
      %v2488 = vpack.c.b16 %v2410, %v2409
      %v2489 = vpack.c.b16 %v2412, %v2411
      %v2490 = vpack.c.b16 %v2414, %v2413
      %v2491 = vpack.c.b16 %v2416, %v2415
      %v2492 = vpack.c.b16 %v2418, %v2417
      %v2493 = vpack.c.b16 %v2420, %v2419
      %v2494 = vpack.c.b16 %v2422, %v2421
      %2567 = vmatprep.subr.bf16.mxu0 0
      %2568 = vmatpush1.bf16.msra.mxu0 %v2423
      %2569 = vmatprep.subr.bf16.mxu0 0
      %2570 = vmatpush1.bf16.msra.mxu0 %v2424
      %2571 = vmatprep.subr.bf16.mxu0 0
      %2572 = vmatpush1.bf16.msra.mxu0 %v2425
      %2573 = vmatprep.subr.bf16.mxu0 0
      %2574 = vmatpush1.bf16.msra.mxu0 %v2426
      %2575 = vmatprep.subr.bf16.mxu0 0
      %2576 = vmatpush1.bf16.msra.mxu0 %v2427
      %2577 = vmatprep.subr.bf16.mxu0 0
      %2578 = vmatpush1.bf16.msra.mxu0 %v2428
      %2579 = vmatprep.subr.bf16.mxu0 0
      %2580 = vmatpush1.bf16.msra.mxu0 %v2429
      %2581 = vmatprep.subr.bf16.mxu0 0
      %2582 = vmatpush1.bf16.msra.mxu0 %v2430
      %2583 = vmatprep.subr.bf16.mxu0 0
      %2584 = vmatpush1.bf16.msra.mxu0 %v2431
      %2585 = vmatprep.subr.bf16.mxu0 0
      %2586 = vmatpush1.bf16.msra.mxu0 %v2432
      %2587 = vmatprep.subr.bf16.mxu0 0
      %2588 = vmatpush1.bf16.msra.mxu0 %v2433
      %2589 = vmatprep.subr.bf16.mxu0 0
      %2590 = vmatpush1.bf16.msra.mxu0 %v2434
      %2591 = vmatprep.subr.bf16.mxu0 0
      %2592 = vmatpush1.bf16.msra.mxu0 %v2435
      %2593 = vmatprep.subr.bf16.mxu0 0
      %2594 = vmatpush1.bf16.msra.mxu0 %v2436
      %2595 = vmatprep.subr.bf16.mxu0 0
      %2596 = vmatpush1.bf16.msra.mxu0 %v2437
      %2597 = vmatprep.subr.bf16.mxu0 0
      %2598 = vmatpush1.bf16.msra.mxu0 %v2438
      %2599 = vmatprep.mubr.bf16.mxu0 %v1735
      %2600 = vmatmul.mubr.bf16.gmra.mrb[0].mxu0 %v1703
      %v2601 = vpop.f32.mrb[0].mxu0
      %v2602 = vadd.f32 0.0, %v2601
      %v2603 = vpop.f32.mrb[0].mxu0
      %v2604 = vpop.f32.mrb[0].mxu0
      %v2605 = vadd.f32 0.0, %v2604
      %v2606 = vpop.f32.mrb[0].mxu0
      %2607 = vmatprep.mubr.bf16.mxu0 %v1736
      %2608 = vmatmul.mubr.bf16.gmra.mrb[0].mxu0 %v1704
      %v2609 = vpop.f32.mrb[0].mxu0
      %v2610 = vadd.f32 0.0, %v2609
      %v2611 = vpop.f32.mrb[0].mxu0
      %v2612 = vpop.f32.mrb[0].mxu0
      %v2613 = vadd.f32 0.0, %v2612
      %v2614 = vpop.f32.mrb[0].mxu0
      %2615 = vmatprep.mubr.bf16.mxu0 %v1737
      %2616 = vmatmul.mubr.bf16.gmra.mrb[0].mxu0 %v1705
      %v2617 = vpop.f32.mrb[0].mxu0
      %v2618 = vadd.f32 0.0, %v2617
      %v2619 = vpop.f32.mrb[0].mxu0
      %v2620 = vpop.f32.mrb[0].mxu0
      %v2621 = vadd.f32 0.0, %v2620
      %v2622 = vpop.f32.mrb[0].mxu0
      %2623 = vmatprep.mubr.bf16.mxu0 %v1738
      %2624 = vmatmul.mubr.bf16.gmra.mrb[0].mxu0 %v1706
      %v2625 = vpop.f32.mrb[0].mxu0
      %v2626 = vadd.f32 0.0, %v2625
      %v2627 = vpop.f32.mrb[0].mxu0
      %v2628 = vpop.f32.mrb[0].mxu0
      %v2629 = vadd.f32 0.0, %v2628
      %v2630 = vpop.f32.mrb[0].mxu0
      %2631 = vmatprep.mubr.bf16.mxu0 %v1739
      %2632 = vmatmul.mubr.bf16.gmra.mrb[0].mxu0 %v1707
      %v2633 = vpop.f32.mrb[0].mxu0
      %v2634 = vadd.f32 0.0, %v2633
      %v2635 = vpop.f32.mrb[0].mxu0
      %v2636 = vpop.f32.mrb[0].mxu0
      %v2637 = vadd.f32 0.0, %v2636
      %v2638 = vpop.f32.mrb[0].mxu0
      %2639 = vmatprep.mubr.bf16.mxu0 %v1740
      %2640 = vmatmul.mubr.bf16.gmra.mrb[0].mxu0 %v1708
      %v2641 = vpop.f32.mrb[0].mxu0
      %v2642 = vadd.f32 0.0, %v2641
      %v2643 = vpop.f32.mrb[0].mxu0
      %v2644 = vpop.f32.mrb[0].mxu0
      %v2645 = vadd.f32 0.0, %v2644
      %v2646 = vpop.f32.mrb[0].mxu0
      %2647 = vmatprep.mubr.bf16.mxu0 %v1741
      %2648 = vmatmul.mubr.bf16.gmra.mrb[0].mxu0 %v1709
      %v2649 = vpop.f32.mrb[0].mxu0
      %v2650 = vadd.f32 0.0, %v2649
      %v2651 = vpop.f32.mrb[0].mxu0
      %v2652 = vpop.f32.mrb[0].mxu0
      %v2653 = vadd.f32 0.0, %v2652
      %v2654 = vpop.f32.mrb[0].mxu0
      %2655 = vmatprep.mubr.bf16.mxu0 %v1742
      %2656 = vmatmul.mubr.bf16.gmra.mrb[0].mxu0 %v1710
      %v2657 = vpop.f32.mrb[0].mxu0
      %v2658 = vadd.f32 0.0, %v2657
      %v2659 = vpop.f32.mrb[0].mxu0
      %v2660 = vpop.f32.mrb[0].mxu0
      %v2661 = vadd.f32 0.0, %v2660
      %v2662 = vpop.f32.mrb[0].mxu0
      %2663 = vdwg.mxu0
      %2664 = vmatprep.subr.bf16.mxu0 0
      %2665 = vmatpush1.bf16.msra.mxu0 %v2439
      %2666 = vmatprep.subr.bf16.mxu0 0
      %2667 = vmatpush1.bf16.msra.mxu0 %v2440
      %2668 = vmatprep.subr.bf16.mxu0 0
      %2669 = vmatpush1.bf16.msra.mxu0 %v2441
      %2670 = vmatprep.subr.bf16.mxu0 0
      %2671 = vmatpush1.bf16.msra.mxu0 %v2442
      %2672 = vmatprep.subr.bf16.mxu0 0
      %2673 = vmatpush1.bf16.msra.mxu0 %v2443
      %2674 = vmatprep.subr.bf16.mxu0 0
      %2675 = vmatpush1.bf16.msra.mxu0 %v2444
      %2676 = vmatprep.subr.bf16.mxu0 0
      %2677 = vmatpush1.bf16.msra.mxu0 %v2445
      %2678 = vmatprep.subr.bf16.mxu0 0
      %2679 = vmatpush1.bf16.msra.mxu0 %v2446
      %2680 = vmatprep.subr.bf16.mxu0 0
      %2681 = vmatpush1.bf16.msra.mxu0 %v2447
      %2682 = vmatprep.subr.bf16.mxu0 0
      %2683 = vmatpush1.bf16.msra.mxu0 %v2448
      %2684 = vmatprep.subr.bf16.mxu0 0
      %2685 = vmatpush1.bf16.msra.mxu0 %v2449
      %2686 = vmatprep.subr.bf16.mxu0 0
      %2687 = vmatpush1.bf16.msra.mxu0 %v2450
      %2688 = vmatprep.subr.bf16.mxu0 0
      %2689 = vmatpush1.bf16.msra.mxu0 %v2451
      %2690 = vmatprep.subr.bf16.mxu0 0
      %2691 = vmatpush1.bf16.msra.mxu0 %v2452
      %2692 = vmatprep.subr.bf16.mxu0 0
      %2693 = vmatpush1.bf16.msra.mxu0 %v2453
      %2694 = vmatprep.subr.bf16.mxu0 0
      %2695 = vmatpush1.bf16.msra.mxu0 %v2454
      %2696 = vmatprep.mubr.bf16.mxu0 %v1807
      %2697 = vmatmul.mubr.bf16.gmra.mrb[0].mxu0 %v1767
      %v2698 = vpop.f32.mrb[0].mxu0
      %v2699 = vadd.f32 %v2602, %v2698
      %v2700 = vpop.f32.mrb[0].mxu0
      %v2701 = vpop.f32.mrb[0].mxu0
      %v2702 = vadd.f32 %v2605, %v2701
      %v2703 = vpop.f32.mrb[0].mxu0
      %2704 = vmatprep.mubr.bf16.mxu0 %v1808
      %2705 = vmatmul.mubr.bf16.gmra.mrb[0].mxu0 %v1768
      %v2706 = vpop.f32.mrb[0].mxu0
      %v2707 = vadd.f32 %v2610, %v2706
      %v2708 = vpop.f32.mrb[0].mxu0
      %v2709 = vpop.f32.mrb[0].mxu0
      %v2710 = vadd.f32 %v2613, %v2709
      %v2711 = vpop.f32.mrb[0].mxu0
      %2712 = vmatprep.mubr.bf16.mxu0 %v1809
      %2713 = vmatmul.mubr.bf16.gmra.mrb[0].mxu0 %v1769
      %v2714 = vpop.f32.mrb[0].mxu0
      %v2715 = vadd.f32 %v2618, %v2714
      %v2716 = vpop.f32.mrb[0].mxu0
      %v2717 = vpop.f32.mrb[0].mxu0
      %v2718 = vadd.f32 %v2621, %v2717
      %v2719 = vpop.f32.mrb[0].mxu0
      %2720 = vmatprep.mubr.bf16.mxu0 %v1810
      %2721 = vmatmul.mubr.bf16.gmra.mrb[0].mxu0 %v1770
      %v2722 = vpop.f32.mrb[0].mxu0
      %v2723 = vadd.f32 %v2626, %v2722
      %v2724 = vpop.f32.mrb[0].mxu0
      %v2725 = vpop.f32.mrb[0].mxu0
      %v2726 = vadd.f32 %v2629, %v2725
      %v2727 = vpop.f32.mrb[0].mxu0
      %2728 = vmatprep.mubr.bf16.mxu0 %v1811
      %2729 = vmatmul.mubr.bf16.gmra.mrb[0].mxu0 %v1771
      %v2730 = vpop.f32.mrb[0].mxu0
      %v2731 = vadd.f32 %v2634, %v2730
      %v2732 = vpop.f32.mrb[0].mxu0
      %v2733 = vpop.f32.mrb[0].mxu0
      %v2734 = vadd.f32 %v2637, %v2733
      %v2735 = vpop.f32.mrb[0].mxu0
      %2736 = vmatprep.mubr.bf16.mxu0 %v1812
      %2737 = vmatmul.mubr.bf16.gmra.mrb[0].mxu0 %v1772
      %v2738 = vpop.f32.mrb[0].mxu0
      %v2739 = vadd.f32 %v2642, %v2738
      %v2740 = vpop.f32.mrb[0].mxu0
      %v2741 = vpop.f32.mrb[0].mxu0
      %v2742 = vadd.f32 %v2645, %v2741
      %v2743 = vpop.f32.mrb[0].mxu0
      %2744 = vmatprep.mubr.bf16.mxu0 %v1813
      %2745 = vmatmul.mubr.bf16.gmra.mrb[0].mxu0 %v1773
      %v2746 = vpop.f32.mrb[0].mxu0
      %v2747 = vadd.f32 %v2650, %v2746
      %v2748 = vpop.f32.mrb[0].mxu0
      %v2749 = vpop.f32.mrb[0].mxu0
      %v2750 = vadd.f32 %v2653, %v2749
      %v2751 = vpop.f32.mrb[0].mxu0
      %2752 = vmatprep.mubr.bf16.mxu0 %v1814
      %2753 = vmatmul.mubr.bf16.gmra.mrb[0].mxu0 %v1774
      %v2754 = vpop.f32.mrb[0].mxu0
      %v2755 = vadd.f32 %v2658, %v2754
      %v2756 = vpop.f32.mrb[0].mxu0
      %v2757 = vpop.f32.mrb[0].mxu0
      %v2758 = vadd.f32 %v2661, %v2757
      %v2759 = vpop.f32.mrb[0].mxu0
      %2760 = vdwg.mxu0
      %2761 = vmatprep.subr.bf16.mxu0 0
      %2762 = vmatpush1.bf16.msra.mxu0 %v2455
      %2763 = vmatprep.subr.bf16.mxu0 0
      %2764 = vmatpush1.bf16.msra.mxu0 %v2456
      %2765 = vmatprep.subr.bf16.mxu0 0
      %2766 = vmatpush1.bf16.msra.mxu0 %v2457
      %2767 = vmatprep.subr.bf16.mxu0 0
      %2768 = vmatpush1.bf16.msra.mxu0 %v2458
      %2769 = vmatprep.subr.bf16.mxu0 0
      %2770 = vmatpush1.bf16.msra.mxu0 %v2459
      %2771 = vmatprep.subr.bf16.mxu0 0
      %2772 = vmatpush1.bf16.msra.mxu0 %v2460
      %2773 = vmatprep.subr.bf16.mxu0 0
      %2774 = vmatpush1.bf16.msra.mxu0 %v2461
      %2775 = vmatprep.subr.bf16.mxu0 0
      %2776 = vmatpush1.bf16.msra.mxu0 %v2462
      %2777 = vmatprep.subr.bf16.mxu0 0
      %2778 = vmatpush1.bf16.msra.mxu0 %v2463
      %2779 = vmatprep.subr.bf16.mxu0 0
      %2780 = vmatpush1.bf16.msra.mxu0 %v2464
      %2781 = vmatprep.subr.bf16.mxu0 0
      %2782 = vmatpush1.bf16.msra.mxu0 %v2465
      %2783 = vmatprep.subr.bf16.mxu0 0
      %2784 = vmatpush1.bf16.msra.mxu0 %v2466
      %2785 = vmatprep.subr.bf16.mxu0 0
      %2786 = vmatpush1.bf16.msra.mxu0 %v2467
      %2787 = vmatprep.subr.bf16.mxu0 0
      %2788 = vmatpush1.bf16.msra.mxu0 %v2468
      %2789 = vmatprep.subr.bf16.mxu0 0
      %2790 = vmatpush1.bf16.msra.mxu0 %v2469
      %2791 = vmatprep.subr.bf16.mxu0 0
      %2792 = vmatpush1.bf16.msra.mxu0 %v2470
      %2793 = vmatprep.mubr.bf16.mxu0 %v1871
      %2794 = vmatmul.mubr.bf16.gmra.mrb[0].mxu0 %v1839
      %v2795 = vpop.f32.mrb[0].mxu0
      %v2796 = vadd.f32 %v2699, %v2795
      %v2797 = vpop.f32.mrb[0].mxu0
      %v2798 = vpop.f32.mrb[0].mxu0
      %v2799 = vadd.f32 %v2702, %v2798
      %v2800 = vpop.f32.mrb[0].mxu0
      %2801 = vmatprep.mubr.bf16.mxu0 %v1872
      %2802 = vmatmul.mubr.bf16.gmra.mrb[0].mxu0 %v1840
      %v2803 = vpop.f32.mrb[0].mxu0
      %v2804 = vadd.f32 %v2707, %v2803
      %v2805 = vpop.f32.mrb[0].mxu0
      %v2806 = vpop.f32.mrb[0].mxu0
      %v2807 = vadd.f32 %v2710, %v2806
      %v2808 = vpop.f32.mrb[0].mxu0
      %2809 = vmatprep.mubr.bf16.mxu0 %v1873
      %2810 = vmatmul.mubr.bf16.gmra.mrb[0].mxu0 %v1841
      %v2811 = vpop.f32.mrb[0].mxu0
      %v2812 = vadd.f32 %v2715, %v2811
      %v2813 = vpop.f32.mrb[0].mxu0
      %v2814 = vpop.f32.mrb[0].mxu0
      %v2815 = vadd.f32 %v2718, %v2814
      %v2816 = vpop.f32.mrb[0].mxu0
      %2817 = vmatprep.mubr.bf16.mxu0 %v1874
      %2818 = vmatmul.mubr.bf16.gmra.mrb[0].mxu0 %v1842
      %v2819 = vpop.f32.mrb[0].mxu0
      %v2820 = vadd.f32 %v2723, %v2819
      %v2821 = vpop.f32.mrb[0].mxu0
      %v2822 = vpop.f32.mrb[0].mxu0
      %v2823 = vadd.f32 %v2726, %v2822
      %v2824 = vpop.f32.mrb[0].mxu0
      %2825 = vmatprep.mubr.bf16.mxu0 %v1875
      %2826 = vmatmul.mubr.bf16.gmra.mrb[0].mxu0 %v1843
      %v2827 = vpop.f32.mrb[0].mxu0
      %v2828 = vadd.f32 %v2731, %v2827
      %v2829 = vpop.f32.mrb[0].mxu0
      %v2830 = vpop.f32.mrb[0].mxu0
      %v2831 = vadd.f32 %v2734, %v2830
      %v2832 = vpop.f32.mrb[0].mxu0
      %2833 = vmatprep.mubr.bf16.mxu0 %v1876
      %2834 = vmatmul.mubr.bf16.gmra.mrb[0].mxu0 %v1844
      %v2835 = vpop.f32.mrb[0].mxu0
      %v2836 = vadd.f32 %v2739, %v2835
      %v2837 = vpop.f32.mrb[0].mxu0
      %v2838 = vpop.f32.mrb[0].mxu0
      %v2839 = vadd.f32 %v2742, %v2838
      %v2840 = vpop.f32.mrb[0].mxu0
      %2841 = vmatprep.mubr.bf16.mxu0 %v1877
      %2842 = vmatmul.mubr.bf16.gmra.mrb[0].mxu0 %v1845
      %v2843 = vpop.f32.mrb[0].mxu0
      %v2844 = vadd.f32 %v2747, %v2843
      %v2845 = vpop.f32.mrb[0].mxu0
      %v2846 = vpop.f32.mrb[0].mxu0
      %v2847 = vadd.f32 %v2750, %v2846
      %v2848 = vpop.f32.mrb[0].mxu0
      %2849 = vmatprep.mubr.bf16.mxu0 %v1878
      %2850 = vmatmul.mubr.bf16.gmra.mrb[0].mxu0 %v1846
      %v2851 = vpop.f32.mrb[0].mxu0
      %v2852 = vadd.f32 %v2755, %v2851
      %v2853 = vpop.f32.mrb[0].mxu0
      %v2854 = vpop.f32.mrb[0].mxu0
      %v2855 = vadd.f32 %v2758, %v2854
      %v2856 = vpop.f32.mrb[0].mxu0
      %2857 = vdwg.mxu0
      %2858 = vmatprep.subr.bf16.mxu0 0
      %2859 = vmatpush1.bf16.msra.mxu0 %v2471
      %2860 = vmatprep.subr.bf16.mxu0 0
      %2861 = vmatpush1.bf16.msra.mxu0 %v2472
      %2862 = vmatprep.subr.bf16.mxu0 0
      %2863 = vmatpush1.bf16.msra.mxu0 %v2473
      %2864 = vmatprep.subr.bf16.mxu0 0
      %2865 = vmatpush1.bf16.msra.mxu0 %v2474
      %2866 = vmatprep.subr.bf16.mxu0 0
      %2867 = vmatpush1.bf16.msra.mxu0 %v2475
      %2868 = vmatprep.subr.bf16.mxu0 0
      %2869 = vmatpush1.bf16.msra.mxu0 %v2476
      %2870 = vmatprep.subr.bf16.mxu0 0
      %2871 = vmatpush1.bf16.msra.mxu0 %v2477
      %2872 = vmatprep.subr.bf16.mxu0 0
      %2873 = vmatpush1.bf16.msra.mxu0 %v2478
      %2874 = vmatprep.subr.bf16.mxu0 0
      %2875 = vmatpush1.bf16.msra.mxu0 %v2479
      %2876 = vmatprep.subr.bf16.mxu0 0
      %2877 = vmatpush1.bf16.msra.mxu0 %v2480
      %2878 = vmatprep.subr.bf16.mxu0 0
      %2879 = vmatpush1.bf16.msra.mxu0 %v2481
      %2880 = vmatprep.subr.bf16.mxu0 0
      %2881 = vmatpush1.bf16.msra.mxu0 %v2482
      %2882 = vmatprep.subr.bf16.mxu0 0
      %2883 = vmatpush1.bf16.msra.mxu0 %v2483
      %2884 = vmatprep.subr.bf16.mxu0 0
      %2885 = vmatpush1.bf16.msra.mxu0 %v2484
      %2886 = vmatprep.subr.bf16.mxu0 0
      %2887 = vmatpush1.bf16.msra.mxu0 %v2485
      %2888 = vmatprep.subr.bf16.mxu0 0
      %2889 = vmatpush1.bf16.msra.mxu0 %v2486
      %2890 = vmatprep.mubr.bf16.mxu0 %v1943
      %2891 = vmatmul.mubr.bf16.gmra.mrb[0].mxu0 %v1911
      %v2892 = vpop.f32.mrb[0].mxu0
      %v2893 = vadd.f32 %v2796, %v2892
      %v2894 = vpop.f32.mrb[0].mxu0
      %v2895 = vpop.f32.mrb[0].mxu0
      %v2896 = vadd.f32 %v2799, %v2895
      %v2897 = vpop.f32.mrb[0].mxu0
      %2898 = vmatprep.mubr.bf16.mxu0 %v1944
      %2899 = vmatmul.mubr.bf16.gmra.mrb[0].mxu0 %v1912
      %v2900 = vpop.f32.mrb[0].mxu0
      %v2901 = vadd.f32 %v2804, %v2900
      %v2902 = vpop.f32.mrb[0].mxu0
      %v2903 = vpop.f32.mrb[0].mxu0
      %v2904 = vadd.f32 %v2807, %v2903
      %v2905 = vpop.f32.mrb[0].mxu0
      %2906 = vmatprep.mubr.bf16.mxu0 %v1945
      %2907 = vmatmul.mubr.bf16.gmra.mrb[0].mxu0 %v1913
      %v2908 = vpop.f32.mrb[0].mxu0
      %v2909 = vadd.f32 %v2812, %v2908
      %v2910 = vpop.f32.mrb[0].mxu0
      %v2911 = vpop.f32.mrb[0].mxu0
      %v2912 = vadd.f32 %v2815, %v2911
      %v2913 = vpop.f32.mrb[0].mxu0
      %2914 = vmatprep.mubr.bf16.mxu0 %v1946
      %2915 = vmatmul.mubr.bf16.gmra.mrb[0].mxu0 %v1914
      %v2916 = vpop.f32.mrb[0].mxu0
      %v2917 = vadd.f32 %v2820, %v2916
      %v2918 = vpop.f32.mrb[0].mxu0
      %v2919 = vpop.f32.mrb[0].mxu0
      %v2920 = vadd.f32 %v2823, %v2919
      %v2921 = vpop.f32.mrb[0].mxu0
      %2922 = vmatprep.mubr.bf16.mxu0 %v1947
      %2923 = vmatmul.mubr.bf16.gmra.mrb[0].mxu0 %v1915
      %v2924 = vpop.f32.mrb[0].mxu0
      %v2925 = vadd.f32 %v2828, %v2924
      %v2926 = vpop.f32.mrb[0].mxu0
      %v2927 = vpop.f32.mrb[0].mxu0
      %v2928 = vadd.f32 %v2831, %v2927
      %v2929 = vpop.f32.mrb[0].mxu0
      %2930 = vmatprep.mubr.bf16.mxu0 %v1948
      %2931 = vmatmul.mubr.bf16.gmra.mrb[0].mxu0 %v1916
      %v2932 = vpop.f32.mrb[0].mxu0
      %v2933 = vadd.f32 %v2836, %v2932
      %v2934 = vpop.f32.mrb[0].mxu0
      %v2935 = vpop.f32.mrb[0].mxu0
      %v2936 = vadd.f32 %v2839, %v2935
      %v2937 = vpop.f32.mrb[0].mxu0
      %2938 = vmatprep.mubr.bf16.mxu0 %v1949
      %2939 = vmatmul.mubr.bf16.gmra.mrb[0].mxu0 %v1917
      %v2940 = vpop.f32.mrb[0].mxu0
      %v2941 = vadd.f32 %v2844, %v2940
      %v2942 = vpop.f32.mrb[0].mxu0
      %v2943 = vpop.f32.mrb[0].mxu0
      %v2944 = vadd.f32 %v2847, %v2943
      %v2945 = vpop.f32.mrb[0].mxu0
      %2946 = vmatprep.mubr.bf16.mxu0 %v1950
      %2947 = vmatmul.mubr.bf16.gmra.mrb[0].mxu0 %v1918
      %v2948 = vpop.f32.mrb[0].mxu0
      %v2949 = vadd.f32 %v2852, %v2948
      %v2950 = vpop.f32.mrb[0].mxu0
      %v2951 = vpop.f32.mrb[0].mxu0
      %v2952 = vadd.f32 %v2855, %v2951
      %v2953 = vpop.f32.mrb[0].mxu0
      %2954 = vdwg.mxu0
      %2955 = vmatprep.subr.bf16.mxu0 0
      %2956 = vmatpush1.bf16.msra.mxu0 %v2487
      %2957 = vmatprep.subr.bf16.mxu0 0
      %2958 = vmatpush1.bf16.msra.mxu0 %v2488
      %2959 = vmatprep.subr.bf16.mxu0 0
      %2960 = vmatpush1.bf16.msra.mxu0 %v2489
      %2961 = vmatprep.subr.bf16.mxu0 0
      %2962 = vmatpush1.bf16.msra.mxu0 %v2490
      %2963 = vmatprep.subr.bf16.mxu0 0
      %2964 = vmatpush1.bf16.msra.mxu0 %v2491
      %2965 = vmatprep.subr.bf16.mxu0 0
      %2966 = vmatpush1.bf16.msra.mxu0 %v2492
      %2967 = vmatprep.subr.bf16.mxu0 0
      %2968 = vmatpush1.bf16.msra.mxu0 %v2493
      %2969 = vmatprep.subr.bf16.mxu0 0
      %2970 = vmatpush1.bf16.msra.mxu0 %v2494
      %2971 = vmatprep.subr.bf16.mxu0 0
      %2972 = vmatpush1.bf16.msra.mxu0 0
      %2973 = vmatprep.subr.bf16.mxu0 0
      %2974 = vmatpush1.bf16.msra.mxu0 0
      %2975 = vmatprep.subr.bf16.mxu0 0
      %2976 = vmatpush1.bf16.msra.mxu0 0
      %2977 = vmatprep.subr.bf16.mxu0 0
      %2978 = vmatpush1.bf16.msra.mxu0 0
      %2979 = vmatprep.subr.bf16.mxu0 0
      %2980 = vmatpush1.bf16.msra.mxu0 0
      %2981 = vmatprep.subr.bf16.mxu0 0
      %2982 = vmatpush1.bf16.msra.mxu0 0
      %2983 = vmatprep.subr.bf16.mxu0 0
      %2984 = vmatpush1.bf16.msra.mxu0 0
      %2985 = vmatprep.subr.bf16.mxu0 0
      %2986 = vmatpush1.bf16.msra.mxu0 0
      %2987 = vmatprep.mubr.bf16.mxu0 0
      %2988 = vmatmul.mubr.bf16.gmra.mrb[0].mxu0 %v1975
      %v2989 = vpop.f32.mrb[0].mxu0
      %v2990 = vadd.f32 %v2893, %v2989
      %v2991 = vpop.f32.mrb[0].mxu0
      %v2992 = vpop.f32.mrb[0].mxu0
      %v2993 = vadd.f32 %v2896, %v2992
      %v2994 = vpop.f32.mrb[0].mxu0
      %2995 = vmatprep.mubr.bf16.mxu0 0
      %2996 = vmatmul.mubr.bf16.gmra.mrb[0].mxu0 %v1976
      %v2997 = vpop.f32.mrb[0].mxu0
      %v2998 = vadd.f32 %v2901, %v2997
      %v2999 = vpop.f32.mrb[0].mxu0
      %v3000 = vpop.f32.mrb[0].mxu0
      %v3001 = vadd.f32 %v2904, %v3000
      %v3002 = vpop.f32.mrb[0].mxu0
      %3003 = vmatprep.mubr.bf16.mxu0 0
      %3004 = vmatmul.mubr.bf16.gmra.mrb[0].mxu0 %v1977
      %v3005 = vpop.f32.mrb[0].mxu0
      %v3006 = vadd.f32 %v2909, %v3005
      %v3007 = vpop.f32.mrb[0].mxu0
      %v3008 = vpop.f32.mrb[0].mxu0
      %v3009 = vadd.f32 %v2912, %v3008
      %v3010 = vpop.f32.mrb[0].mxu0
      %3011 = vmatprep.mubr.bf16.mxu0 0
      %3012 = vmatmul.mubr.bf16.gmra.mrb[0].mxu0 %v1978
      %v3013 = vpop.f32.mrb[0].mxu0
      %v3014 = vadd.f32 %v2917, %v3013
      %v3015 = vpop.f32.mrb[0].mxu0
      %v3016 = vpop.f32.mrb[0].mxu0
      %v3017 = vadd.f32 %v2920, %v3016
      %v3018 = vpop.f32.mrb[0].mxu0
      %3019 = vmatprep.mubr.bf16.mxu0 0
      %3020 = vmatmul.mubr.bf16.gmra.mrb[0].mxu0 %v1979
      %v3021 = vpop.f32.mrb[0].mxu0
      %v3022 = vadd.f32 %v2925, %v3021
      %v3023 = vpop.f32.mrb[0].mxu0
      %v3024 = vpop.f32.mrb[0].mxu0
      %v3025 = vadd.f32 %v2928, %v3024
      %v3026 = vpop.f32.mrb[0].mxu0
      %3027 = vmatprep.mubr.bf16.mxu0 0
      %3028 = vmatmul.mubr.bf16.gmra.mrb[0].mxu0 %v1980
      %v3029 = vpop.f32.mrb[0].mxu0
      %v3030 = vadd.f32 %v2933, %v3029
      %v3031 = vpop.f32.mrb[0].mxu0
      %v3032 = vpop.f32.mrb[0].mxu0
      %v3033 = vadd.f32 %v2936, %v3032
      %v3034 = vpop.f32.mrb[0].mxu0
      %3035 = vmatprep.mubr.bf16.mxu0 0
      %3036 = vmatmul.mubr.bf16.gmra.mrb[0].mxu0 %v1981
      %v3037 = vpop.f32.mrb[0].mxu0
      %v3038 = vadd.f32 %v2941, %v3037
      %v3039 = vpop.f32.mrb[0].mxu0
      %v3040 = vpop.f32.mrb[0].mxu0
      %v3041 = vadd.f32 %v2944, %v3040
      %v3042 = vpop.f32.mrb[0].mxu0
      %3043 = vmatprep.mubr.bf16.mxu0 0
      %3044 = vmatmul.mubr.bf16.gmra.mrb[0].mxu0 %v1982
      %v3045 = vpop.f32.mrb[0].mxu0
      %v3046 = vadd.f32 %v2949, %v3045
      %v3047 = vpop.f32.mrb[0].mxu0
      %v3048 = vpop.f32.mrb[0].mxu0
      %v3049 = vadd.f32 %v2952, %v3048
      %v3050 = vpop.f32.mrb[0].mxu0
      %3051 = vdwg.mxu0
      %v3052 = vpack.c.bf16 %v2993, %v2990
      %v3053 = vpack.c.bf16 %v3001, %v2998
      %v3054 = vpack.c.bf16 %v3009, %v3006
      %v3055 = vpack.c.bf16 %v3017, %v3014
      %v3056 = vpack.c.bf16 %v3025, %v3022
      %v3057 = vpack.c.bf16 %v3033, %v3030
      %v3058 = vpack.c.bf16 %v3041, %v3038
      %v3059 = vpack.c.bf16 %v3049, %v3046
      %v3068 = vunpack.c.l.b16 %v3052
      %v3069 = vunpack.c.h.b16 %v3052
      %v3070 = vunpack.c.l.b16 %v3053
      %v3071 = vunpack.c.h.b16 %v3053
      %v3072 = vunpack.c.l.b16 %v3054
      %v3073 = vunpack.c.h.b16 %v3054
      %v3074 = vunpack.c.l.b16 %v3055
      %v3075 = vunpack.c.h.b16 %v3055
      %v3076 = vunpack.c.l.b16 %v3056
      %v3077 = vunpack.c.h.b16 %v3056
      %v3078 = vunpack.c.l.b16 %v3057
      %v3079 = vunpack.c.h.b16 %v3057
      %v3080 = vunpack.c.l.b16 %v3058
      %v3081 = vunpack.c.h.b16 %v3058
      %v3082 = vunpack.c.l.b16 %v3059
      %v3083 = vunpack.c.h.b16 %v3059
      %v3084 = vpack.c.b16 %v3068, %v3068
      %v3085 = vpack.c.b16 %v3069, %v3069
      %v3086 = vpack.c.b16 %v3070, %v3070
      %v3087 = vpack.c.b16 %v3071, %v3071
      %v3088 = vpack.c.b16 %v3072, %v3072
      %v3089 = vpack.c.b16 %v3073, %v3073
      %v3090 = vpack.c.b16 %v3074, %v3074
      %v3091 = vpack.c.b16 %v3075, %v3075
      %v3092 = vpack.c.b16 %v3076, %v3076
      %v3093 = vpack.c.b16 %v3077, %v3077
      %v3094 = vpack.c.b16 %v3078, %v3078
      %v3095 = vpack.c.b16 %v3079, %v3079
      %v3096 = vpack.c.b16 %v3080, %v3080
      %v3097 = vpack.c.b16 %v3081, %v3081
      %v3098 = vpack.c.b16 %v3082, %v3082
      %v3099 = vpack.c.b16 %v3083, %v3083
      %3116 = vst [vmem:[%s207] sm:$0xf] %v3084
      %3117 = vst [vmem:[%s207 + $0x4] sm:$0xf] %v3085
      %3118 = vst [vmem:[%s207 + $0x8] sm:$0xf] %v3086
      %3119 = vst [vmem:[%s207 + $0xc] sm:$0xf] %v3087
      %3120 = vst [vmem:[%s207 + $0x10] sm:$0xf] %v3088
      %3121 = vst [vmem:[%s207 + $0x14] sm:$0xf] %v3089
      %3122 = vst [vmem:[%s207 + $0x18] sm:$0xf] %v3090
      %3123 = vst [vmem:[%s207 + $0x1c] sm:$0xf] %v3091
      %3124 = vst [vmem:[%s207 + $0x20] sm:$0xf] %v3092
      %3125 = vst [vmem:[%s207 + $0x24] sm:$0xf] %v3093
      %3126 = vst [vmem:[%s207 + $0x28] sm:$0xf] %v3094
      %3127 = vst [vmem:[%s207 + $0x2c] sm:$0xf] %v3095
      %3128 = vst [vmem:[%s207 + $0x30] sm:$0xf] %v3096
      %3129 = vst [vmem:[%s207 + $0x34] sm:$0xf] %v3097
      %3130 = vst [vmem:[%s207 + $0x38] sm:$0xf] %v3098
      %3131 = vst [vmem:[%s207 + $0x3c] sm:$0xf] %v3099
      %v3132 = vadd.f32 %v2990, %v2993
      %v3133 = vadd.f32 %v3132, %v2998
      %v3134 = vadd.f32 %v3133, %v3001
      %v3135 = vadd.f32 %v3134, %v3006
      %v3136 = vadd.f32 %v3135, %v3009
      %v3137 = vadd.f32 %v3136, %v3014
      %v3138 = vadd.f32 %v3137, %v3017
      %v3139 = vadd.f32 %v3138, %v3022
      %v3140 = vadd.f32 %v3139, %v3025
      %v3141 = vadd.f32 %v3140, %v3030
      %v3142 = vadd.f32 %v3141, %v3033
      %v3143 = vadd.f32 %v3142, %v3038
      %v3144 = vadd.f32 %v3143, %v3041
      %v3145 = vadd.f32 %v3144, %v3046
      %v3146 = vadd.f32 %v3145, %v3049
      %v3147 = vrot.slane %v3146, 4
      %v3148 = vadd.f32 %v3146, %v3147
      %v3149 = vrot.slane %v3148, 2
      %v3150 = vadd.f32 %v3148, %v3149
      %v3151 = vrot.slane %v3150, 1
      %v3152 = vadd.f32 %v3150, %v3151
      %v3153 = vmul.f32 %v2990, %v2990
      %v3154 = vmul.f32 %v2993, %v2993
      %v3155 = vmul.f32 %v2998, %v2998
      %v3156 = vmul.f32 %v3001, %v3001
      %v3157 = vmul.f32 %v3006, %v3006
      %v3158 = vmul.f32 %v3009, %v3009
      %v3159 = vmul.f32 %v3014, %v3014
      %v3160 = vmul.f32 %v3017, %v3017
      %v3161 = vmul.f32 %v3022, %v3022
      %v3162 = vmul.f32 %v3025, %v3025
      %v3163 = vmul.f32 %v3030, %v3030
      %v3164 = vmul.f32 %v3033, %v3033
      %v3165 = vmul.f32 %v3038, %v3038
      %v3166 = vmul.f32 %v3041, %v3041
      %v3167 = vmul.f32 %v3046, %v3046
      %v3168 = vmul.f32 %v3049, %v3049
      %v3169 = vadd.f32 %v3153, %v3154
      %v3170 = vadd.f32 %v3169, %v3155
      %v3171 = vadd.f32 %v3170, %v3156
      %v3172 = vadd.f32 %v3171, %v3157
      %v3173 = vadd.f32 %v3172, %v3158
      %v3174 = vadd.f32 %v3173, %v3159
      %v3175 = vadd.f32 %v3174, %v3160
      %v3176 = vadd.f32 %v3175, %v3161
      %v3177 = vadd.f32 %v3176, %v3162
      %v3178 = vadd.f32 %v3177, %v3163
      %v3179 = vadd.f32 %v3178, %v3164
      %v3180 = vadd.f32 %v3179, %v3165
      %v3181 = vadd.f32 %v3180, %v3166
      %v3182 = vadd.f32 %v3181, %v3167
      %v3183 = vadd.f32 %v3182, %v3168
      %v3184 = vrot.slane %v3183, 4
      %v3185 = vadd.f32 %v3183, %v3184
      %v3186 = vrot.slane %v3185, 2
      %v3187 = vadd.f32 %v3185, %v3186
      %v3188 = vrot.slane %v3187, 1
      %v3189 = vadd.f32 %v3187, %v3188
      %vm3190 = vcmask 1040384
      %v3191 = vsel %vm3190, %v3152, %v3189
      %3192 = vst [vmem:[%s216] sm:$0x3] %v3191
      %s3193 = smul.u32 8, %s20
      %p3194 = scmp.lt.s32.totalorder %s19, 1
      %s3195 = scalar_select %p3194, %s19, 1
      %p3196 = scmp.lt.s32.totalorder %s3193, 15
      %s3197 = scalar_select %p3196, %s3193, 15
      %s3198 = smul.addr %s3197, 2
      %s3199 = smul.addr %s3195, 32
      %s3200 = sadd.s32 %s3198, %s3199
      %s3201 = smul.addr %s3200, 4
      %s3202 = scalar_lea.vmem %s2, %s3201
      %p3203 = scmp.lt.s32.totalorder %s19, 1
      %s3204 = scalar_select %p3203, %s19, 1
      %p3205 = scmp.lt.s32.totalorder %s20, 1
      %s3206 = scalar_select %p3205, %s20, 1
      %s3207 = smul.addr %s3204, 2
      %s3208 = sadd.s32 %s3206, %s3207
      %s3209 = smul.addr %s3208, 2
      %s3210 = scalar_lea.vmem %s3, %s3209
      // Predicated region
      $region33: #{conv_branch_forward.6} parent=27 // pred_check
        %p3211 = pneg %p94
      $region34: #{conv_branch_forward.6} parent=27 // pred_check_branch
        %3213 = sbr.rel (%p3211) target = $region36
      $region35: #{conv_branch_forward.6} parent=27 // pred_region
        %s3214 = smul.u32 8, %s20
      $region36: #{conv_branch_forward.6} parent=27 // pred_fallthru
        _
      // Predicated region
      $region37: #{conv_branch_forward.6} parent=27 // pred_check
        %p3215 = pneg %p122
      $region38: #{conv_branch_forward.6} parent=27 // pred_check_branch
        %3217 = sbr.rel (%p3215) target = $region40
      $region39: #{conv_branch_forward.6} parent=27 // pred_region
        _
      $region40: #{conv_branch_forward.6} parent=27 // pred_fallthru
        _
    $region28: #{conv_branch_forward.6} parent=5 // pred_fallthru
      _
    %p3218 = scmp.le.s32.totalorder 2, %s10
    // Predicated region
    $region41: #{conv_branch_forward.6} parent=5 // pred_check
      %p3219 = pneg %p3218
    $region42: #{conv_branch_forward.6} parent=5 // pred_check_branch
      %3221 = sbr.rel (%p3219) target = $region44
    $region43: #{conv_branch_forward.6} parent=5 // pred_region
      %s3222 = ssub.s32 %s10, 2
      // Predicated region
      $region45: #{conv_branch_forward.6} parent=43 // pred_check
        %p3223 = pneg %p100
      $region46: #{conv_branch_forward.6} parent=43 // pred_check_branch
        %3225 = sbr.rel (%p3223) target = $region48
      $region47: #{conv_branch_forward.6} parent=43 // pred_region
        %s3226 = smul.u32 8, %s22
        %p3227 = scmp.lt.s32.totalorder %s21, 1
        %s3228 = scalar_select %p3227, %s21, 1
        %p3229 = scmp.lt.s32.totalorder %s3226, 15
        %s3230 = scalar_select %p3229, %s3226, 15
        %s3231 = smul.addr %s3230, 2
        %s3232 = smul.addr %s3228, 32
        %s3233 = sadd.s32 %s3231, %s3232
        %s3234 = smul.addr %s3233, 4
        %s3235 = scalar_lea.vmem %s2, %s3234
      $region48: #{conv_branch_forward.6} parent=43 // pred_fallthru
        _
      // Predicated region
      $region49: #{conv_branch_forward.6} parent=43 // pred_check
        %p3236 = pneg %p128
      $region50: #{conv_branch_forward.6} parent=43 // pred_check_branch
        %3238 = sbr.rel (%p3236) target = $region52
      $region51: #{conv_branch_forward.6} parent=43 // pred_region
        %p3239 = scmp.lt.s32.totalorder %s21, 1
        %s3240 = scalar_select %p3239, %s21, 1
        %p3241 = scmp.lt.s32.totalorder %s22, 1
        %s3242 = scalar_select %p3241, %s22, 1
        %s3243 = smul.addr %s3240, 2
        %s3244 = sadd.s32 %s3242, %s3243
        %s3245 = smul.addr %s3244, 2
        %s3246 = scalar_lea.vmem %s3, %s3245
      $region52: #{conv_branch_forward.6} parent=43 // pred_fallthru
        _
    $region44: #{conv_branch_forward.6} parent=5 // pred_fallthru
      _
  $region6: #{conv_branch_forward.6} parent=0 // loop_footer
    %s14 = sadd.s32 1, %s10
  $region7: #{conv_branch_forward.6} parent=0 // loop_footer_branch
    %9 = sbr.rel target = $region3
  $region8: #{conv_branch_forward.6} parent=0 // loop_exit
    _

</llo_original>
